<compile_context>
chip_gen: v6e
topology: v6e:2x2x1
jax: 0.10.0
libtpu: 0.0.40
codegen_flags: <defaults>
</compile_context>

<pallas_src>
import functools
import math

import jax
import jax.numpy as jnp
from jax.experimental import pallas as pl
from jax.experimental.pallas import tpu as pltpu


def _round_up(x, m):
  return (x + m - 1) // m * m


def _charnet_kernel(
    # data (one chain tile per grid step; sequences are step-major)
    board_ref, order_ref, msg_ref, other_ref, me_ref, hx0_ref, cx0_ref,
    # weights (bf16) / biases (f32)
    wb1_ref, bb1_ref, wb2_ref, bb2_ref, wb3_ref, bb3_ref,
    wo1_ref, bo1_ref, wo2_ref, bo2_ref,
    wm1_ref, bm1_ref, wm2_ref, bm2_ref,
    wihb_ref, wiho_ref, wihm_ref, bih_ref,   # bih already includes b_hh
    whh_ref,
    w1h_ref, w1o_ref, w1m_ref, b1_ref,
    w2_ref, b2_ref,
    # output
    out_ref,
    # scratch
    gates_ref,                               # (num_step, chain_tile, 4H) f32 VMEM
    *, num_step, chain_tile, hidden):
  f32 = jnp.float32
  bf16 = jnp.bfloat16
  H = hidden
  R = num_step * chain_tile                  # rows for the per-step MLP branches
  relu = lambda v: jnp.maximum(v, 0.0)

  def mlp_layer(x_bf, w_ref, b_ref):
    # bf16 operands on the MXU, f32 accumulation, bias+relu in f32, then cast
    # straight back to bf16 (the only consumer is another bf16 MXU dot).
    y = jnp.dot(x_bf, w_ref[...], preferred_element_type=f32) + b_ref[...]
    return relu(y).astype(bf16)

  # ---- per-row MLP branches over all (num_step * chain_tile) rows at once.
  # (num_step, chain_tile, feat) -> (R, feat) is layout-free (chain_tile % 8 == 0).
  board = board_ref[...].reshape(R, -1)
  order = order_ref[...].reshape(R, -1)
  msg = msg_ref[...].reshape(R, -1)

  bfeat = mlp_layer(board, wb1_ref, bb1_ref)
  bfeat = mlp_layer(bfeat, wb2_ref, bb2_ref)
  bfeat = mlp_layer(bfeat, wb3_ref, bb3_ref)

  ofeat = mlp_layer(order, wo1_ref, bo1_ref)
  ofeat = mlp_layer(ofeat, wo2_ref, bo2_ref)

  mfeat = mlp_layer(msg, wm1_ref, bm1_ref)
  mfeat = mlp_layer(mfeat, wm2_ref, bm2_ref)

  # LSTM input-side gate pre-activations, hoisted out of the recurrence.
  # Row-partitioned W_ih replaces concat([board, order, msg], axis=-1); b_hh is
  # already folded into bih in the wrapper.
  gates_x = (jnp.dot(bfeat, wihb_ref[...], preferred_element_type=f32)
             + jnp.dot(ofeat, wiho_ref[...], preferred_element_type=f32)
             + jnp.dot(mfeat, wihm_ref[...], preferred_element_type=f32)
             + bih_ref[...])                                   # (R, 4H) f32
  # Park it in VMEM scratch: per-step reads become cheap ref slices and the
  # big (R, 4H) value does not stay live across the recurrence.
  gates_ref[...] = gates_x.reshape(num_step, chain_tile, 4 * H)

  whh = whh_ref[...]                                           # (H, 4H) bf16
  hx = hx0_ref[...]                                            # (chain_tile, H) f32
  cx = cx0_ref[...]

  def step(s, carry):
    hx, cx, acc = carry
    # ONE fused 128-lane gate matmul per step on the serial path.
    gates = gates_ref[s] + jnp.dot(hx.astype(jnp.bfloat16), whh,
                                   preferred_element_type=f32)  # (chain_tile, 4H)
    sig = jax.nn.sigmoid(gates)                                 # full-vreg sigmoid
    i_g = sig[:, 0 * H:1 * H]
    f_g = sig[:, 1 * H:2 * H]
    o_g = sig[:, 3 * H:4 * H]
    g_g = jnp.tanh(gates[:, 2 * H:3 * H])
    cx = f_g * cx + i_g * g_g
    hx = o_g * jnp.tanh(cx)
    return hx, cx, acc + hx                                     # running step sum

  hx, cx, acc = jax.lax.fori_loop(0, num_step, step,
                                  (hx, cx, jnp.zeros_like(hx)),
                                  unroll=num_step <= 8)

  # Head: row-partitioned fc1 replaces concat([sum_h, other_ind, me_ind]).
  x = relu(jnp.dot(acc.astype(bf16), w1h_ref[...], preferred_element_type=f32)
           + jnp.dot(other_ref[...], w1o_ref[...], preferred_element_type=f32)
           + jnp.dot(me_ref[...], w1m_ref[...], preferred_element_type=f32)
           + b1_ref[...])
  x = jnp.dot(x.astype(bf16), w2_ref[...], preferred_element_type=f32) + b2_ref[...]
  out_ref[...] = x                                              # (chain_tile, char_dim)


def init_params(key, configs, hidden):
  ks = jax.random.split(key, 13)

  def linear(k, fin, fout):
    kw, kb = jax.random.split(k)
    bound = 1.0 / math.sqrt(fin)
    w = jax.random.uniform(kw, (fin, fout), jnp.float32, -bound, bound)
    b = jax.random.uniform(kb, (1, fout), jnp.float32, -bound, bound)
    return w, b

  p = {}
  p['wb1'], p['bb1'] = linear(ks[0], configs['num_loc'] * configs['board_feat'], 1024)
  p['wb2'], p['bb2'] = linear(ks[1], 1024, 256)
  p['wb3'], p['bb3'] = linear(ks[2], 256, configs['board_output_dim'])
  p['wo1'], p['bo1'] = linear(ks[3], configs['order_feat'], 128)
  p['wo2'], p['bo2'] = linear(ks[4], 128, configs['order_output_dim'])
  p['wm1'], p['bm1'] = linear(ks[5], 2 * configs['msg_feat'], 64)
  p['wm2'], p['bm2'] = linear(ks[6], 64, configs['message_output_dim'])
  bound = 1.0 / math.sqrt(hidden)
  p['wih'] = jax.random.uniform(ks[7], (hidden, 4 * hidden), jnp.float32, -bound, bound)
  p['whh'] = jax.random.uniform(ks[8], (hidden, 4 * hidden), jnp.float32, -bound, bound)
  p['bih'] = jax.random.uniform(ks[9], (1, 4 * hidden), jnp.float32, -bound, bound)
  p['bhh'] = jax.random.uniform(ks[10], (1, 4 * hidden), jnp.float32, -bound, bound)
  p['w1'], p['b1'] = linear(ks[11], hidden + 2 * configs['num_agent'], configs['char_output_dim'])
  p['w2'], p['b2'] = linear(ks[12], configs['char_output_dim'], configs['char_output_dim'])
  return p


def prepare_weights(params, configs, hidden):
  """One-time weight preprocessing (hoisted out of the per-call path):
  bf16 casts for all MXU operands, W_ih / fc1 row splits that replace the
  feature concats, and b_hh folded into b_ih."""
  bd = configs['board_output_dim']
  od = configs['order_output_dim']
  na = configs['num_agent']
  bf16 = jnp.bfloat16
  w = lambda k: params[k].astype(bf16)      # matmul operands in bf16
  fb = lambda k: params[k]                  # biases stay f32
  wih = w('wih')                            # (H, 4H), rows in (board,order,msg) order
  w1 = w('w1')                              # (H + 2*num_agent, char_dim)
  bih_total = params['bih'] + params['bhh']  # fold b_hh into b_ih (both constant)
  return (
      w('wb1'), fb('bb1'), w('wb2'), fb('bb2'), w('wb3'), fb('bb3'),
      w('wo1'), fb('bo1'), w('wo2'), fb('bo2'),
      w('wm1'), fb('bm1'), w('wm2'), fb('bm2'),
      wih[:bd], wih[bd:bd + od], wih[bd + od:], bih_total,
      w('whh'),
      w1[:hidden], w1[hidden:hidden + na], w1[hidden + na:], fb('b1'),
      w('w2'), fb('b2'),
  )


def fc_charnet_forward(board, order, message, other_ind, me_ind, hx0, cx0,
                       kernel_weights, configs, *, chain_tile=None):
  b, num_past, num_step, num_loc, board_feat = board.shape
  hidden = hx0.shape[-1]
  char_dim = configs['char_output_dim']
  num_agent = configs['num_agent']
  bf16 = jnp.bfloat16

  # One LSTM chain per (past, batch) pair; pad chains to a sublane-friendly tile.
  NPB = num_past * b
  if chain_tile is None:
    chain_tile = min(_round_up(NPB, 16), 128)
  NPBP = _round_up(NPB, chain_tile)
  pad = NPBP - NPB
  grid = (NPBP // chain_tile,)

  # Sequence inputs: (b, num_past, num_step, feat) -> (num_step, chain, feat)
  # with chain = past*b + batch (step-major, chain-contiguous per step).
  def seq_rows(x):
    x = jnp.transpose(x, (2, 1, 0, 3)).reshape(num_step, NPB, x.shape[-1])
    if pad:
      x = jnp.pad(x, ((0, 0), (0, pad), (0, 0)))
    return x.astype(bf16)

  board_f = seq_rows(board.reshape(b, num_past, num_step, num_loc * board_feat))
  order_f = seq_rows(order)
  msg_f = seq_rows(message)

  # Per-chain inputs: (num_past, b, feat) -> (chain, feat).
  def chain_rows(x, dtype):
    x = x.reshape(NPB, x.shape[-1])
    if pad:
      x = jnp.pad(x, ((0, pad), (0, 0)))
    return x.astype(dtype)

  other_f = chain_rows(jnp.transpose(other_ind, (1, 0, 2)), bf16)
  me_f = chain_rows(jnp.transpose(me_ind, (1, 0, 2)), bf16)
  hx0_f = chain_rows(hx0, jnp.float32)      # LSTM state stays f32
  cx0_f = chain_rows(cx0, jnp.float32)

  data = (board_f, order_f, msg_f, other_f, me_f, hx0_f, cx0_f)

  seq_spec = lambda feat: pl.BlockSpec((num_step, chain_tile, feat),
                                       lambda c: (0, c, 0))
  chain_spec = lambda feat: pl.BlockSpec((chain_tile, feat), lambda c: (c, 0))
  wspec = pl.BlockSpec(memory_space=pltpu.MemorySpace.VMEM)  # whole weight resident

  in_specs = [
      seq_spec(board_f.shape[-1]), seq_spec(order_f.shape[-1]),
      seq_spec(msg_f.shape[-1]),
      chain_spec(num_agent), chain_spec(num_agent),
      chain_spec(hidden), chain_spec(hidden),
  ] + [wspec] * len(kernel_weights)

  # Advisory cost estimate so XLA can overlap the kernel with surrounding ops.
  bin_ = num_loc * board_feat
  oin = order.shape[-1]
  min_ = message.shape[-1]
  bd = configs['board_output_dim']
  od = configs['order_output_dim']
  md = configs['message_output_dim']
  H = hidden
  R_total = num_step * NPBP
  flops = (2 * R_total * (bin_ * 1024 + 1024 * 256 + 256 * bd
                          + oin * 128 + 128 * od
                          + min_ * 64 + 64 * md
                          + (bd + od + md) * 4 * H)
           + 2 * num_step * NPBP * H * 4 * H
           + 2 * NPBP * ((H + 2 * num_agent) * char_dim + char_dim * char_dim))
  transcendentals = num_step * NPBP * 6 * H
  bytes_accessed = int(sum(int(x.size) * x.dtype.itemsize
                           for x in data + tuple(kernel_weights))
                       + NPBP * char_dim * 4)

  kernel = functools.partial(_charnet_kernel, num_step=num_step,
                             chain_tile=chain_tile, hidden=hidden)

  out_flat = pl.pallas_call(
      kernel,
      out_shape=jax.ShapeDtypeStruct((NPBP, char_dim), jnp.float32),
      grid=grid,
      in_specs=in_specs,
      out_specs=pl.BlockSpec((chain_tile, char_dim), lambda c: (c, 0)),
      scratch_shapes=[pltpu.VMEM((num_step, chain_tile, 4 * hidden), jnp.float32)],
      compiler_params=pltpu.CompilerParams(
          dimension_semantics=("parallel",),
          # Re-derive per chip / per shape; 32 MiB is safe on v5e/v6e/v7x and
          # leaves ample headroom for this kernel's ~few-MiB footprint.
          vmem_limit_bytes=32 * 1024 * 1024),
      cost_estimate=pl.CostEstimate(flops=int(flops),
                                    transcendentals=int(transcendentals),
                                    bytes_accessed=bytes_accessed),
  )(*data, *kernel_weights)

  e_char_total = out_flat[:NPB].reshape(num_past, b, char_dim)
  final_e_char = jnp.sum(e_char_total, axis=0)
  return final_e_char, e_char_total


def ref_forward(board, order, message, other_ind, me_ind, hx0, cx0, params):
  """Pure-JAX reference mirroring the PyTorch module structure.

  Matmuls use bf16 operands with f32 accumulation — the same precision policy
  as the kernel's MXU dots — so the comparison is apples-to-apples.
  """
  b, num_past, num_step = board.shape[0], board.shape[1], board.shape[2]
  H = hx0.shape[-1]
  bf16 = jnp.bfloat16

  def dotbf(x, w):
    return jnp.dot(x.astype(bf16), w.astype(bf16), preferred_element_type=jnp.float32)

  outs = []
  for p in range(num_past):
    bp = board[:, p].reshape(b * num_step, -1)
    bfeat = jax.nn.relu(dotbf(bp, params['wb1']) + params['bb1'])
    bfeat = jax.nn.relu(dotbf(bfeat, params['wb2']) + params['bb2'])
    bfeat = jax.nn.relu(dotbf(bfeat, params['wb3']) + params['bb3'])
    op = order[:, p].reshape(b * num_step, -1)
    ofeat = jax.nn.relu(dotbf(op, params['wo1']) + params['bo1'])
    ofeat = jax.nn.relu(dotbf(ofeat, params['wo2']) + params['bo2'])
    mp = message[:, p].reshape(b * num_step, -1)
    mfeat = jax.nn.relu(dotbf(mp, params['wm1']) + params['bm1'])
    mfeat = jax.nn.relu(dotbf(mfeat, params['wm2']) + params['bm2'])
    feats = jnp.concatenate([bfeat, ofeat, mfeat], axis=-1).reshape(b, num_step, -1)
    hx, cx = hx0[p], cx0[p]
    acc = jnp.zeros_like(hx)
    for s in range(num_step):
      xs = feats[:, s, :]
      gates = (dotbf(xs, params['wih']) + params['bih']
               + dotbf(hx, params['whh']) + params['bhh'])
      i = jax.nn.sigmoid(gates[:, :H])
      f = jax.nn.sigmoid(gates[:, H:2 * H])
      g = jnp.tanh(gates[:, 2 * H:3 * H])
      o = jax.nn.sigmoid(gates[:, 3 * H:])
      cx = f * cx + i * g
      hx = o * jnp.tanh(cx)
      acc = acc + hx
    x = jnp.concatenate([acc, other_ind[:, p], me_ind[:, p]], axis=-1)
    x = jax.nn.relu(dotbf(x, params['w1']) + params['b1'])
    x = dotbf(x, params['w2']) + params['b2']
    outs.append(x)
  total = jnp.stack(outs)
  return jnp.sum(total, axis=0), total


if __name__ == "__main__":
  configs = dict(num_loc=16, board_feat=4, order_feat=8, msg_feat=8,
                 num_agent=4, board_output_dim=16, order_output_dim=8,
                 message_output_dim=8, char_output_dim=16)
  b, num_past, num_step = 2, 2, 8
  hidden = (configs['message_output_dim'] + configs['board_output_dim']
            + configs['order_output_dim'])

  key = jax.random.PRNGKey(0)
  keys = jax.random.split(key, 8)
  board = jax.random.normal(
      keys[0], (b, num_past, num_step, configs['num_loc'], configs['board_feat']),
      jnp.float32)
  order = jax.random.normal(
      keys[1], (b, num_past, num_step, configs['order_feat']), jnp.float32)
  message = jax.random.normal(
      keys[2], (b, num_past, num_step, 2 * configs['msg_feat']), jnp.float32)
  other_ind = jax.random.normal(keys[3], (b, num_past, configs['num_agent']), jnp.float32)
  me_ind = jax.random.normal(keys[4], (b, num_past, configs['num_agent']), jnp.float32)
  # Deterministic stand-in for torch.randn init_hidden (one draw per past slice).
  hx0 = jax.random.normal(keys[5], (num_past, b, hidden), jnp.float32)
  cx0 = jax.random.normal(keys[6], (num_past, b, hidden), jnp.float32)

  params = init_params(keys[7], configs, hidden)
  kernel_weights = prepare_weights(params, configs, hidden)   # once, off the hot path

  final_e_char, e_char_total = fc_charnet_forward(
      board, order, message, other_ind, me_ind, hx0, cx0,
      kernel_weights, configs)
  jax.block_until_ready((final_e_char, e_char_total))

  ref_final, ref_total = ref_forward(
      board, order, message, other_ind, me_ind, hx0, cx0, params)
  assert final_e_char.shape == (b, configs['char_output_dim'])
  assert e_char_total.shape == (num_past, b, configs['char_output_dim'])
  assert jnp.allclose(e_char_total, ref_total, rtol=1e-3, atol=1e-3)
  assert jnp.allclose(final_e_char, ref_final, rtol=1e-3, atol=1e-3)
  print("KERNEL_OK")
</pallas_src>

<mosaic_0001>
module attributes {stable_mosaic.version = 11 : i64} {
  func.func @_charnet_kernel(%arg0: i32, %arg1: memref<8x16x64xbf16, #tpu.memory_space<vmem>>, %arg2: memref<8x16x8xbf16, #tpu.memory_space<vmem>>, %arg3: memref<8x16x16xbf16, #tpu.memory_space<vmem>>, %arg4: memref<16x4xbf16, #tpu.memory_space<vmem>>, %arg5: memref<16x4xbf16, #tpu.memory_space<vmem>>, %arg6: memref<16x32xf32, #tpu.memory_space<vmem>>, %arg7: memref<16x32xf32, #tpu.memory_space<vmem>>, %arg8: memref<64x1024xbf16, #tpu.memory_space<vmem>>, %arg9: memref<1x1024xf32, #tpu.memory_space<vmem>>, %arg10: memref<1024x256xbf16, #tpu.memory_space<vmem>>, %arg11: memref<1x256xf32, #tpu.memory_space<vmem>>, %arg12: memref<256x16xbf16, #tpu.memory_space<vmem>>, %arg13: memref<1x16xf32, #tpu.memory_space<vmem>>, %arg14: memref<8x128xbf16, #tpu.memory_space<vmem>>, %arg15: memref<1x128xf32, #tpu.memory_space<vmem>>, %arg16: memref<128x8xbf16, #tpu.memory_space<vmem>>, %arg17: memref<1x8xf32, #tpu.memory_space<vmem>>, %arg18: memref<16x64xbf16, #tpu.memory_space<vmem>>, %arg19: memref<1x64xf32, #tpu.memory_space<vmem>>, %arg20: memref<64x8xbf16, #tpu.memory_space<vmem>>, %arg21: memref<1x8xf32, #tpu.memory_space<vmem>>, %arg22: memref<16x128xbf16, #tpu.memory_space<vmem>>, %arg23: memref<8x128xbf16, #tpu.memory_space<vmem>>, %arg24: memref<8x128xbf16, #tpu.memory_space<vmem>>, %arg25: memref<1x128xf32, #tpu.memory_space<vmem>>, %arg26: memref<32x128xbf16, #tpu.memory_space<vmem>>, %arg27: memref<32x16xbf16, #tpu.memory_space<vmem>>, %arg28: memref<4x16xbf16, #tpu.memory_space<vmem>>, %arg29: memref<4x16xbf16, #tpu.memory_space<vmem>>, %arg30: memref<1x16xf32, #tpu.memory_space<vmem>>, %arg31: memref<16x16xbf16, #tpu.memory_space<vmem>>, %arg32: memref<1x16xf32, #tpu.memory_space<vmem>>, %arg33: memref<16x16xf32, #tpu.memory_space<vmem>>, %arg34: memref<8x16x128xf32, #tpu.memory_space<vmem>>) attributes {dimension_semantics = [#tpu.dimension_semantics<parallel>], iteration_bounds = array<i64: 1>, scalar_prefetch = 0 : i64, scratch_operands = 1 : i64, tpu.core_type = #tpu.core_type<tc>, window_params = [{transform_indices = @transform_0, window_bounds = array<i64: 8, 16, 64>}, {transform_indices = @transform_1, window_bounds = array<i64: 8, 16, 8>}, {transform_indices = @transform_2, window_bounds = array<i64: 8, 16, 16>}, {transform_indices = @transform_3, window_bounds = array<i64: 16, 4>}, {transform_indices = @transform_4, window_bounds = array<i64: 16, 4>}, {transform_indices = @transform_5, window_bounds = array<i64: 16, 32>}, {transform_indices = @transform_6, window_bounds = array<i64: 16, 32>}, {pipeline_mode = #tpu.pipeline_mode<synchronous>, transform_indices = @transform_7, window_bounds = array<i64: 64, 1024>}, {pipeline_mode = #tpu.pipeline_mode<synchronous>, transform_indices = @transform_8, window_bounds = array<i64: 1, 1024>}, {pipeline_mode = #tpu.pipeline_mode<synchronous>, transform_indices = @transform_9, window_bounds = array<i64: 1024, 256>}, {pipeline_mode = #tpu.pipeline_mode<synchronous>, transform_indices = @transform_10, window_bounds = array<i64: 1, 256>}, {pipeline_mode = #tpu.pipeline_mode<synchronous>, transform_indices = @transform_11, window_bounds = array<i64: 256, 16>}, {pipeline_mode = #tpu.pipeline_mode<synchronous>, transform_indices = @transform_12, window_bounds = array<i64: 1, 16>}, {pipeline_mode = #tpu.pipeline_mode<synchronous>, transform_indices = @transform_13, window_bounds = array<i64: 8, 128>}, {pipeline_mode = #tpu.pipeline_mode<synchronous>, transform_indices = @transform_14, window_bounds = array<i64: 1, 128>}, {pipeline_mode = #tpu.pipeline_mode<synchronous>, transform_indices = @transform_15, window_bounds = array<i64: 128, 8>}, {pipeline_mode = #tpu.pipeline_mode<synchronous>, transform_indices = @transform_16, window_bounds = array<i64: 1, 8>}, {pipeline_mode = #tpu.pipeline_mode<synchronous>, transform_indices = @transform_17, window_bounds = array<i64: 16, 64>}, {pipeline_mode = #tpu.pipeline_mode<synchronous>, transform_indices = @transform_18, window_bounds = array<i64: 1, 64>}, {pipeline_mode = #tpu.pipeline_mode<synchronous>, transform_indices = @transform_19, window_bounds = array<i64: 64, 8>}, {pipeline_mode = #tpu.pipeline_mode<synchronous>, transform_indices = @transform_20, window_bounds = array<i64: 1, 8>}, {pipeline_mode = #tpu.pipeline_mode<synchronous>, transform_indices = @transform_21, window_bounds = array<i64: 16, 128>}, {pipeline_mode = #tpu.pipeline_mode<synchronous>, transform_indices = @transform_22, window_bounds = array<i64: 8, 128>}, {pipeline_mode = #tpu.pipeline_mode<synchronous>, transform_indices = @transform_23, window_bounds = array<i64: 8, 128>}, {pipeline_mode = #tpu.pipeline_mode<synchronous>, transform_indices = @transform_24, window_bounds = array<i64: 1, 128>}, {pipeline_mode = #tpu.pipeline_mode<synchronous>, transform_indices = @transform_25, window_bounds = array<i64: 32, 128>}, {pipeline_mode = #tpu.pipeline_mode<synchronous>, transform_indices = @transform_26, window_bounds = array<i64: 32, 16>}, {pipeline_mode = #tpu.pipeline_mode<synchronous>, transform_indices = @transform_27, window_bounds = array<i64: 4, 16>}, {pipeline_mode = #tpu.pipeline_mode<synchronous>, transform_indices = @transform_28, window_bounds = array<i64: 4, 16>}, {pipeline_mode = #tpu.pipeline_mode<synchronous>, transform_indices = @transform_29, window_bounds = array<i64: 1, 16>}, {pipeline_mode = #tpu.pipeline_mode<synchronous>, transform_indices = @transform_30, window_bounds = array<i64: 16, 16>}, {pipeline_mode = #tpu.pipeline_mode<synchronous>, transform_indices = @transform_31, window_bounds = array<i64: 1, 16>}, {transform_indices = @transform_32, window_bounds = array<i64: 16, 16>}]} {
    %c0 = arith.constant 0 : index
    %c0_0 = arith.constant 0 : index
    %c0_1 = arith.constant 0 : index
    %0 = vector.load %arg1[%c0, %c0_0, %c0_1] : memref<8x16x64xbf16, #tpu.memory_space<vmem>>, vector<8x16x64xbf16>
    %1 = vector.shape_cast %0 : vector<8x16x64xbf16> to vector<128x64xbf16>
    %c0_2 = arith.constant 0 : index
    %c0_3 = arith.constant 0 : index
    %c0_4 = arith.constant 0 : index
    %2 = vector.load %arg2[%c0_2, %c0_3, %c0_4] : memref<8x16x8xbf16, #tpu.memory_space<vmem>>, vector<8x16x8xbf16>
    %3 = vector.shape_cast %2 : vector<8x16x8xbf16> to vector<128x8xbf16>
    %c0_5 = arith.constant 0 : index
    %c0_6 = arith.constant 0 : index
    %c0_7 = arith.constant 0 : index
    %4 = vector.load %arg3[%c0_5, %c0_6, %c0_7] : memref<8x16x16xbf16, #tpu.memory_space<vmem>>, vector<8x16x16xbf16>
    %5 = vector.shape_cast %4 : vector<8x16x16xbf16> to vector<128x16xbf16>
    %c0_8 = arith.constant 0 : index
    %c0_9 = arith.constant 0 : index
    %6 = vector.load %arg8[%c0_8, %c0_9] : memref<64x1024xbf16, #tpu.memory_space<vmem>>, vector<64x1024xbf16>
    %cst = arith.constant dense<0.000000e+00> : vector<128x1024xf32>
    %7 = tpu.matmul %1, %6, %cst {dimension_numbers = #tpu.dot_dimension_numbers<[1], [0], [0], [1], [0, 0, 1, 1], [], []>} : vector<128x64xbf16>, vector<64x1024xbf16>, vector<128x1024xf32> -> vector<128x1024xf32>
    %c0_10 = arith.constant 0 : index
    %c0_11 = arith.constant 0 : index
    %8 = vector.load %arg9[%c0_10, %c0_11] : memref<1x1024xf32, #tpu.memory_space<vmem>>, vector<1x1024xf32>
    %9 = vector.broadcast %8 : vector<1x1024xf32> to vector<128x1024xf32>
    %10 = arith.addf %7, %9 : vector<128x1024xf32>
    %cst_12 = arith.constant 0.000000e+00 : f32
    %11 = vector.broadcast %cst_12 : f32 to vector<128x1024xf32>
    %12 = arith.maximumf %10, %11 : vector<128x1024xf32>
    %13 = arith.truncf %12 : vector<128x1024xf32> to vector<128x1024xbf16>
    %c0_13 = arith.constant 0 : index
    %c0_14 = arith.constant 0 : index
    %14 = vector.load %arg10[%c0_13, %c0_14] : memref<1024x256xbf16, #tpu.memory_space<vmem>>, vector<1024x256xbf16>
    %cst_15 = arith.constant dense<0.000000e+00> : vector<128x256xf32>
    %15 = tpu.matmul %13, %14, %cst_15 {dimension_numbers = #tpu.dot_dimension_numbers<[1], [0], [0], [1], [0, 0, 1, 1], [], []>} : vector<128x1024xbf16>, vector<1024x256xbf16>, vector<128x256xf32> -> vector<128x256xf32>
    %c0_16 = arith.constant 0 : index
    %c0_17 = arith.constant 0 : index
    %16 = vector.load %arg11[%c0_16, %c0_17] : memref<1x256xf32, #tpu.memory_space<vmem>>, vector<1x256xf32>
    %17 = vector.broadcast %16 : vector<1x256xf32> to vector<128x256xf32>
    %18 = arith.addf %15, %17 : vector<128x256xf32>
    %cst_18 = arith.constant 0.000000e+00 : f32
    %19 = vector.broadcast %cst_18 : f32 to vector<128x256xf32>
    %20 = arith.maximumf %18, %19 : vector<128x256xf32>
    %21 = arith.truncf %20 : vector<128x256xf32> to vector<128x256xbf16>
    %c0_19 = arith.constant 0 : index
    %c0_20 = arith.constant 0 : index
    %22 = vector.load %arg12[%c0_19, %c0_20] : memref<256x16xbf16, #tpu.memory_space<vmem>>, vector<256x16xbf16>
    %cst_21 = arith.constant dense<0.000000e+00> : vector<128x16xf32>
    %23 = tpu.matmul %21, %22, %cst_21 {dimension_numbers = #tpu.dot_dimension_numbers<[1], [0], [0], [1], [0, 0, 1, 1], [], []>} : vector<128x256xbf16>, vector<256x16xbf16>, vector<128x16xf32> -> vector<128x16xf32>
    %c0_22 = arith.constant 0 : index
    %c0_23 = arith.constant 0 : index
    %24 = vector.load %arg13[%c0_22, %c0_23] : memref<1x16xf32, #tpu.memory_space<vmem>>, vector<1x16xf32>
    %25 = vector.broadcast %24 : vector<1x16xf32> to vector<128x16xf32>
    %26 = arith.addf %23, %25 : vector<128x16xf32>
    %cst_24 = arith.constant 0.000000e+00 : f32
    %27 = vector.broadcast %cst_24 : f32 to vector<128x16xf32>
    %28 = arith.maximumf %26, %27 : vector<128x16xf32>
    %29 = arith.truncf %28 : vector<128x16xf32> to vector<128x16xbf16>
    %c0_25 = arith.constant 0 : index
    %c0_26 = arith.constant 0 : index
    %30 = vector.load %arg14[%c0_25, %c0_26] : memref<8x128xbf16, #tpu.memory_space<vmem>>, vector<8x128xbf16>
    %cst_27 = arith.constant dense<0.000000e+00> : vector<128x128xf32>
    %31 = tpu.matmul %3, %30, %cst_27 {dimension_numbers = #tpu.dot_dimension_numbers<[1], [0], [0], [1], [0, 0, 1, 1], [], []>} : vector<128x8xbf16>, vector<8x128xbf16>, vector<128x128xf32> -> vector<128x128xf32>
    %c0_28 = arith.constant 0 : index
    %c0_29 = arith.constant 0 : index
    %32 = vector.load %arg15[%c0_28, %c0_29] : memref<1x128xf32, #tpu.memory_space<vmem>>, vector<1x128xf32>
    %33 = vector.broadcast %32 : vector<1x128xf32> to vector<128x128xf32>
    %34 = arith.addf %31, %33 : vector<128x128xf32>
    %cst_30 = arith.constant 0.000000e+00 : f32
    %35 = vector.broadcast %cst_30 : f32 to vector<128x128xf32>
    %36 = arith.maximumf %34, %35 : vector<128x128xf32>
    %37 = arith.truncf %36 : vector<128x128xf32> to vector<128x128xbf16>
    %c0_31 = arith.constant 0 : index
    %c0_32 = arith.constant 0 : index
    %38 = vector.load %arg16[%c0_31, %c0_32] : memref<128x8xbf16, #tpu.memory_space<vmem>>, vector<128x8xbf16>
    %cst_33 = arith.constant dense<0.000000e+00> : vector<128x8xf32>
    %39 = tpu.matmul %37, %38, %cst_33 {dimension_numbers = #tpu.dot_dimension_numbers<[1], [0], [0], [1], [0, 0, 1, 1], [], []>} : vector<128x128xbf16>, vector<128x8xbf16>, vector<128x8xf32> -> vector<128x8xf32>
    %c0_34 = arith.constant 0 : index
    %c0_35 = arith.constant 0 : index
    %40 = vector.load %arg17[%c0_34, %c0_35] : memref<1x8xf32, #tpu.memory_space<vmem>>, vector<1x8xf32>
    %41 = vector.broadcast %40 : vector<1x8xf32> to vector<128x8xf32>
    %42 = arith.addf %39, %41 : vector<128x8xf32>
    %cst_36 = arith.constant 0.000000e+00 : f32
    %43 = vector.broadcast %cst_36 : f32 to vector<128x8xf32>
    %44 = arith.maximumf %42, %43 : vector<128x8xf32>
    %45 = arith.truncf %44 : vector<128x8xf32> to vector<128x8xbf16>
    %c0_37 = arith.constant 0 : index
    %c0_38 = arith.constant 0 : index
    %46 = vector.load %arg18[%c0_37, %c0_38] : memref<16x64xbf16, #tpu.memory_space<vmem>>, vector<16x64xbf16>
    %cst_39 = arith.constant dense<0.000000e+00> : vector<128x64xf32>
    %47 = tpu.matmul %5, %46, %cst_39 {dimension_numbers = #tpu.dot_dimension_numbers<[1], [0], [0], [1], [0, 0, 1, 1], [], []>} : vector<128x16xbf16>, vector<16x64xbf16>, vector<128x64xf32> -> vector<128x64xf32>
    %c0_40 = arith.constant 0 : index
    %c0_41 = arith.constant 0 : index
    %48 = vector.load %arg19[%c0_40, %c0_41] : memref<1x64xf32, #tpu.memory_space<vmem>>, vector<1x64xf32>
    %49 = vector.broadcast %48 : vector<1x64xf32> to vector<128x64xf32>
    %50 = arith.addf %47, %49 : vector<128x64xf32>
    %cst_42 = arith.constant 0.000000e+00 : f32
    %51 = vector.broadcast %cst_42 : f32 to vector<128x64xf32>
    %52 = arith.maximumf %50, %51 : vector<128x64xf32>
    %53 = arith.truncf %52 : vector<128x64xf32> to vector<128x64xbf16>
    %c0_43 = arith.constant 0 : index
    %c0_44 = arith.constant 0 : index
    %54 = vector.load %arg20[%c0_43, %c0_44] : memref<64x8xbf16, #tpu.memory_space<vmem>>, vector<64x8xbf16>
    %cst_45 = arith.constant dense<0.000000e+00> : vector<128x8xf32>
    %55 = tpu.matmul %53, %54, %cst_45 {dimension_numbers = #tpu.dot_dimension_numbers<[1], [0], [0], [1], [0, 0, 1, 1], [], []>} : vector<128x64xbf16>, vector<64x8xbf16>, vector<128x8xf32> -> vector<128x8xf32>
    %c0_46 = arith.constant 0 : index
    %c0_47 = arith.constant 0 : index
    %56 = vector.load %arg21[%c0_46, %c0_47] : memref<1x8xf32, #tpu.memory_space<vmem>>, vector<1x8xf32>
    %57 = vector.broadcast %56 : vector<1x8xf32> to vector<128x8xf32>
    %58 = arith.addf %55, %57 : vector<128x8xf32>
    %cst_48 = arith.constant 0.000000e+00 : f32
    %59 = vector.broadcast %cst_48 : f32 to vector<128x8xf32>
    %60 = arith.maximumf %58, %59 : vector<128x8xf32>
    %61 = arith.truncf %60 : vector<128x8xf32> to vector<128x8xbf16>
    %c0_49 = arith.constant 0 : index
    %c0_50 = arith.constant 0 : index
    %62 = vector.load %arg22[%c0_49, %c0_50] : memref<16x128xbf16, #tpu.memory_space<vmem>>, vector<16x128xbf16>
    %cst_51 = arith.constant dense<0.000000e+00> : vector<128x128xf32>
    %63 = tpu.matmul %29, %62, %cst_51 {dimension_numbers = #tpu.dot_dimension_numbers<[1], [0], [0], [1], [0, 0, 1, 1], [], []>} : vector<128x16xbf16>, vector<16x128xbf16>, vector<128x128xf32> -> vector<128x128xf32>
    %c0_52 = arith.constant 0 : index
    %c0_53 = arith.constant 0 : index
    %64 = vector.load %arg23[%c0_52, %c0_53] : memref<8x128xbf16, #tpu.memory_space<vmem>>, vector<8x128xbf16>
    %cst_54 = arith.constant dense<0.000000e+00> : vector<128x128xf32>
    %65 = tpu.matmul %45, %64, %cst_54 {dimension_numbers = #tpu.dot_dimension_numbers<[1], [0], [0], [1], [0, 0, 1, 1], [], []>} : vector<128x8xbf16>, vector<8x128xbf16>, vector<128x128xf32> -> vector<128x128xf32>
    %66 = arith.addf %63, %65 : vector<128x128xf32>
    %c0_55 = arith.constant 0 : index
    %c0_56 = arith.constant 0 : index
    %67 = vector.load %arg24[%c0_55, %c0_56] : memref<8x128xbf16, #tpu.memory_space<vmem>>, vector<8x128xbf16>
    %cst_57 = arith.constant dense<0.000000e+00> : vector<128x128xf32>
    %68 = tpu.matmul %61, %67, %cst_57 {dimension_numbers = #tpu.dot_dimension_numbers<[1], [0], [0], [1], [0, 0, 1, 1], [], []>} : vector<128x8xbf16>, vector<8x128xbf16>, vector<128x128xf32> -> vector<128x128xf32>
    %69 = arith.addf %66, %68 : vector<128x128xf32>
    %c0_58 = arith.constant 0 : index
    %c0_59 = arith.constant 0 : index
    %70 = vector.load %arg25[%c0_58, %c0_59] : memref<1x128xf32, #tpu.memory_space<vmem>>, vector<1x128xf32>
    %71 = vector.broadcast %70 : vector<1x128xf32> to vector<128x128xf32>
    %72 = arith.addf %69, %71 : vector<128x128xf32>
    %73 = vector.shape_cast %72 : vector<128x128xf32> to vector<8x16x128xf32>
    %c0_60 = arith.constant 0 : index
    %c0_61 = arith.constant 0 : index
    %c0_62 = arith.constant 0 : index
    %74 = vector.load %arg34[%c0_60, %c0_61, %c0_62] : memref<8x16x128xf32, #tpu.memory_space<vmem>>, vector<8x16x128xf32>
    tpu.vector_store %arg34[%c0_60, %c0_61, %c0_62], %73 {strides = array<i32>} : memref<8x16x128xf32, #tpu.memory_space<vmem>>, vector<8x16x128xf32>,
    %c0_63 = arith.constant 0 : index
    %c0_64 = arith.constant 0 : index
    %75 = vector.load %arg26[%c0_63, %c0_64] : memref<32x128xbf16, #tpu.memory_space<vmem>>, vector<32x128xbf16>
    %c0_65 = arith.constant 0 : index
    %c0_66 = arith.constant 0 : index
    %76 = vector.load %arg6[%c0_65, %c0_66] : memref<16x32xf32, #tpu.memory_space<vmem>>, vector<16x32xf32>
    %c0_67 = arith.constant 0 : index
    %c0_68 = arith.constant 0 : index
    %77 = vector.load %arg7[%c0_67, %c0_68] : memref<16x32xf32, #tpu.memory_space<vmem>>, vector<16x32xf32>
    %cst_69 = arith.constant 0.000000e+00 : f32
    %78 = vector.broadcast %cst_69 : f32 to vector<16x32xf32>
    %c0_i32 = arith.constant 0 : i32
    %79 = arith.index_cast %c0_i32 : i32 to index
    %c0_70 = arith.constant 0 : index
    %c0_71 = arith.constant 0 : index
    %80 = vector.load %arg34[%79, %c0_70, %c0_71] : memref<8x16x128xf32, #tpu.memory_space<vmem>>, vector<1x16x128xf32>
    %81 = vector.shape_cast %80 : vector<1x16x128xf32> to vector<16x128xf32>
    %82 = arith.truncf %76 : vector<16x32xf32> to vector<16x32xbf16>
    %cst_72 = arith.constant dense<0.000000e+00> : vector<16x128xf32>
    %83 = tpu.matmul %82, %75, %cst_72 {dimension_numbers = #tpu.dot_dimension_numbers<[1], [0], [0], [1], [0, 0, 1, 1], [], []>} : vector<16x32xbf16>, vector<32x128xbf16>, vector<16x128xf32> -> vector<16x128xf32>
    %84 = arith.addf %81, %83 : vector<16x128xf32>
    %85 = arith.negf %84 : vector<16x128xf32>
    %86 = math.exp %85 : vector<16x128xf32>
    %cst_73 = arith.constant 1.000000e+00 : f32
    %87 = vector.broadcast %cst_73 : f32 to vector<16x128xf32>
    %88 = arith.addf %87, %86 : vector<16x128xf32>
    %89 = arith.divf %87, %88 : vector<16x128xf32>
    %90 = vector.extract_strided_slice %89 {offsets = [0, 0], sizes = [16, 32], strides = [1, 1]} : vector<16x128xf32> to vector<16x32xf32>
    %91 = vector.extract_strided_slice %89 {offsets = [0, 32], sizes = [16, 32], strides = [1, 1]} : vector<16x128xf32> to vector<16x32xf32>
    %92 = vector.extract_strided_slice %89 {offsets = [0, 96], sizes = [16, 32], strides = [1, 1]} : vector<16x128xf32> to vector<16x32xf32>
    %93 = vector.extract_strided_slice %84 {offsets = [0, 64], sizes = [16, 32], strides = [1, 1]} : vector<16x128xf32> to vector<16x32xf32>
    %94 = math.tanh %93 : vector<16x32xf32>
    %95 = arith.mulf %91, %77 : vector<16x32xf32>
    %96 = arith.mulf %90, %94 : vector<16x32xf32>
    %97 = arith.addf %95, %96 : vector<16x32xf32>
    %98 = math.tanh %97 : vector<16x32xf32>
    %99 = arith.mulf %92, %98 : vector<16x32xf32>
    %100 = arith.addf %78, %99 : vector<16x32xf32>
    %c1_i32 = arith.constant 1 : i32
    %101 = arith.index_cast %c1_i32 : i32 to index
    %c0_74 = arith.constant 0 : index
    %c0_75 = arith.constant 0 : index
    %102 = vector.load %arg34[%101, %c0_74, %c0_75] : memref<8x16x128xf32, #tpu.memory_space<vmem>>, vector<1x16x128xf32>
    %103 = vector.shape_cast %102 : vector<1x16x128xf32> to vector<16x128xf32>
    %104 = arith.truncf %99 : vector<16x32xf32> to vector<16x32xbf16>
    %cst_76 = arith.constant dense<0.000000e+00> : vector<16x128xf32>
    %105 = tpu.matmul %104, %75, %cst_76 {dimension_numbers = #tpu.dot_dimension_numbers<[1], [0], [0], [1], [0, 0, 1, 1], [], []>} : vector<16x32xbf16>, vector<32x128xbf16>, vector<16x128xf32> -> vector<16x128xf32>
    %106 = arith.addf %103, %105 : vector<16x128xf32>
    %107 = arith.negf %106 : vector<16x128xf32>
    %108 = math.exp %107 : vector<16x128xf32>
    %cst_77 = arith.constant 1.000000e+00 : f32
    %109 = vector.broadcast %cst_77 : f32 to vector<16x128xf32>
    %110 = arith.addf %109, %108 : vector<16x128xf32>
    %111 = arith.divf %109, %110 : vector<16x128xf32>
    %112 = vector.extract_strided_slice %111 {offsets = [0, 0], sizes = [16, 32], strides = [1, 1]} : vector<16x128xf32> to vector<16x32xf32>
    %113 = vector.extract_strided_slice %111 {offsets = [0, 32], sizes = [16, 32], strides = [1, 1]} : vector<16x128xf32> to vector<16x32xf32>
    %114 = vector.extract_strided_slice %111 {offsets = [0, 96], sizes = [16, 32], strides = [1, 1]} : vector<16x128xf32> to vector<16x32xf32>
    %115 = vector.extract_strided_slice %106 {offsets = [0, 64], sizes = [16, 32], strides = [1, 1]} : vector<16x128xf32> to vector<16x32xf32>
    %116 = math.tanh %115 : vector<16x32xf32>
    %117 = arith.mulf %113, %97 : vector<16x32xf32>
    %118 = arith.mulf %112, %116 : vector<16x32xf32>
    %119 = arith.addf %117, %118 : vector<16x32xf32>
    %120 = math.tanh %119 : vector<16x32xf32>
    %121 = arith.mulf %114, %120 : vector<16x32xf32>
    %122 = arith.addf %100, %121 : vector<16x32xf32>
    %c2_i32 = arith.constant 2 : i32
    %123 = arith.index_cast %c2_i32 : i32 to index
    %c0_78 = arith.constant 0 : index
    %c0_79 = arith.constant 0 : index
    %124 = vector.load %arg34[%123, %c0_78, %c0_79] : memref<8x16x128xf32, #tpu.memory_space<vmem>>, vector<1x16x128xf32>
    %125 = vector.shape_cast %124 : vector<1x16x128xf32> to vector<16x128xf32>
    %126 = arith.truncf %121 : vector<16x32xf32> to vector<16x32xbf16>
    %cst_80 = arith.constant dense<0.000000e+00> : vector<16x128xf32>
    %127 = tpu.matmul %126, %75, %cst_80 {dimension_numbers = #tpu.dot_dimension_numbers<[1], [0], [0], [1], [0, 0, 1, 1], [], []>} : vector<16x32xbf16>, vector<32x128xbf16>, vector<16x128xf32> -> vector<16x128xf32>
    %128 = arith.addf %125, %127 : vector<16x128xf32>
    %129 = arith.negf %128 : vector<16x128xf32>
    %130 = math.exp %129 : vector<16x128xf32>
    %cst_81 = arith.constant 1.000000e+00 : f32
    %131 = vector.broadcast %cst_81 : f32 to vector<16x128xf32>
    %132 = arith.addf %131, %130 : vector<16x128xf32>
    %133 = arith.divf %131, %132 : vector<16x128xf32>
    %134 = vector.extract_strided_slice %133 {offsets = [0, 0], sizes = [16, 32], strides = [1, 1]} : vector<16x128xf32> to vector<16x32xf32>
    %135 = vector.extract_strided_slice %133 {offsets = [0, 32], sizes = [16, 32], strides = [1, 1]} : vector<16x128xf32> to vector<16x32xf32>
    %136 = vector.extract_strided_slice %133 {offsets = [0, 96], sizes = [16, 32], strides = [1, 1]} : vector<16x128xf32> to vector<16x32xf32>
    %137 = vector.extract_strided_slice %128 {offsets = [0, 64], sizes = [16, 32], strides = [1, 1]} : vector<16x128xf32> to vector<16x32xf32>
    %138 = math.tanh %137 : vector<16x32xf32>
    %139 = arith.mulf %135, %119 : vector<16x32xf32>
    %140 = arith.mulf %134, %138 : vector<16x32xf32>
    %141 = arith.addf %139, %140 : vector<16x32xf32>
    %142 = math.tanh %141 : vector<16x32xf32>
    %143 = arith.mulf %136, %142 : vector<16x32xf32>
    %144 = arith.addf %122, %143 : vector<16x32xf32>
    %c3_i32 = arith.constant 3 : i32
    %145 = arith.index_cast %c3_i32 : i32 to index
    %c0_82 = arith.constant 0 : index
    %c0_83 = arith.constant 0 : index
    %146 = vector.load %arg34[%145, %c0_82, %c0_83] : memref<8x16x128xf32, #tpu.memory_space<vmem>>, vector<1x16x128xf32>
    %147 = vector.shape_cast %146 : vector<1x16x128xf32> to vector<16x128xf32>
    %148 = arith.truncf %143 : vector<16x32xf32> to vector<16x32xbf16>
    %cst_84 = arith.constant dense<0.000000e+00> : vector<16x128xf32>
    %149 = tpu.matmul %148, %75, %cst_84 {dimension_numbers = #tpu.dot_dimension_numbers<[1], [0], [0], [1], [0, 0, 1, 1], [], []>} : vector<16x32xbf16>, vector<32x128xbf16>, vector<16x128xf32> -> vector<16x128xf32>
    %150 = arith.addf %147, %149 : vector<16x128xf32>
    %151 = arith.negf %150 : vector<16x128xf32>
    %152 = math.exp %151 : vector<16x128xf32>
    %cst_85 = arith.constant 1.000000e+00 : f32
    %153 = vector.broadcast %cst_85 : f32 to vector<16x128xf32>
    %154 = arith.addf %153, %152 : vector<16x128xf32>
    %155 = arith.divf %153, %154 : vector<16x128xf32>
    %156 = vector.extract_strided_slice %155 {offsets = [0, 0], sizes = [16, 32], strides = [1, 1]} : vector<16x128xf32> to vector<16x32xf32>
    %157 = vector.extract_strided_slice %155 {offsets = [0, 32], sizes = [16, 32], strides = [1, 1]} : vector<16x128xf32> to vector<16x32xf32>
    %158 = vector.extract_strided_slice %155 {offsets = [0, 96], sizes = [16, 32], strides = [1, 1]} : vector<16x128xf32> to vector<16x32xf32>
    %159 = vector.extract_strided_slice %150 {offsets = [0, 64], sizes = [16, 32], strides = [1, 1]} : vector<16x128xf32> to vector<16x32xf32>
    %160 = math.tanh %159 : vector<16x32xf32>
    %161 = arith.mulf %157, %141 : vector<16x32xf32>
    %162 = arith.mulf %156, %160 : vector<16x32xf32>
    %163 = arith.addf %161, %162 : vector<16x32xf32>
    %164 = math.tanh %163 : vector<16x32xf32>
    %165 = arith.mulf %158, %164 : vector<16x32xf32>
    %166 = arith.addf %144, %165 : vector<16x32xf32>
    %c4_i32 = arith.constant 4 : i32
    %167 = arith.index_cast %c4_i32 : i32 to index
    %c0_86 = arith.constant 0 : index
    %c0_87 = arith.constant 0 : index
    %168 = vector.load %arg34[%167, %c0_86, %c0_87] : memref<8x16x128xf32, #tpu.memory_space<vmem>>, vector<1x16x128xf32>
    %169 = vector.shape_cast %168 : vector<1x16x128xf32> to vector<16x128xf32>
    %170 = arith.truncf %165 : vector<16x32xf32> to vector<16x32xbf16>
    %cst_88 = arith.constant dense<0.000000e+00> : vector<16x128xf32>
    %171 = tpu.matmul %170, %75, %cst_88 {dimension_numbers = #tpu.dot_dimension_numbers<[1], [0], [0], [1], [0, 0, 1, 1], [], []>} : vector<16x32xbf16>, vector<32x128xbf16>, vector<16x128xf32> -> vector<16x128xf32>
    %172 = arith.addf %169, %171 : vector<16x128xf32>
    %173 = arith.negf %172 : vector<16x128xf32>
    %174 = math.exp %173 : vector<16x128xf32>
    %cst_89 = arith.constant 1.000000e+00 : f32
    %175 = vector.broadcast %cst_89 : f32 to vector<16x128xf32>
    %176 = arith.addf %175, %174 : vector<16x128xf32>
    %177 = arith.divf %175, %176 : vector<16x128xf32>
    %178 = vector.extract_strided_slice %177 {offsets = [0, 0], sizes = [16, 32], strides = [1, 1]} : vector<16x128xf32> to vector<16x32xf32>
    %179 = vector.extract_strided_slice %177 {offsets = [0, 32], sizes = [16, 32], strides = [1, 1]} : vector<16x128xf32> to vector<16x32xf32>
    %180 = vector.extract_strided_slice %177 {offsets = [0, 96], sizes = [16, 32], strides = [1, 1]} : vector<16x128xf32> to vector<16x32xf32>
    %181 = vector.extract_strided_slice %172 {offsets = [0, 64], sizes = [16, 32], strides = [1, 1]} : vector<16x128xf32> to vector<16x32xf32>
    %182 = math.tanh %181 : vector<16x32xf32>
    %183 = arith.mulf %179, %163 : vector<16x32xf32>
    %184 = arith.mulf %178, %182 : vector<16x32xf32>
    %185 = arith.addf %183, %184 : vector<16x32xf32>
    %186 = math.tanh %185 : vector<16x32xf32>
    %187 = arith.mulf %180, %186 : vector<16x32xf32>
    %188 = arith.addf %166, %187 : vector<16x32xf32>
    %c5_i32 = arith.constant 5 : i32
    %189 = arith.index_cast %c5_i32 : i32 to index
    %c0_90 = arith.constant 0 : index
    %c0_91 = arith.constant 0 : index
    %190 = vector.load %arg34[%189, %c0_90, %c0_91] : memref<8x16x128xf32, #tpu.memory_space<vmem>>, vector<1x16x128xf32>
    %191 = vector.shape_cast %190 : vector<1x16x128xf32> to vector<16x128xf32>
    %192 = arith.truncf %187 : vector<16x32xf32> to vector<16x32xbf16>
    %cst_92 = arith.constant dense<0.000000e+00> : vector<16x128xf32>
    %193 = tpu.matmul %192, %75, %cst_92 {dimension_numbers = #tpu.dot_dimension_numbers<[1], [0], [0], [1], [0, 0, 1, 1], [], []>} : vector<16x32xbf16>, vector<32x128xbf16>, vector<16x128xf32> -> vector<16x128xf32>
    %194 = arith.addf %191, %193 : vector<16x128xf32>
    %195 = arith.negf %194 : vector<16x128xf32>
    %196 = math.exp %195 : vector<16x128xf32>
    %cst_93 = arith.constant 1.000000e+00 : f32
    %197 = vector.broadcast %cst_93 : f32 to vector<16x128xf32>
    %198 = arith.addf %197, %196 : vector<16x128xf32>
    %199 = arith.divf %197, %198 : vector<16x128xf32>
    %200 = vector.extract_strided_slice %199 {offsets = [0, 0], sizes = [16, 32], strides = [1, 1]} : vector<16x128xf32> to vector<16x32xf32>
    %201 = vector.extract_strided_slice %199 {offsets = [0, 32], sizes = [16, 32], strides = [1, 1]} : vector<16x128xf32> to vector<16x32xf32>
    %202 = vector.extract_strided_slice %199 {offsets = [0, 96], sizes = [16, 32], strides = [1, 1]} : vector<16x128xf32> to vector<16x32xf32>
    %203 = vector.extract_strided_slice %194 {offsets = [0, 64], sizes = [16, 32], strides = [1, 1]} : vector<16x128xf32> to vector<16x32xf32>
    %204 = math.tanh %203 : vector<16x32xf32>
    %205 = arith.mulf %201, %185 : vector<16x32xf32>
    %206 = arith.mulf %200, %204 : vector<16x32xf32>
    %207 = arith.addf %205, %206 : vector<16x32xf32>
    %208 = math.tanh %207 : vector<16x32xf32>
    %209 = arith.mulf %202, %208 : vector<16x32xf32>
    %210 = arith.addf %188, %209 : vector<16x32xf32>
    %c6_i32 = arith.constant 6 : i32
    %211 = arith.index_cast %c6_i32 : i32 to index
    %c0_94 = arith.constant 0 : index
    %c0_95 = arith.constant 0 : index
    %212 = vector.load %arg34[%211, %c0_94, %c0_95] : memref<8x16x128xf32, #tpu.memory_space<vmem>>, vector<1x16x128xf32>
    %213 = vector.shape_cast %212 : vector<1x16x128xf32> to vector<16x128xf32>
    %214 = arith.truncf %209 : vector<16x32xf32> to vector<16x32xbf16>
    %cst_96 = arith.constant dense<0.000000e+00> : vector<16x128xf32>
    %215 = tpu.matmul %214, %75, %cst_96 {dimension_numbers = #tpu.dot_dimension_numbers<[1], [0], [0], [1], [0, 0, 1, 1], [], []>} : vector<16x32xbf16>, vector<32x128xbf16>, vector<16x128xf32> -> vector<16x128xf32>
    %216 = arith.addf %213, %215 : vector<16x128xf32>
    %217 = arith.negf %216 : vector<16x128xf32>
    %218 = math.exp %217 : vector<16x128xf32>
    %cst_97 = arith.constant 1.000000e+00 : f32
    %219 = vector.broadcast %cst_97 : f32 to vector<16x128xf32>
    %220 = arith.addf %219, %218 : vector<16x128xf32>
    %221 = arith.divf %219, %220 : vector<16x128xf32>
    %222 = vector.extract_strided_slice %221 {offsets = [0, 0], sizes = [16, 32], strides = [1, 1]} : vector<16x128xf32> to vector<16x32xf32>
    %223 = vector.extract_strided_slice %221 {offsets = [0, 32], sizes = [16, 32], strides = [1, 1]} : vector<16x128xf32> to vector<16x32xf32>
    %224 = vector.extract_strided_slice %221 {offsets = [0, 96], sizes = [16, 32], strides = [1, 1]} : vector<16x128xf32> to vector<16x32xf32>
    %225 = vector.extract_strided_slice %216 {offsets = [0, 64], sizes = [16, 32], strides = [1, 1]} : vector<16x128xf32> to vector<16x32xf32>
    %226 = math.tanh %225 : vector<16x32xf32>
    %227 = arith.mulf %223, %207 : vector<16x32xf32>
    %228 = arith.mulf %222, %226 : vector<16x32xf32>
    %229 = arith.addf %227, %228 : vector<16x32xf32>
    %230 = math.tanh %229 : vector<16x32xf32>
    %231 = arith.mulf %224, %230 : vector<16x32xf32>
    %232 = arith.addf %210, %231 : vector<16x32xf32>
    %c7_i32 = arith.constant 7 : i32
    %233 = arith.index_cast %c7_i32 : i32 to index
    %c0_98 = arith.constant 0 : index
    %c0_99 = arith.constant 0 : index
    %234 = vector.load %arg34[%233, %c0_98, %c0_99] : memref<8x16x128xf32, #tpu.memory_space<vmem>>, vector<1x16x128xf32>
    %235 = vector.shape_cast %234 : vector<1x16x128xf32> to vector<16x128xf32>
    %236 = arith.truncf %231 : vector<16x32xf32> to vector<16x32xbf16>
    %cst_100 = arith.constant dense<0.000000e+00> : vector<16x128xf32>
    %237 = tpu.matmul %236, %75, %cst_100 {dimension_numbers = #tpu.dot_dimension_numbers<[1], [0], [0], [1], [0, 0, 1, 1], [], []>} : vector<16x32xbf16>, vector<32x128xbf16>, vector<16x128xf32> -> vector<16x128xf32>
    %238 = arith.addf %235, %237 : vector<16x128xf32>
    %239 = arith.negf %238 : vector<16x128xf32>
    %240 = math.exp %239 : vector<16x128xf32>
    %cst_101 = arith.constant 1.000000e+00 : f32
    %241 = vector.broadcast %cst_101 : f32 to vector<16x128xf32>
    %242 = arith.addf %241, %240 : vector<16x128xf32>
    %243 = arith.divf %241, %242 : vector<16x128xf32>
    %244 = vector.extract_strided_slice %243 {offsets = [0, 0], sizes = [16, 32], strides = [1, 1]} : vector<16x128xf32> to vector<16x32xf32>
    %245 = vector.extract_strided_slice %243 {offsets = [0, 32], sizes = [16, 32], strides = [1, 1]} : vector<16x128xf32> to vector<16x32xf32>
    %246 = vector.extract_strided_slice %243 {offsets = [0, 96], sizes = [16, 32], strides = [1, 1]} : vector<16x128xf32> to vector<16x32xf32>
    %247 = vector.extract_strided_slice %238 {offsets = [0, 64], sizes = [16, 32], strides = [1, 1]} : vector<16x128xf32> to vector<16x32xf32>
    %248 = math.tanh %247 : vector<16x32xf32>
    %249 = arith.mulf %245, %229 : vector<16x32xf32>
    %250 = arith.mulf %244, %248 : vector<16x32xf32>
    %251 = arith.addf %249, %250 : vector<16x32xf32>
    %252 = math.tanh %251 : vector<16x32xf32>
    %253 = arith.mulf %246, %252 : vector<16x32xf32>
    %254 = arith.addf %232, %253 : vector<16x32xf32>
    %c8_i32 = arith.constant 8 : i32
    %255 = arith.truncf %254 : vector<16x32xf32> to vector<16x32xbf16>
    %c0_102 = arith.constant 0 : index
    %c0_103 = arith.constant 0 : index
    %256 = vector.load %arg27[%c0_102, %c0_103] : memref<32x16xbf16, #tpu.memory_space<vmem>>, vector<32x16xbf16>
    %cst_104 = arith.constant dense<0.000000e+00> : vector<16x16xf32>
    %257 = tpu.matmul %255, %256, %cst_104 {dimension_numbers = #tpu.dot_dimension_numbers<[1], [0], [0], [1], [0, 0, 1, 1], [], []>} : vector<16x32xbf16>, vector<32x16xbf16>, vector<16x16xf32> -> vector<16x16xf32>
    %c0_105 = arith.constant 0 : index
    %c0_106 = arith.constant 0 : index
    %258 = vector.load %arg4[%c0_105, %c0_106] : memref<16x4xbf16, #tpu.memory_space<vmem>>, vector<16x4xbf16>
    %c0_107 = arith.constant 0 : index
    %c0_108 = arith.constant 0 : index
    %259 = vector.load %arg28[%c0_107, %c0_108] : memref<4x16xbf16, #tpu.memory_space<vmem>>, vector<4x16xbf16>
    %cst_109 = arith.constant dense<0.000000e+00> : vector<16x16xf32>
    %260 = tpu.matmul %258, %259, %cst_109 {dimension_numbers = #tpu.dot_dimension_numbers<[1], [0], [0], [1], [0, 0, 1, 1], [], []>} : vector<16x4xbf16>, vector<4x16xbf16>, vector<16x16xf32> -> vector<16x16xf32>
    %261 = arith.addf %257, %260 : vector<16x16xf32>
    %c0_110 = arith.constant 0 : index
    %c0_111 = arith.constant 0 : index
    %262 = vector.load %arg5[%c0_110, %c0_111] : memref<16x4xbf16, #tpu.memory_space<vmem>>, vector<16x4xbf16>
    %c0_112 = arith.constant 0 : index
    %c0_113 = arith.constant 0 : index
    %263 = vector.load %arg29[%c0_112, %c0_113] : memref<4x16xbf16, #tpu.memory_space<vmem>>, vector<4x16xbf16>
    %cst_114 = arith.constant dense<0.000000e+00> : vector<16x16xf32>
    %264 = tpu.matmul %262, %263, %cst_114 {dimension_numbers = #tpu.dot_dimension_numbers<[1], [0], [0], [1], [0, 0, 1, 1], [], []>} : vector<16x4xbf16>, vector<4x16xbf16>, vector<16x16xf32> -> vector<16x16xf32>
    %265 = arith.addf %261, %264 : vector<16x16xf32>
    %c0_115 = arith.constant 0 : index
    %c0_116 = arith.constant 0 : index
    %266 = vector.load %arg30[%c0_115, %c0_116] : memref<1x16xf32, #tpu.memory_space<vmem>>, vector<1x16xf32>
    %267 = vector.broadcast %266 : vector<1x16xf32> to vector<16x16xf32>
    %268 = arith.addf %265, %267 : vector<16x16xf32>
    %cst_117 = arith.constant 0.000000e+00 : f32
    %269 = vector.broadcast %cst_117 : f32 to vector<16x16xf32>
    %270 = arith.maximumf %268, %269 : vector<16x16xf32>
    %271 = arith.truncf %270 : vector<16x16xf32> to vector<16x16xbf16>
    %c0_118 = arith.constant 0 : index
    %c0_119 = arith.constant 0 : index
    %272 = vector.load %arg31[%c0_118, %c0_119] : memref<16x16xbf16, #tpu.memory_space<vmem>>, vector<16x16xbf16>
    %cst_120 = arith.constant dense<0.000000e+00> : vector<16x16xf32>
    %273 = tpu.matmul %271, %272, %cst_120 {dimension_numbers = #tpu.dot_dimension_numbers<[1], [0], [0], [1], [0, 0, 1, 1], [], []>} : vector<16x16xbf16>, vector<16x16xbf16>, vector<16x16xf32> -> vector<16x16xf32>
    %c0_121 = arith.constant 0 : index
    %c0_122 = arith.constant 0 : index
    %274 = vector.load %arg32[%c0_121, %c0_122] : memref<1x16xf32, #tpu.memory_space<vmem>>, vector<1x16xf32>
    %275 = vector.broadcast %274 : vector<1x16xf32> to vector<16x16xf32>
    %276 = arith.addf %273, %275 : vector<16x16xf32>
    %c0_123 = arith.constant 0 : index
    %c0_124 = arith.constant 0 : index
    %277 = vector.load %arg33[%c0_123, %c0_124] : memref<16x16xf32, #tpu.memory_space<vmem>>, vector<16x16xf32>
    tpu.vector_store %arg33[%c0_123, %c0_124], %276 {strides = array<i32>} : memref<16x16xf32, #tpu.memory_space<vmem>>, vector<16x16xf32>,
    return
  }
  func.func @transform_0(%arg0: i32) -> (i32, i32, i32) {
    %c0_i32 = arith.constant 0 : i32
    %c0_i32_0 = arith.constant 0 : i32
    %c0_i32_1 = arith.constant 0 : i32
    return %c0_i32, %arg0, %c0_i32_0 : i32, i32, i32
  }
  func.func @transform_1(%arg0: i32) -> (i32, i32, i32) {
    %c0_i32 = arith.constant 0 : i32
    %c0_i32_0 = arith.constant 0 : i32
    %c0_i32_1 = arith.constant 0 : i32
    return %c0_i32, %arg0, %c0_i32_0 : i32, i32, i32
  }
  func.func @transform_2(%arg0: i32) -> (i32, i32, i32) {
    %c0_i32 = arith.constant 0 : i32
    %c0_i32_0 = arith.constant 0 : i32
    %c0_i32_1 = arith.constant 0 : i32
    return %c0_i32, %arg0, %c0_i32_0 : i32, i32, i32
  }
  func.func @transform_3(%arg0: i32) -> (i32, i32) {
    %c0_i32 = arith.constant 0 : i32
    %c0_i32_0 = arith.constant 0 : i32
    return %arg0, %c0_i32 : i32, i32
  }
  func.func @transform_4(%arg0: i32) -> (i32, i32) {
    %c0_i32 = arith.constant 0 : i32
    %c0_i32_0 = arith.constant 0 : i32
    return %arg0, %c0_i32 : i32, i32
  }
  func.func @transform_5(%arg0: i32) -> (i32, i32) {
    %c0_i32 = arith.constant 0 : i32
    %c0_i32_0 = arith.constant 0 : i32
    return %arg0, %c0_i32 : i32, i32
  }
  func.func @transform_6(%arg0: i32) -> (i32, i32) {
    %c0_i32 = arith.constant 0 : i32
    %c0_i32_0 = arith.constant 0 : i32
    return %arg0, %c0_i32 : i32, i32
  }
  func.func @transform_7(%arg0: i32) -> (i32, i32) {
    %c0_i32 = arith.constant 0 : i32
    %c0_i32_0 = arith.constant 0 : i32
    %c0_i32_1 = arith.constant 0 : i32
    return %c0_i32, %c0_i32_0 : i32, i32
  }
  func.func @transform_8(%arg0: i32) -> (i32, i32) {
    %c0_i32 = arith.constant 0 : i32
    %c0_i32_0 = arith.constant 0 : i32
    %c0_i32_1 = arith.constant 0 : i32
    return %c0_i32, %c0_i32_0 : i32, i32
  }
  func.func @transform_9(%arg0: i32) -> (i32, i32) {
    %c0_i32 = arith.constant 0 : i32
    %c0_i32_0 = arith.constant 0 : i32
    %c0_i32_1 = arith.constant 0 : i32
    return %c0_i32, %c0_i32_0 : i32, i32
  }
  func.func @transform_10(%arg0: i32) -> (i32, i32) {
    %c0_i32 = arith.constant 0 : i32
    %c0_i32_0 = arith.constant 0 : i32
    %c0_i32_1 = arith.constant 0 : i32
    return %c0_i32, %c0_i32_0 : i32, i32
  }
  func.func @transform_11(%arg0: i32) -> (i32, i32) {
    %c0_i32 = arith.constant 0 : i32
    %c0_i32_0 = arith.constant 0 : i32
    %c0_i32_1 = arith.constant 0 : i32
    return %c0_i32, %c0_i32_0 : i32, i32
  }
  func.func @transform_12(%arg0: i32) -> (i32, i32) {
    %c0_i32 = arith.constant 0 : i32
    %c0_i32_0 = arith.constant 0 : i32
    %c0_i32_1 = arith.constant 0 : i32
    return %c0_i32, %c0_i32_0 : i32, i32
  }
  func.func @transform_13(%arg0: i32) -> (i32, i32) {
    %c0_i32 = arith.constant 0 : i32
    %c0_i32_0 = arith.constant 0 : i32
    %c0_i32_1 = arith.constant 0 : i32
    return %c0_i32, %c0_i32_0 : i32, i32
  }
  func.func @transform_14(%arg0: i32) -> (i32, i32) {
    %c0_i32 = arith.constant 0 : i32
    %c0_i32_0 = arith.constant 0 : i32
    %c0_i32_1 = arith.constant 0 : i32
    return %c0_i32, %c0_i32_0 : i32, i32
  }
  func.func @transform_15(%arg0: i32) -> (i32, i32) {
    %c0_i32 = arith.constant 0 : i32
    %c0_i32_0 = arith.constant 0 : i32
    %c0_i32_1 = arith.constant 0 : i32
    return %c0_i32, %c0_i32_0 : i32, i32
  }
  func.func @transform_16(%arg0: i32) -> (i32, i32) {
    %c0_i32 = arith.constant 0 : i32
    %c0_i32_0 = arith.constant 0 : i32
    %c0_i32_1 = arith.constant 0 : i32
    return %c0_i32, %c0_i32_0 : i32, i32
  }
  func.func @transform_17(%arg0: i32) -> (i32, i32) {
    %c0_i32 = arith.constant 0 : i32
    %c0_i32_0 = arith.constant 0 : i32
    %c0_i32_1 = arith.constant 0 : i32
    return %c0_i32, %c0_i32_0 : i32, i32
  }
  func.func @transform_18(%arg0: i32) -> (i32, i32) {
    %c0_i32 = arith.constant 0 : i32
    %c0_i32_0 = arith.constant 0 : i32
    %c0_i32_1 = arith.constant 0 : i32
    return %c0_i32, %c0_i32_0 : i32, i32
  }
  func.func @transform_19(%arg0: i32) -> (i32, i32) {
    %c0_i32 = arith.constant 0 : i32
    %c0_i32_0 = arith.constant 0 : i32
    %c0_i32_1 = arith.constant 0 : i32
    return %c0_i32, %c0_i32_0 : i32, i32
  }
  func.func @transform_20(%arg0: i32) -> (i32, i32) {
    %c0_i32 = arith.constant 0 : i32
    %c0_i32_0 = arith.constant 0 : i32
    %c0_i32_1 = arith.constant 0 : i32
    return %c0_i32, %c0_i32_0 : i32, i32
  }
  func.func @transform_21(%arg0: i32) -> (i32, i32) {
    %c0_i32 = arith.constant 0 : i32
    %c0_i32_0 = arith.constant 0 : i32
    %c0_i32_1 = arith.constant 0 : i32
    return %c0_i32, %c0_i32_0 : i32, i32
  }
  func.func @transform_22(%arg0: i32) -> (i32, i32) {
    %c0_i32 = arith.constant 0 : i32
    %c0_i32_0 = arith.constant 0 : i32
    %c0_i32_1 = arith.constant 0 : i32
    return %c0_i32, %c0_i32_0 : i32, i32
  }
  func.func @transform_23(%arg0: i32) -> (i32, i32) {
    %c0_i32 = arith.constant 0 : i32
    %c0_i32_0 = arith.constant 0 : i32
    %c0_i32_1 = arith.constant 0 : i32
    return %c0_i32, %c0_i32_0 : i32, i32
  }
  func.func @transform_24(%arg0: i32) -> (i32, i32) {
    %c0_i32 = arith.constant 0 : i32
    %c0_i32_0 = arith.constant 0 : i32
    %c0_i32_1 = arith.constant 0 : i32
    return %c0_i32, %c0_i32_0 : i32, i32
  }
  func.func @transform_25(%arg0: i32) -> (i32, i32) {
    %c0_i32 = arith.constant 0 : i32
    %c0_i32_0 = arith.constant 0 : i32
    %c0_i32_1 = arith.constant 0 : i32
    return %c0_i32, %c0_i32_0 : i32, i32
  }
  func.func @transform_26(%arg0: i32) -> (i32, i32) {
    %c0_i32 = arith.constant 0 : i32
    %c0_i32_0 = arith.constant 0 : i32
    %c0_i32_1 = arith.constant 0 : i32
    return %c0_i32, %c0_i32_0 : i32, i32
  }
  func.func @transform_27(%arg0: i32) -> (i32, i32) {
    %c0_i32 = arith.constant 0 : i32
    %c0_i32_0 = arith.constant 0 : i32
    %c0_i32_1 = arith.constant 0 : i32
    return %c0_i32, %c0_i32_0 : i32, i32
  }
  func.func @transform_28(%arg0: i32) -> (i32, i32) {
    %c0_i32 = arith.constant 0 : i32
    %c0_i32_0 = arith.constant 0 : i32
    %c0_i32_1 = arith.constant 0 : i32
    return %c0_i32, %c0_i32_0 : i32, i32
  }
  func.func @transform_29(%arg0: i32) -> (i32, i32) {
    %c0_i32 = arith.constant 0 : i32
    %c0_i32_0 = arith.constant 0 : i32
    %c0_i32_1 = arith.constant 0 : i32
    return %c0_i32, %c0_i32_0 : i32, i32
  }
  func.func @transform_30(%arg0: i32) -> (i32, i32) {
    %c0_i32 = arith.constant 0 : i32
    %c0_i32_0 = arith.constant 0 : i32
    %c0_i32_1 = arith.constant 0 : i32
    return %c0_i32, %c0_i32_0 : i32, i32
  }
  func.func @transform_31(%arg0: i32) -> (i32, i32) {
    %c0_i32 = arith.constant 0 : i32
    %c0_i32_0 = arith.constant 0 : i32
    %c0_i32_1 = arith.constant 0 : i32
    return %c0_i32, %c0_i32_0 : i32, i32
  }
  func.func @transform_32(%arg0: i32) -> (i32, i32) {
    %c0_i32 = arith.constant 0 : i32
    %c0_i32_0 = arith.constant 0 : i32
    return %arg0, %c0_i32 : i32, i32
  }
}

</mosaic_0001>

<llo_original>
// kernel: tpu_custom_call.1
$region0: #{tpu_custom_call.1}
  #allocation0 [shape = 'u32[]', space=smem, size = 0x4, offset = 0x4, fixed_abs, tag = 'smem constant byte address 0x4 - core index']
  #allocation1 [shape = 'u32[144,128]{1,0:T(1,128)}', space=vmem, size = 0x12000, scoped, tag = 'internal scratch']
  #allocation2 [shape = 'f32[8,16,128]{2,1,0:T(8,128)}', space=vmem, size = 0x10000, scoped, tag = 'scratch operand']
  %s0 = inlined_call_operand.smem [shape: u32[33], index: -1, kind: input, shape index: {}]
  %s1 = sld [smem:[%s0]]
  %s2 = scalar_lea.smem %s0, 1
  %s3 = sld [smem:[%s2]]
  %s4 = scalar_lea.smem %s0, 2
  %s5 = sld [smem:[%s4]]
  %s6 = scalar_lea.smem %s0, 3
  %s7 = sld [smem:[%s6]]
  %s8 = scalar_lea.smem %s0, 4
  %s9 = sld [smem:[%s8]]
  %s10 = scalar_lea.smem %s0, 5
  %s11 = sld [smem:[%s10]]
  %s12 = scalar_lea.smem %s0, 6
  %s13 = sld [smem:[%s12]]
  %s14 = scalar_lea.smem %s0, 7
  %s15 = sld [smem:[%s14]]
  %s16 = scalar_lea.smem %s0, 8
  %s17 = sld [smem:[%s16]]
  %s18 = scalar_lea.smem %s0, 9
  %s19 = sld [smem:[%s18]]
  %s20 = scalar_lea.smem %s0, 10
  %s21 = sld [smem:[%s20]]
  %s22 = scalar_lea.smem %s0, 11
  %s23 = sld [smem:[%s22]]
  %s24 = scalar_lea.smem %s0, 12
  %s25 = sld [smem:[%s24]]
  %s26 = scalar_lea.smem %s0, 13
  %s27 = sld [smem:[%s26]]
  %s28 = scalar_lea.smem %s0, 14
  %s29 = sld [smem:[%s28]]
  %s30 = scalar_lea.smem %s0, 15
  %s31 = sld [smem:[%s30]]
  %s32 = scalar_lea.smem %s0, 16
  %s33 = sld [smem:[%s32]]
  %s34 = scalar_lea.smem %s0, 17
  %s35 = sld [smem:[%s34]]
  %s36 = scalar_lea.smem %s0, 18
  %s37 = sld [smem:[%s36]]
  %s38 = scalar_lea.smem %s0, 19
  %s39 = sld [smem:[%s38]]
  %s40 = scalar_lea.smem %s0, 20
  %s41 = sld [smem:[%s40]]
  %s42 = scalar_lea.smem %s0, 21
  %s43 = sld [smem:[%s42]]
  %s44 = scalar_lea.smem %s0, 22
  %s45 = sld [smem:[%s44]]
  %s46 = scalar_lea.smem %s0, 23
  %s47 = sld [smem:[%s46]]
  %s48 = scalar_lea.smem %s0, 24
  %s49 = sld [smem:[%s48]]
  %s50 = scalar_lea.smem %s0, 25
  %s51 = sld [smem:[%s50]]
  %s52 = scalar_lea.smem %s0, 26
  %s53 = sld [smem:[%s52]]
  %s54 = scalar_lea.smem %s0, 27
  %s55 = sld [smem:[%s54]]
  %s56 = scalar_lea.smem %s0, 28
  %s57 = sld [smem:[%s56]]
  %s58 = scalar_lea.smem %s0, 29
  %s59 = sld [smem:[%s58]]
  %s60 = scalar_lea.smem %s0, 30
  %s61 = sld [smem:[%s60]]
  %s62 = scalar_lea.smem %s0, 31
  %s63 = sld [smem:[%s62]]
  %s64 = scalar_lea.smem %s0, 32
  %s65 = sld [smem:[%s64]]
  %s66 = sld [smem:[#allocation0]]
  $region202: #{tpu_custom_call.1} parent=0
    _
  %s68 = ssub.s32 1, %s66
  %s69 = scalar_select 0, %s68, %s66
  $region1: #{tpu_custom_call.1} parent=0
    #allocation3 [shape = 'u8[8192]{0}', space=vmem, size = 0x2000, scoped, tag = 'input window, operand 5, single buffered']
    #allocation4 [shape = 's32[1]{0}', space=sflag, size = 0x4, scoped, tag = 'scoped memory for tpu_custom_call.1']
    #allocation5 [shape = 's32[1]{0}', space=sflag, size = 0x4, scoped, tag = 'scoped memory for tpu_custom_call.1']
    #allocation6 [shape = 'u8[8192]{0}', space=vmem, size = 0x2000, scoped, tag = 'input window, operand 6, single buffered']
    #allocation7 [shape = 's32[1]{0}', space=sflag, size = 0x4, scoped, tag = 'scoped memory for tpu_custom_call.1']
    #allocation8 [shape = 'u8[4096]{0}', space=vmem, size = 0x1000, scoped, tag = 'input window, operand 8, single buffered']
    #allocation9 [shape = 'u8[524288]{0}', space=vmem, size = 0x80000, scoped, tag = 'input window, operand 9, single buffered']
    #allocation10 [shape = 's32[1]{0}', space=sflag, size = 0x4, scoped, tag = 'scoped memory for tpu_custom_call.1']
    #allocation11 [shape = 'u8[1024]{0}', space=vmem, size = 0x400, scoped, tag = 'input window, operand 10, single buffered']
    #allocation12 [shape = 'u8[512]{0}', space=vmem, size = 0x400, scoped, tag = 'input window, operand 12, single buffered']
    #allocation13 [shape = 's32[1]{0}', space=sflag, size = 0x4, scoped, tag = 'scoped memory for tpu_custom_call.1']
    #allocation14 [shape = 'u8[2048]{0}', space=vmem, size = 0x800, scoped, tag = 'input window, operand 13, single buffered']
    #allocation15 [shape = 'u8[512]{0}', space=vmem, size = 0x400, scoped, tag = 'input window, operand 14, single buffered']
    #allocation16 [shape = 's32[1]{0}', space=sflag, size = 0x4, scoped, tag = 'scoped memory for tpu_custom_call.1']
    #allocation17 [shape = 'u8[512]{0}', space=vmem, size = 0x400, scoped, tag = 'input window, operand 16, single buffered']
    #allocation18 [shape = 'u8[4096]{0}', space=vmem, size = 0x1000, scoped, tag = 'input window, operand 17, single buffered']
    #allocation19 [shape = 's32[1]{0}', space=sflag, size = 0x4, scoped, tag = 'scoped memory for tpu_custom_call.1']
    #allocation20 [shape = 'u8[512]{0}', space=vmem, size = 0x400, scoped, tag = 'input window, operand 18, single buffered']
    #allocation21 [shape = 'u8[512]{0}', space=vmem, size = 0x400, scoped, tag = 'input window, operand 20, single buffered']
    #allocation22 [shape = 's32[1]{0}', space=sflag, size = 0x4, scoped, tag = 'scoped memory for tpu_custom_call.1']
    #allocation23 [shape = 'u8[4096]{0}', space=vmem, size = 0x1000, scoped, tag = 'input window, operand 21, single buffered']
    #allocation24 [shape = 'u8[2048]{0}', space=vmem, size = 0x800, scoped, tag = 'input window, operand 22, single buffered']
    #allocation25 [shape = 's32[1]{0}', space=sflag, size = 0x4, scoped, tag = 'scoped memory for tpu_custom_call.1']
    #allocation26 [shape = 'u8[2048]{0}', space=vmem, size = 0x800, scoped, tag = 'input window, operand 23, single buffered']
    #allocation27 [shape = 'u8[512]{0}', space=vmem, size = 0x400, scoped, tag = 'input window, operand 29, single buffered']
    #allocation28 [shape = 's32[1]{0}', space=sflag, size = 0x4, scoped, tag = 'scoped memory for tpu_custom_call.1']
    #allocation29 [shape = 'u8[8192]{0}', space=vmem, size = 0x2000, scoped, tag = 'output window, operand 0, single buffered']
    %70 = vsyncpa [#allocation4], 0
    %71 = vsyncpa [#allocation7], 0
    %72 = vsyncpa [#allocation10], 0
    %73 = vsyncpa [#allocation13], 0
    %74 = vsyncpa [#allocation16], 0
    %75 = vsyncpa [#allocation19], 0
    %76 = vsyncpa [#allocation22], 0
    %77 = vsyncpa [#allocation25], 0
    %78 = vsyncpa [#allocation28], 0
    %79 = vsyncpa [#allocation5], 0
    // Predicated region
    $region2: #{tpu_custom_call.1} parent=1 // pred_check
      _
    $region3: #{tpu_custom_call.1} parent=1 // pred_check_branch
      %81 = sbr.rel (0) target = $region5
    $region4: #{tpu_custom_call.1} parent=1 // pred_region
      _
    $region5: #{tpu_custom_call.1} parent=1 // pred_fallthru
      _
    // Predicated region
    $region6: #{tpu_custom_call.1} parent=1 // pred_check
      _
    $region7: #{tpu_custom_call.1} parent=1 // pred_check_branch
      %83 = sbr.rel (0) target = $region9
    $region8: #{tpu_custom_call.1} parent=1 // pred_region
      _
    $region9: #{tpu_custom_call.1} parent=1 // pred_fallthru
      _
    // Predicated region
    $region10: #{tpu_custom_call.1} parent=1 // pred_check
      _
    $region11: #{tpu_custom_call.1} parent=1 // pred_check_branch
      %85 = sbr.rel (0) target = $region13
    $region12: #{tpu_custom_call.1} parent=1 // pred_region
      _
    $region13: #{tpu_custom_call.1} parent=1 // pred_fallthru
      _
    // Predicated region
    $region14: #{tpu_custom_call.1} parent=1 // pred_check
      _
    $region15: #{tpu_custom_call.1} parent=1 // pred_check_branch
      %87 = sbr.rel (0) target = $region17
    $region16: #{tpu_custom_call.1} parent=1 // pred_region
      _
    $region17: #{tpu_custom_call.1} parent=1 // pred_fallthru
      _
    // Predicated region
    $region18: #{tpu_custom_call.1} parent=1 // pred_check
      _
    $region19: #{tpu_custom_call.1} parent=1 // pred_check_branch
      %89 = sbr.rel (0) target = $region21
    $region20: #{tpu_custom_call.1} parent=1 // pred_region
      _
    $region21: #{tpu_custom_call.1} parent=1 // pred_fallthru
      _
    // Predicated region
    $region22: #{tpu_custom_call.1} parent=1 // pred_check
      _
    $region23: #{tpu_custom_call.1} parent=1 // pred_check_branch
      %91 = sbr.rel (0) target = $region25
    $region24: #{tpu_custom_call.1} parent=1 // pred_region
      %s93 = ssub.s32 256, 256
      %94 = vsyncadd [#allocation4], %s93
      %s95 = sshll.u32 [#allocation3], 4
      %s96 = int_to_ptr.vmem [resolvable:$true] %s95
      %101 = dma.hbm_to_vmem [thread:$0]  %s11, 256, %s96, [#allocation4], 128, 128, 8
    $region25: #{tpu_custom_call.1} parent=1 // pred_fallthru
      _
    // Predicated region
    $region26: #{tpu_custom_call.1} parent=1 // pred_check
      _
    $region27: #{tpu_custom_call.1} parent=1 // pred_check_branch
      %103 = sbr.rel (0) target = $region29
    $region28: #{tpu_custom_call.1} parent=1 // pred_region
      %s105 = ssub.s32 256, 256
      %106 = vsyncadd [#allocation7], %s105
      %s107 = sshll.u32 [#allocation6], 4
      %s108 = int_to_ptr.vmem [resolvable:$true] %s107
      %113 = dma.hbm_to_vmem [thread:$0]  %s13, 256, %s108, [#allocation7], 128, 128, 8
    $region29: #{tpu_custom_call.1} parent=1 // pred_fallthru
      _
    // Predicated region
    $region30: #{tpu_custom_call.1} parent=1 // pred_check
      _
    $region31: #{tpu_custom_call.1} parent=1 // pred_check_branch
      %115 = sbr.rel (0) target = $region33
    $region32: #{tpu_custom_call.1} parent=1 // pred_region
      _
    $region33: #{tpu_custom_call.1} parent=1 // pred_fallthru
      _
    // Predicated region
    $region34: #{tpu_custom_call.1} parent=1 // pred_check
      _
    $region35: #{tpu_custom_call.1} parent=1 // pred_check_branch
      %117 = sbr.rel (0) target = $region37
    $region36: #{tpu_custom_call.1} parent=1 // pred_region
      %s119 = ssub.s32 128, 128
      %120 = vsyncadd [#allocation7], %s119
      %s122 = sshll.u32 [#allocation8], 4
      %s123 = int_to_ptr.vmem [resolvable:$true] %s122
      %125 = dma.hbm_to_vmem [thread:$0]  %s17, 128, %s123, [#allocation7]
    $region37: #{tpu_custom_call.1} parent=1 // pred_fallthru
      _
    // Predicated region
    $region38: #{tpu_custom_call.1} parent=1 // pred_check
      _
    $region39: #{tpu_custom_call.1} parent=1 // pred_check_branch
      %127 = sbr.rel (0) target = $region41
    $region40: #{tpu_custom_call.1} parent=1 // pred_region
      %s129 = ssub.s32 16384, 16384
      %130 = vsyncadd [#allocation10], %s129
      %s131 = sshll.u32 [#allocation9], 4
      %s132 = int_to_ptr.vmem [resolvable:$true] %s131
      %137 = dma.hbm_to_vmem [thread:$0]  %s19, 16384, %s132, [#allocation10], 128, 128, 8
    $region41: #{tpu_custom_call.1} parent=1 // pred_fallthru
      _
    // Predicated region
    $region42: #{tpu_custom_call.1} parent=1 // pred_check
      _
    $region43: #{tpu_custom_call.1} parent=1 // pred_check_branch
      %139 = sbr.rel (0) target = $region45
    $region44: #{tpu_custom_call.1} parent=1 // pred_region
      %s141 = ssub.s32 32, 32
      %142 = vsyncadd [#allocation10], %s141
      %s144 = sshll.u32 [#allocation11], 4
      %s145 = int_to_ptr.vmem [resolvable:$true] %s144
      %147 = dma.hbm_to_vmem [thread:$0]  %s21, 32, %s145, [#allocation10]
    $region45: #{tpu_custom_call.1} parent=1 // pred_fallthru
      _
    // Predicated region
    $region46: #{tpu_custom_call.1} parent=1 // pred_check
      _
    $region47: #{tpu_custom_call.1} parent=1 // pred_check_branch
      %149 = sbr.rel (0) target = $region49
    $region48: #{tpu_custom_call.1} parent=1 // pred_region
      _
    $region49: #{tpu_custom_call.1} parent=1 // pred_fallthru
      _
    // Predicated region
    $region50: #{tpu_custom_call.1} parent=1 // pred_check
      _
    $region51: #{tpu_custom_call.1} parent=1 // pred_check_branch
      %151 = sbr.rel (0) target = $region53
    $region52: #{tpu_custom_call.1} parent=1 // pred_region
      %s153 = ssub.s32 16, 16
      %154 = vsyncadd [#allocation13], %s153
      %s156 = sshll.u32 [#allocation12], 4
      %s157 = int_to_ptr.vmem [resolvable:$true] %s156
      %159 = dma.hbm_to_vmem [thread:$0]  %s25, 16, %s157, [#allocation13]
    $region53: #{tpu_custom_call.1} parent=1 // pred_fallthru
      _
    // Predicated region
    $region54: #{tpu_custom_call.1} parent=1 // pred_check
      _
    $region55: #{tpu_custom_call.1} parent=1 // pred_check_branch
      %161 = sbr.rel (0) target = $region57
    $region56: #{tpu_custom_call.1} parent=1 // pred_region
      %s163 = ssub.s32 64, 64
      %164 = vsyncadd [#allocation13], %s163
      %s166 = sshll.u32 [#allocation14], 4
      %s167 = int_to_ptr.vmem [resolvable:$true] %s166
      %169 = dma.hbm_to_vmem [thread:$0]  %s27, 64, %s167, [#allocation13]
    $region57: #{tpu_custom_call.1} parent=1 // pred_fallthru
      _
    // Predicated region
    $region58: #{tpu_custom_call.1} parent=1 // pred_check
      _
    $region59: #{tpu_custom_call.1} parent=1 // pred_check_branch
      %171 = sbr.rel (0) target = $region61
    $region60: #{tpu_custom_call.1} parent=1 // pred_region
      %s173 = ssub.s32 16, 16
      %174 = vsyncadd [#allocation16], %s173
      %s176 = sshll.u32 [#allocation15], 4
      %s177 = int_to_ptr.vmem [resolvable:$true] %s176
      %179 = dma.hbm_to_vmem [thread:$0]  %s29, 16, %s177, [#allocation16]
    $region61: #{tpu_custom_call.1} parent=1 // pred_fallthru
      _
    // Predicated region
    $region62: #{tpu_custom_call.1} parent=1 // pred_check
      _
    $region63: #{tpu_custom_call.1} parent=1 // pred_check_branch
      %181 = sbr.rel (0) target = $region65
    $region64: #{tpu_custom_call.1} parent=1 // pred_region
      _
    $region65: #{tpu_custom_call.1} parent=1 // pred_fallthru
      _
    // Predicated region
    $region66: #{tpu_custom_call.1} parent=1 // pred_check
      _
    $region67: #{tpu_custom_call.1} parent=1 // pred_check_branch
      %183 = sbr.rel (0) target = $region69
    $region68: #{tpu_custom_call.1} parent=1 // pred_region
      %s185 = ssub.s32 16, 16
      %186 = vsyncadd [#allocation16], %s185
      %s188 = sshll.u32 [#allocation17], 4
      %s189 = int_to_ptr.vmem [resolvable:$true] %s188
      %191 = dma.hbm_to_vmem [thread:$0]  %s33, 16, %s189, [#allocation16]
    $region69: #{tpu_custom_call.1} parent=1 // pred_fallthru
      _
    // Predicated region
    $region70: #{tpu_custom_call.1} parent=1 // pred_check
      _
    $region71: #{tpu_custom_call.1} parent=1 // pred_check_branch
      %193 = sbr.rel (0) target = $region73
    $region72: #{tpu_custom_call.1} parent=1 // pred_region
      %s195 = ssub.s32 128, 128
      %196 = vsyncadd [#allocation19], %s195
      %s197 = sshll.u32 [#allocation18], 4
      %s198 = int_to_ptr.vmem [resolvable:$true] %s197
      %203 = dma.hbm_to_vmem [thread:$0]  %s35, 128, %s198, [#allocation19], 64, 64, 4
    $region73: #{tpu_custom_call.1} parent=1 // pred_fallthru
      _
    // Predicated region
    $region74: #{tpu_custom_call.1} parent=1 // pred_check
      _
    $region75: #{tpu_custom_call.1} parent=1 // pred_check_branch
      %205 = sbr.rel (0) target = $region77
    $region76: #{tpu_custom_call.1} parent=1 // pred_region
      %s207 = ssub.s32 16, 16
      %208 = vsyncadd [#allocation19], %s207
      %s210 = sshll.u32 [#allocation20], 4
      %s211 = int_to_ptr.vmem [resolvable:$true] %s210
      %213 = dma.hbm_to_vmem [thread:$0]  %s37, 16, %s211, [#allocation19]
    $region77: #{tpu_custom_call.1} parent=1 // pred_fallthru
      _
    // Predicated region
    $region78: #{tpu_custom_call.1} parent=1 // pred_check
      _
    $region79: #{tpu_custom_call.1} parent=1 // pred_check_branch
      %215 = sbr.rel (0) target = $region81
    $region80: #{tpu_custom_call.1} parent=1 // pred_region
      _
    $region81: #{tpu_custom_call.1} parent=1 // pred_fallthru
      _
    // Predicated region
    $region82: #{tpu_custom_call.1} parent=1 // pred_check
      _
    $region83: #{tpu_custom_call.1} parent=1 // pred_check_branch
      %217 = sbr.rel (0) target = $region85
    $region84: #{tpu_custom_call.1} parent=1 // pred_region
      %s219 = ssub.s32 16, 16
      %220 = vsyncadd [#allocation22], %s219
      %s222 = sshll.u32 [#allocation21], 4
      %s223 = int_to_ptr.vmem [resolvable:$true] %s222
      %225 = dma.hbm_to_vmem [thread:$0]  %s41, 16, %s223, [#allocation22]
    $region85: #{tpu_custom_call.1} parent=1 // pred_fallthru
      _
    // Predicated region
    $region86: #{tpu_custom_call.1} parent=1 // pred_check
      _
    $region87: #{tpu_custom_call.1} parent=1 // pred_check_branch
      %227 = sbr.rel (0) target = $region89
    $region88: #{tpu_custom_call.1} parent=1 // pred_region
      %s229 = ssub.s32 128, 128
      %230 = vsyncadd [#allocation22], %s229
      %s231 = sshll.u32 [#allocation23], 4
      %s232 = int_to_ptr.vmem [resolvable:$true] %s231
      %237 = dma.hbm_to_vmem [thread:$0]  %s43, 128, %s232, [#allocation22], 64, 64, 4
    $region89: #{tpu_custom_call.1} parent=1 // pred_fallthru
      _
    // Predicated region
    $region90: #{tpu_custom_call.1} parent=1 // pred_check
      _
    $region91: #{tpu_custom_call.1} parent=1 // pred_check_branch
      %239 = sbr.rel (0) target = $region93
    $region92: #{tpu_custom_call.1} parent=1 // pred_region
      %s241 = ssub.s32 64, 64
      %242 = vsyncadd [#allocation25], %s241
      %s244 = sshll.u32 [#allocation24], 4
      %s245 = int_to_ptr.vmem [resolvable:$true] %s244
      %247 = dma.hbm_to_vmem [thread:$0]  %s45, 64, %s245, [#allocation25]
    $region93: #{tpu_custom_call.1} parent=1 // pred_fallthru
      _
    // Predicated region
    $region94: #{tpu_custom_call.1} parent=1 // pred_check
      _
    $region95: #{tpu_custom_call.1} parent=1 // pred_check_branch
      %249 = sbr.rel (0) target = $region97
    $region96: #{tpu_custom_call.1} parent=1 // pred_region
      %s251 = ssub.s32 64, 64
      %252 = vsyncadd [#allocation25], %s251
      %s254 = sshll.u32 [#allocation26], 4
      %s255 = int_to_ptr.vmem [resolvable:$true] %s254
      %257 = dma.hbm_to_vmem [thread:$0]  %s47, 64, %s255, [#allocation25]
    $region97: #{tpu_custom_call.1} parent=1 // pred_fallthru
      _
    // Predicated region
    $region98: #{tpu_custom_call.1} parent=1 // pred_check
      _
    $region99: #{tpu_custom_call.1} parent=1 // pred_check_branch
      %259 = sbr.rel (0) target = $region101
    $region100: #{tpu_custom_call.1} parent=1 // pred_region
      _
    $region101: #{tpu_custom_call.1} parent=1 // pred_fallthru
      _
    // Predicated region
    $region102: #{tpu_custom_call.1} parent=1 // pred_check
      _
    $region103: #{tpu_custom_call.1} parent=1 // pred_check_branch
      %261 = sbr.rel (0) target = $region105
    $region104: #{tpu_custom_call.1} parent=1 // pred_region
      _
    $region105: #{tpu_custom_call.1} parent=1 // pred_fallthru
      _
    // Predicated region
    $region106: #{tpu_custom_call.1} parent=1 // pred_check
      _
    $region107: #{tpu_custom_call.1} parent=1 // pred_check_branch
      %263 = sbr.rel (0) target = $region109
    $region108: #{tpu_custom_call.1} parent=1 // pred_region
      _
    $region109: #{tpu_custom_call.1} parent=1 // pred_fallthru
      _
    // Predicated region
    $region110: #{tpu_custom_call.1} parent=1 // pred_check
      _
    $region111: #{tpu_custom_call.1} parent=1 // pred_check_branch
      %265 = sbr.rel (0) target = $region113
    $region112: #{tpu_custom_call.1} parent=1 // pred_region
      _
    $region113: #{tpu_custom_call.1} parent=1 // pred_fallthru
      _
    // Predicated region
    $region114: #{tpu_custom_call.1} parent=1 // pred_check
      _
    $region115: #{tpu_custom_call.1} parent=1 // pred_check_branch
      %267 = sbr.rel (0) target = $region117
    $region116: #{tpu_custom_call.1} parent=1 // pred_region
      _
    $region117: #{tpu_custom_call.1} parent=1 // pred_fallthru
      _
    // Predicated region
    $region118: #{tpu_custom_call.1} parent=1 // pred_check
      _
    $region119: #{tpu_custom_call.1} parent=1 // pred_check_branch
      %269 = sbr.rel (0) target = $region121
    $region120: #{tpu_custom_call.1} parent=1 // pred_region
      %s271 = ssub.s32 16, 16
      %272 = vsyncadd [#allocation28], %s271
      %s274 = sshll.u32 [#allocation27], 4
      %s275 = int_to_ptr.vmem [resolvable:$true] %s274
      %277 = dma.hbm_to_vmem [thread:$0]  %s59, 16, %s275, [#allocation28]
    $region121: #{tpu_custom_call.1} parent=1 // pred_fallthru
      _
    // Predicated region
    $region122: #{tpu_custom_call.1} parent=1 // pred_check
      _
    $region123: #{tpu_custom_call.1} parent=1 // pred_check_branch
      %279 = sbr.rel (0) target = $region125
    $region124: #{tpu_custom_call.1} parent=1 // pred_region
      _
    $region125: #{tpu_custom_call.1} parent=1 // pred_fallthru
      _
    // Predicated region
    $region126: #{tpu_custom_call.1} parent=1 // pred_check
      _
    $region127: #{tpu_custom_call.1} parent=1 // pred_check_branch
      %281 = sbr.rel (0) target = $region129
    $region128: #{tpu_custom_call.1} parent=1 // pred_region
      _
    $region129: #{tpu_custom_call.1} parent=1 // pred_fallthru
      _
    // Predicated region
    $region130: #{tpu_custom_call.1} parent=1 // pred_check
      _
    $region131: #{tpu_custom_call.1} parent=1 // pred_check_branch
      %283 = sbr.rel (0) target = $region133
    $region132: #{tpu_custom_call.1} parent=1 // pred_region
      %284 = dma.done [#allocation4], 256
    $region133: #{tpu_custom_call.1} parent=1 // pred_fallthru
      _
    // Predicated region
    $region134: #{tpu_custom_call.1} parent=1 // pred_check
      _
    $region135: #{tpu_custom_call.1} parent=1 // pred_check_branch
      %286 = sbr.rel (0) target = $region137
    $region136: #{tpu_custom_call.1} parent=1 // pred_region
      %287 = dma.done [#allocation7], 256
    $region137: #{tpu_custom_call.1} parent=1 // pred_fallthru
      _
    // Predicated region
    $region138: #{tpu_custom_call.1} parent=1 // pred_check
      _
    $region139: #{tpu_custom_call.1} parent=1 // pred_check_branch
      %289 = sbr.rel (0) target = $region141
    $region140: #{tpu_custom_call.1} parent=1 // pred_region
      %290 = dma.done [#allocation7], 128
    $region141: #{tpu_custom_call.1} parent=1 // pred_fallthru
      _
    // Predicated region
    $region142: #{tpu_custom_call.1} parent=1 // pred_check
      _
    $region143: #{tpu_custom_call.1} parent=1 // pred_check_branch
      %292 = sbr.rel (0) target = $region145
    $region144: #{tpu_custom_call.1} parent=1 // pred_region
      %293 = dma.done [#allocation10], 16384
    $region145: #{tpu_custom_call.1} parent=1 // pred_fallthru
      _
    // Predicated region
    $region146: #{tpu_custom_call.1} parent=1 // pred_check
      _
    $region147: #{tpu_custom_call.1} parent=1 // pred_check_branch
      %295 = sbr.rel (0) target = $region149
    $region148: #{tpu_custom_call.1} parent=1 // pred_region
      %296 = dma.done [#allocation10], 32
    $region149: #{tpu_custom_call.1} parent=1 // pred_fallthru
      _
    // Predicated region
    $region150: #{tpu_custom_call.1} parent=1 // pred_check
      _
    $region151: #{tpu_custom_call.1} parent=1 // pred_check_branch
      %298 = sbr.rel (0) target = $region153
    $region152: #{tpu_custom_call.1} parent=1 // pred_region
      %299 = dma.done [#allocation13], 16
    $region153: #{tpu_custom_call.1} parent=1 // pred_fallthru
      _
    // Predicated region
    $region154: #{tpu_custom_call.1} parent=1 // pred_check
      _
    $region155: #{tpu_custom_call.1} parent=1 // pred_check_branch
      %301 = sbr.rel (0) target = $region157
    $region156: #{tpu_custom_call.1} parent=1 // pred_region
      %302 = dma.done [#allocation13], 64
    $region157: #{tpu_custom_call.1} parent=1 // pred_fallthru
      _
    // Predicated region
    $region158: #{tpu_custom_call.1} parent=1 // pred_check
      _
    $region159: #{tpu_custom_call.1} parent=1 // pred_check_branch
      %304 = sbr.rel (0) target = $region161
    $region160: #{tpu_custom_call.1} parent=1 // pred_region
      %305 = dma.done [#allocation16], 16
    $region161: #{tpu_custom_call.1} parent=1 // pred_fallthru
      _
    // Predicated region
    $region162: #{tpu_custom_call.1} parent=1 // pred_check
      _
    $region163: #{tpu_custom_call.1} parent=1 // pred_check_branch
      %307 = sbr.rel (0) target = $region165
    $region164: #{tpu_custom_call.1} parent=1 // pred_region
      %308 = dma.done [#allocation16], 16
    $region165: #{tpu_custom_call.1} parent=1 // pred_fallthru
      _
    // Predicated region
    $region166: #{tpu_custom_call.1} parent=1 // pred_check
      _
    $region167: #{tpu_custom_call.1} parent=1 // pred_check_branch
      %310 = sbr.rel (0) target = $region169
    $region168: #{tpu_custom_call.1} parent=1 // pred_region
      %311 = dma.done [#allocation19], 128
    $region169: #{tpu_custom_call.1} parent=1 // pred_fallthru
      _
    // Predicated region
    $region170: #{tpu_custom_call.1} parent=1 // pred_check
      _
    $region171: #{tpu_custom_call.1} parent=1 // pred_check_branch
      %313 = sbr.rel (0) target = $region173
    $region172: #{tpu_custom_call.1} parent=1 // pred_region
      %314 = dma.done [#allocation19], 16
    $region173: #{tpu_custom_call.1} parent=1 // pred_fallthru
      _
    // Predicated region
    $region174: #{tpu_custom_call.1} parent=1 // pred_check
      _
    $region175: #{tpu_custom_call.1} parent=1 // pred_check_branch
      %316 = sbr.rel (0) target = $region177
    $region176: #{tpu_custom_call.1} parent=1 // pred_region
      %317 = dma.done [#allocation22], 16
    $region177: #{tpu_custom_call.1} parent=1 // pred_fallthru
      _
    // Predicated region
    $region178: #{tpu_custom_call.1} parent=1 // pred_check
      _
    $region179: #{tpu_custom_call.1} parent=1 // pred_check_branch
      %319 = sbr.rel (0) target = $region181
    $region180: #{tpu_custom_call.1} parent=1 // pred_region
      %320 = dma.done [#allocation22], 128
    $region181: #{tpu_custom_call.1} parent=1 // pred_fallthru
      _
    // Predicated region
    $region182: #{tpu_custom_call.1} parent=1 // pred_check
      _
    $region183: #{tpu_custom_call.1} parent=1 // pred_check_branch
      %322 = sbr.rel (0) target = $region185
    $region184: #{tpu_custom_call.1} parent=1 // pred_region
      %323 = dma.done [#allocation25], 64
    $region185: #{tpu_custom_call.1} parent=1 // pred_fallthru
      _
    // Predicated region
    $region186: #{tpu_custom_call.1} parent=1 // pred_check
      _
    $region187: #{tpu_custom_call.1} parent=1 // pred_check_branch
      %325 = sbr.rel (0) target = $region189
    $region188: #{tpu_custom_call.1} parent=1 // pred_region
      %326 = dma.done [#allocation25], 64
    $region189: #{tpu_custom_call.1} parent=1 // pred_fallthru
      _
    // Predicated region
    $region190: #{tpu_custom_call.1} parent=1 // pred_check
      _
    $region191: #{tpu_custom_call.1} parent=1 // pred_check_branch
      %328 = sbr.rel (0) target = $region193
    $region192: #{tpu_custom_call.1} parent=1 // pred_region
      %329 = dma.done [#allocation28], 16
    $region193: #{tpu_custom_call.1} parent=1 // pred_fallthru
      _
    %v331 = vld [vmem:[%s1] sm:$0xf]
    %v332 = vld [vmem:[%s1 + $0x4] sm:$0xf]
    %v333 = vld [vmem:[%s1 + $0x8] sm:$0xf]
    %v334 = vld [vmem:[%s1 + $0xc] sm:$0xf]
    %v335 = vld [vmem:[%s1 + $0x10] sm:$0xf]
    %v336 = vld [vmem:[%s1 + $0x14] sm:$0xf]
    %v337 = vld [vmem:[%s1 + $0x18] sm:$0xf]
    %v338 = vld [vmem:[%s1 + $0x1c] sm:$0xf]
    %v339 = vld [vmem:[%s1 + $0x20] sm:$0xf]
    %v340 = vld [vmem:[%s1 + $0x24] sm:$0xf]
    %v341 = vld [vmem:[%s1 + $0x28] sm:$0xf]
    %v342 = vld [vmem:[%s1 + $0x2c] sm:$0xf]
    %v343 = vld [vmem:[%s1 + $0x30] sm:$0xf]
    %v344 = vld [vmem:[%s1 + $0x34] sm:$0xf]
    %v345 = vld [vmem:[%s1 + $0x38] sm:$0xf]
    %v346 = vld [vmem:[%s1 + $0x3c] sm:$0xf]
    %v347 = vld [vmem:[%s3] sm:$0xf]
    %v348 = vld [vmem:[%s3 + $0x4] sm:$0xf]
    %v349 = vld [vmem:[%s3 + $0x8] sm:$0xf]
    %v350 = vld [vmem:[%s3 + $0xc] sm:$0xf]
    %v351 = vld [vmem:[%s3 + $0x10] sm:$0xf]
    %v352 = vld [vmem:[%s3 + $0x14] sm:$0xf]
    %v353 = vld [vmem:[%s3 + $0x18] sm:$0xf]
    %v354 = vld [vmem:[%s3 + $0x1c] sm:$0xf]
    %v355 = vld [vmem:[%s3 + $0x20] sm:$0xf]
    %v356 = vld [vmem:[%s3 + $0x24] sm:$0xf]
    %v357 = vld [vmem:[%s3 + $0x28] sm:$0xf]
    %v358 = vld [vmem:[%s3 + $0x2c] sm:$0xf]
    %v359 = vld [vmem:[%s3 + $0x30] sm:$0xf]
    %v360 = vld [vmem:[%s3 + $0x34] sm:$0xf]
    %v361 = vld [vmem:[%s3 + $0x38] sm:$0xf]
    %v362 = vld [vmem:[%s3 + $0x3c] sm:$0xf]
    %v363 = vld [vmem:[%s5] sm:$0xf]
    %v364 = vld [vmem:[%s5 + $0x4] sm:$0xf]
    %v365 = vld [vmem:[%s5 + $0x8] sm:$0xf]
    %v366 = vld [vmem:[%s5 + $0xc] sm:$0xf]
    %v367 = vld [vmem:[%s5 + $0x10] sm:$0xf]
    %v368 = vld [vmem:[%s5 + $0x14] sm:$0xf]
    %v369 = vld [vmem:[%s5 + $0x18] sm:$0xf]
    %v370 = vld [vmem:[%s5 + $0x1c] sm:$0xf]
    %v371 = vld [vmem:[%s5 + $0x20] sm:$0xf]
    %v372 = vld [vmem:[%s5 + $0x24] sm:$0xf]
    %v373 = vld [vmem:[%s5 + $0x28] sm:$0xf]
    %v374 = vld [vmem:[%s5 + $0x2c] sm:$0xf]
    %v375 = vld [vmem:[%s5 + $0x30] sm:$0xf]
    %v376 = vld [vmem:[%s5 + $0x34] sm:$0xf]
    %v377 = vld [vmem:[%s5 + $0x38] sm:$0xf]
    %v378 = vld [vmem:[%s5 + $0x3c] sm:$0xf]
    %v379 = vld [vmem:[%s15] sm:$0xff]
    %v380 = vld [vmem:[%s15 + $0x8] sm:$0xff]
    %v381 = vld [vmem:[%s15 + $0x10] sm:$0xff]
    %v382 = vld [vmem:[%s15 + $0x18] sm:$0xff]
    %v383 = vld [vmem:[%s15 + $0x20] sm:$0xff]
    %v384 = vld [vmem:[%s15 + $0x28] sm:$0xff]
    %v385 = vld [vmem:[%s15 + $0x30] sm:$0xff]
    %v386 = vld [vmem:[%s15 + $0x38] sm:$0xff]
    %v387 = vld [vmem:[%s15 + $0x40] sm:$0xff]
    %v388 = vld [vmem:[%s15 + $0x48] sm:$0xff]
    %v389 = vld [vmem:[%s15 + $0x50] sm:$0xff]
    %v390 = vld [vmem:[%s15 + $0x58] sm:$0xff]
    %v391 = vld [vmem:[%s15 + $0x60] sm:$0xff]
    %v392 = vld [vmem:[%s15 + $0x68] sm:$0xff]
    %v393 = vld [vmem:[%s15 + $0x70] sm:$0xff]
    %v394 = vld [vmem:[%s15 + $0x78] sm:$0xff]
    %v395 = vld [vmem:[%s15 + $0x80] sm:$0xff]
    %v396 = vld [vmem:[%s15 + $0x88] sm:$0xff]
    %v397 = vld [vmem:[%s15 + $0x90] sm:$0xff]
    %v398 = vld [vmem:[%s15 + $0x98] sm:$0xff]
    %v399 = vld [vmem:[%s15 + $0xa0] sm:$0xff]
    %v400 = vld [vmem:[%s15 + $0xa8] sm:$0xff]
    %v401 = vld [vmem:[%s15 + $0xb0] sm:$0xff]
    %v402 = vld [vmem:[%s15 + $0xb8] sm:$0xff]
    %v403 = vld [vmem:[%s15 + $0xc0] sm:$0xff]
    %v404 = vld [vmem:[%s15 + $0xc8] sm:$0xff]
    %v405 = vld [vmem:[%s15 + $0xd0] sm:$0xff]
    %v406 = vld [vmem:[%s15 + $0xd8] sm:$0xff]
    %v407 = vld [vmem:[%s15 + $0xe0] sm:$0xff]
    %v408 = vld [vmem:[%s15 + $0xe8] sm:$0xff]
    %v409 = vld [vmem:[%s15 + $0xf0] sm:$0xff]
    %v410 = vld [vmem:[%s15 + $0xf8] sm:$0xff]
    %v411 = vld [vmem:[#allocation8] sm:$0xff]
    %v413 = vlaneseq
    %v414 = vshrl.u32 %v413, 7
    %v415 = vsub.s32 0, %v414
    %v416 = vrot.slane %v411, %v415
    %v417 = vlaneseq
    %v418 = vshrl.u32 %v417, 7
    %v419 = vsub.s32 1, %v418
    %v420 = vrot.slane %v411, %v419
    %v421 = vlaneseq
    %v422 = vshrl.u32 %v421, 7
    %v423 = vsub.s32 2, %v422
    %v424 = vrot.slane %v411, %v423
    %v425 = vlaneseq
    %v426 = vshrl.u32 %v425, 7
    %v427 = vsub.s32 3, %v426
    %v428 = vrot.slane %v411, %v427
    %v429 = vlaneseq
    %v430 = vshrl.u32 %v429, 7
    %v431 = vsub.s32 4, %v430
    %v432 = vrot.slane %v411, %v431
    %v433 = vlaneseq
    %v434 = vshrl.u32 %v433, 7
    %v435 = vsub.s32 5, %v434
    %v436 = vrot.slane %v411, %v435
    %v437 = vlaneseq
    %v438 = vshrl.u32 %v437, 7
    %v439 = vsub.s32 6, %v438
    %v440 = vrot.slane %v411, %v439
    %v441 = vlaneseq
    %v442 = vshrl.u32 %v441, 7
    %v443 = vsub.s32 7, %v442
    %v444 = vrot.slane %v411, %v443
    %v469 = vunpack.c.l.b16 %v331
    %v470 = vunpack.c.l.b16 %v332
    %v471 = vunpack.c.l.b16 %v333
    %v472 = vunpack.c.l.b16 %v334
    %v473 = vunpack.c.l.b16 %v335
    %v474 = vunpack.c.l.b16 %v336
    %v475 = vunpack.c.l.b16 %v337
    %v476 = vunpack.c.l.b16 %v338
    %v477 = vunpack.c.l.b16 %v339
    %v478 = vunpack.c.l.b16 %v340
    %v479 = vunpack.c.l.b16 %v341
    %v480 = vunpack.c.l.b16 %v342
    %v481 = vunpack.c.l.b16 %v343
    %v482 = vunpack.c.l.b16 %v344
    %v483 = vunpack.c.l.b16 %v345
    %v484 = vunpack.c.l.b16 %v346
    %v485 = vpack.c.b16 %v470, %v469
    %v486 = vpack.c.b16 %v472, %v471
    %v487 = vpack.c.b16 %v474, %v473
    %v488 = vpack.c.b16 %v476, %v475
    %v489 = vpack.c.b16 %v478, %v477
    %v490 = vpack.c.b16 %v480, %v479
    %v491 = vpack.c.b16 %v482, %v481
    %v492 = vpack.c.b16 %v484, %v483
    %v525 = vunpack.c.l.b16 %v379
    %v526 = vunpack.c.h.b16 %v379
    %v527 = vunpack.c.l.b16 %v380
    %v528 = vunpack.c.h.b16 %v380
    %v529 = vunpack.c.l.b16 %v381
    %v530 = vunpack.c.h.b16 %v381
    %v531 = vunpack.c.l.b16 %v382
    %v532 = vunpack.c.h.b16 %v382
    %v533 = vunpack.c.l.b16 %v383
    %v534 = vunpack.c.h.b16 %v383
    %v535 = vunpack.c.l.b16 %v384
    %v536 = vunpack.c.h.b16 %v384
    %v537 = vunpack.c.l.b16 %v385
    %v538 = vunpack.c.h.b16 %v385
    %v539 = vunpack.c.l.b16 %v386
    %v540 = vunpack.c.h.b16 %v386
    %v541 = vunpack.c.l.b16 %v387
    %v542 = vunpack.c.h.b16 %v387
    %v543 = vunpack.c.l.b16 %v388
    %v544 = vunpack.c.h.b16 %v388
    %v545 = vunpack.c.l.b16 %v389
    %v546 = vunpack.c.h.b16 %v389
    %v547 = vunpack.c.l.b16 %v390
    %v548 = vunpack.c.h.b16 %v390
    %v549 = vunpack.c.l.b16 %v391
    %v550 = vunpack.c.h.b16 %v391
    %v551 = vunpack.c.l.b16 %v392
    %v552 = vunpack.c.h.b16 %v392
    %v553 = vunpack.c.l.b16 %v393
    %v554 = vunpack.c.h.b16 %v393
    %v555 = vunpack.c.l.b16 %v394
    %v556 = vunpack.c.h.b16 %v394
    %v557 = vunpack.c.l.b16 %v395
    %v558 = vunpack.c.h.b16 %v395
    %v559 = vunpack.c.l.b16 %v396
    %v560 = vunpack.c.h.b16 %v396
    %v561 = vunpack.c.l.b16 %v397
    %v562 = vunpack.c.h.b16 %v397
    %v563 = vunpack.c.l.b16 %v398
    %v564 = vunpack.c.h.b16 %v398
    %v565 = vunpack.c.l.b16 %v399
    %v566 = vunpack.c.h.b16 %v399
    %v567 = vunpack.c.l.b16 %v400
    %v568 = vunpack.c.h.b16 %v400
    %v569 = vunpack.c.l.b16 %v401
    %v570 = vunpack.c.h.b16 %v401
    %v571 = vunpack.c.l.b16 %v402
    %v572 = vunpack.c.h.b16 %v402
    %v573 = vunpack.c.l.b16 %v403
    %v574 = vunpack.c.h.b16 %v403
    %v575 = vunpack.c.l.b16 %v404
    %v576 = vunpack.c.h.b16 %v404
    %v577 = vunpack.c.l.b16 %v405
    %v578 = vunpack.c.h.b16 %v405
    %v579 = vunpack.c.l.b16 %v406
    %v580 = vunpack.c.h.b16 %v406
    %v581 = vunpack.c.l.b16 %v407
    %v582 = vunpack.c.h.b16 %v407
    %v583 = vunpack.c.l.b16 %v408
    %v584 = vunpack.c.h.b16 %v408
    %v585 = vunpack.c.l.b16 %v409
    %v586 = vunpack.c.h.b16 %v409
    %v587 = vunpack.c.l.b16 %v410
    %v588 = vunpack.c.h.b16 %v410
    %v589 = vpack.c.b16 %v533, %v525
    %v590 = vpack.c.b16 %v534, %v526
    %v591 = vpack.c.b16 %v535, %v527
    %v592 = vpack.c.b16 %v536, %v528
    %v593 = vpack.c.b16 %v537, %v529
    %v594 = vpack.c.b16 %v538, %v530
    %v595 = vpack.c.b16 %v539, %v531
    %v596 = vpack.c.b16 %v540, %v532
    %v597 = vpack.c.b16 %v549, %v541
    %v598 = vpack.c.b16 %v550, %v542
    %v599 = vpack.c.b16 %v551, %v543
    %v600 = vpack.c.b16 %v552, %v544
    %v601 = vpack.c.b16 %v553, %v545
    %v602 = vpack.c.b16 %v554, %v546
    %v603 = vpack.c.b16 %v555, %v547
    %v604 = vpack.c.b16 %v556, %v548
    %v605 = vpack.c.b16 %v565, %v557
    %v606 = vpack.c.b16 %v566, %v558
    %v607 = vpack.c.b16 %v567, %v559
    %v608 = vpack.c.b16 %v568, %v560
    %v609 = vpack.c.b16 %v569, %v561
    %v610 = vpack.c.b16 %v570, %v562
    %v611 = vpack.c.b16 %v571, %v563
    %v612 = vpack.c.b16 %v572, %v564
    %v613 = vpack.c.b16 %v581, %v573
    %v614 = vpack.c.b16 %v582, %v574
    %v615 = vpack.c.b16 %v583, %v575
    %v616 = vpack.c.b16 %v584, %v576
    %v617 = vpack.c.b16 %v585, %v577
    %v618 = vpack.c.b16 %v586, %v578
    %v619 = vpack.c.b16 %v587, %v579
    %v620 = vpack.c.b16 %v588, %v580
    %vm653 = vcmask 523264
    %v655 = vsel %vm653, %v485, 0
    %v658 = vsel %vm653, %v486, 0
    %v661 = vsel %vm653, %v487, 0
    %v664 = vsel %vm653, %v488, 0
    %v667 = vsel %vm653, %v489, 0
    %v670 = vsel %vm653, %v490, 0
    %v673 = vsel %vm653, %v491, 0
    %v676 = vsel %vm653, %v492, 0
    %678 = vmatprep.subr.bf16.mxu0 0
    %679 = vmatpush1.bf16.msra.mxu0 0
    %680 = vmatprep.subr.bf16.mxu0 0
    %681 = vmatpush1.bf16.msra.mxu0 0
    %682 = vmatprep.subr.bf16.mxu0 0
    %683 = vmatpush1.bf16.msra.mxu0 0
    %684 = vmatprep.subr.bf16.mxu0 0
    %685 = vmatpush1.bf16.msra.mxu0 0
    %686 = vmatprep.subr.bf16.mxu0 %v614
    %687 = vmatpush1.bf16.msra.mxu0 %v613
    %688 = vmatprep.subr.bf16.mxu0 %v606
    %689 = vmatpush1.bf16.msra.mxu0 %v605
    %690 = vmatprep.subr.bf16.mxu0 %v598
    %691 = vmatpush1.bf16.msra.mxu0 %v597
    %692 = vmatprep.subr.bf16.mxu0 %v590
    %693 = vmatpush1.bf16.msra.mxu0 %v589
    %694 = vmatprep.subr.bf16.mxu0 0
    %695 = vmatpush2.bf16.msra.mxu0 0
    %696 = vmatprep.subr.bf16.mxu0 0
    %697 = vmatpush2.bf16.msra.mxu0 0
    %698 = vmatprep.subr.bf16.mxu0 0
    %699 = vmatpush2.bf16.msra.mxu0 0
    %700 = vmatprep.subr.bf16.mxu0 0
    %701 = vmatpush2.bf16.msra.mxu0 0
    %702 = vmatprep.subr.bf16.mxu0 0
    %703 = vmatpush2.bf16.msra.mxu0 0
    %704 = vmatprep.subr.bf16.mxu0 0
    %705 = vmatpush2.bf16.msra.mxu0 0
    %706 = vmatprep.subr.bf16.mxu0 0
    %707 = vmatpush2.bf16.msra.mxu0 0
    %708 = vmatprep.subr.bf16.mxu0 0
    %709 = vmatpush2.bf16.msra.mxu0 0
    %710 = vmatprep.mubr.bf16.mxu0 0
    %711 = vmatmul.mubr.bf16.gmra.mxu0 %v655
    %v712 = vpop.f32.mrf.mxu0
    %v713 = vadd.f32 %v416, %v712
    %v714 = vpop.f32.mrf.mxu0
    %v715 = vadd.f32 %v420, %v714
    %v716 = vpop.f32.mrf.mxu0
    %v717 = vadd.f32 %v416, %v716
    %v718 = vpop.f32.mrf.mxu0
    %v719 = vadd.f32 %v420, %v718
    %720 = vmatprep.mubr.bf16.mxu0 0
    %721 = vmatmul.mubr.bf16.gmra.mxu0 %v658
    %v722 = vpop.f32.mrf.mxu0
    %v723 = vadd.f32 %v416, %v722
    %v724 = vpop.f32.mrf.mxu0
    %v725 = vadd.f32 %v420, %v724
    %v726 = vpop.f32.mrf.mxu0
    %v727 = vadd.f32 %v416, %v726
    %v728 = vpop.f32.mrf.mxu0
    %v729 = vadd.f32 %v420, %v728
    %730 = vmatprep.mubr.bf16.mxu0 0
    %731 = vmatmul.mubr.bf16.gmra.mxu0 %v661
    %v732 = vpop.f32.mrf.mxu0
    %v733 = vadd.f32 %v416, %v732
    %v734 = vpop.f32.mrf.mxu0
    %v735 = vadd.f32 %v420, %v734
    %v736 = vpop.f32.mrf.mxu0
    %v737 = vadd.f32 %v416, %v736
    %v738 = vpop.f32.mrf.mxu0
    %v739 = vadd.f32 %v420, %v738
    %740 = vmatprep.mubr.bf16.mxu0 0
    %741 = vmatmul.mubr.bf16.gmra.mxu0 %v664
    %v742 = vpop.f32.mrf.mxu0
    %v743 = vadd.f32 %v416, %v742
    %v744 = vpop.f32.mrf.mxu0
    %v745 = vadd.f32 %v420, %v744
    %v746 = vpop.f32.mrf.mxu0
    %v747 = vadd.f32 %v416, %v746
    %v748 = vpop.f32.mrf.mxu0
    %v749 = vadd.f32 %v420, %v748
    %750 = vmatprep.mubr.bf16.mxu0 0
    %751 = vmatmul.mubr.bf16.gmra.mxu0 %v667
    %v752 = vpop.f32.mrf.mxu0
    %v753 = vadd.f32 %v416, %v752
    %v754 = vpop.f32.mrf.mxu0
    %v755 = vadd.f32 %v420, %v754
    %v756 = vpop.f32.mrf.mxu0
    %v757 = vadd.f32 %v416, %v756
    %v758 = vpop.f32.mrf.mxu0
    %v759 = vadd.f32 %v420, %v758
    %760 = vmatprep.mubr.bf16.mxu0 0
    %761 = vmatmul.mubr.bf16.gmra.mxu0 %v670
    %v762 = vpop.f32.mrf.mxu0
    %v763 = vadd.f32 %v416, %v762
    %v764 = vpop.f32.mrf.mxu0
    %v765 = vadd.f32 %v420, %v764
    %v766 = vpop.f32.mrf.mxu0
    %v767 = vadd.f32 %v416, %v766
    %v768 = vpop.f32.mrf.mxu0
    %v769 = vadd.f32 %v420, %v768
    %770 = vmatprep.mubr.bf16.mxu0 0
    %771 = vmatmul.mubr.bf16.gmra.mxu0 %v673
    %v772 = vpop.f32.mrf.mxu0
    %v773 = vadd.f32 %v416, %v772
    %v774 = vpop.f32.mrf.mxu0
    %v775 = vadd.f32 %v420, %v774
    %v776 = vpop.f32.mrf.mxu0
    %v777 = vadd.f32 %v416, %v776
    %v778 = vpop.f32.mrf.mxu0
    %v779 = vadd.f32 %v420, %v778
    %780 = vmatprep.mubr.bf16.mxu0 0
    %781 = vmatmul.mubr.bf16.gmra.mxu0 %v676
    %v782 = vpop.f32.mrf.mxu0
    %v783 = vadd.f32 %v416, %v782
    %v784 = vpop.f32.mrf.mxu0
    %v785 = vadd.f32 %v420, %v784
    %v786 = vpop.f32.mrf.mxu0
    %v787 = vadd.f32 %v416, %v786
    %v788 = vpop.f32.mrf.mxu0
    %v789 = vadd.f32 %v420, %v788
    %790 = vdwg.mxu0
    %791 = vmatprep.subr.bf16.mxu0 0
    %792 = vmatpush1.bf16.msra.mxu0 0
    %793 = vmatprep.subr.bf16.mxu0 0
    %794 = vmatpush1.bf16.msra.mxu0 0
    %795 = vmatprep.subr.bf16.mxu0 0
    %796 = vmatpush1.bf16.msra.mxu0 0
    %797 = vmatprep.subr.bf16.mxu0 0
    %798 = vmatpush1.bf16.msra.mxu0 0
    %799 = vmatprep.subr.bf16.mxu0 %v616
    %800 = vmatpush1.bf16.msra.mxu0 %v615
    %801 = vmatprep.subr.bf16.mxu0 %v608
    %802 = vmatpush1.bf16.msra.mxu0 %v607
    %803 = vmatprep.subr.bf16.mxu0 %v600
    %804 = vmatpush1.bf16.msra.mxu0 %v599
    %805 = vmatprep.subr.bf16.mxu0 %v592
    %806 = vmatpush1.bf16.msra.mxu0 %v591
    %807 = vmatprep.subr.bf16.mxu0 0
    %808 = vmatpush2.bf16.msra.mxu0 0
    %809 = vmatprep.subr.bf16.mxu0 0
    %810 = vmatpush2.bf16.msra.mxu0 0
    %811 = vmatprep.subr.bf16.mxu0 0
    %812 = vmatpush2.bf16.msra.mxu0 0
    %813 = vmatprep.subr.bf16.mxu0 0
    %814 = vmatpush2.bf16.msra.mxu0 0
    %815 = vmatprep.subr.bf16.mxu0 0
    %816 = vmatpush2.bf16.msra.mxu0 0
    %817 = vmatprep.subr.bf16.mxu0 0
    %818 = vmatpush2.bf16.msra.mxu0 0
    %819 = vmatprep.subr.bf16.mxu0 0
    %820 = vmatpush2.bf16.msra.mxu0 0
    %821 = vmatprep.subr.bf16.mxu0 0
    %822 = vmatpush2.bf16.msra.mxu0 0
    %823 = vmatprep.mubr.bf16.mxu0 0
    %824 = vmatmul.mubr.bf16.gmra.mxu0 %v655
    %v825 = vpop.f32.mrf.mxu0
    %v826 = vadd.f32 %v424, %v825
    %v827 = vpop.f32.mrf.mxu0
    %v828 = vadd.f32 %v428, %v827
    %v829 = vpop.f32.mrf.mxu0
    %v830 = vadd.f32 %v424, %v829
    %v831 = vpop.f32.mrf.mxu0
    %v832 = vadd.f32 %v428, %v831
    %833 = vmatprep.mubr.bf16.mxu0 0
    %834 = vmatmul.mubr.bf16.gmra.mxu0 %v658
    %v835 = vpop.f32.mrf.mxu0
    %v836 = vadd.f32 %v424, %v835
    %v837 = vpop.f32.mrf.mxu0
    %v838 = vadd.f32 %v428, %v837
    %v839 = vpop.f32.mrf.mxu0
    %v840 = vadd.f32 %v424, %v839
    %v841 = vpop.f32.mrf.mxu0
    %v842 = vadd.f32 %v428, %v841
    %843 = vmatprep.mubr.bf16.mxu0 0
    %844 = vmatmul.mubr.bf16.gmra.mxu0 %v661
    %v845 = vpop.f32.mrf.mxu0
    %v846 = vadd.f32 %v424, %v845
    %v847 = vpop.f32.mrf.mxu0
    %v848 = vadd.f32 %v428, %v847
    %v849 = vpop.f32.mrf.mxu0
    %v850 = vadd.f32 %v424, %v849
    %v851 = vpop.f32.mrf.mxu0
    %v852 = vadd.f32 %v428, %v851
    %853 = vmatprep.mubr.bf16.mxu0 0
    %854 = vmatmul.mubr.bf16.gmra.mxu0 %v664
    %v855 = vpop.f32.mrf.mxu0
    %v856 = vadd.f32 %v424, %v855
    %v857 = vpop.f32.mrf.mxu0
    %v858 = vadd.f32 %v428, %v857
    %v859 = vpop.f32.mrf.mxu0
    %v860 = vadd.f32 %v424, %v859
    %v861 = vpop.f32.mrf.mxu0
    %v862 = vadd.f32 %v428, %v861
    %863 = vmatprep.mubr.bf16.mxu0 0
    %864 = vmatmul.mubr.bf16.gmra.mxu0 %v667
    %v865 = vpop.f32.mrf.mxu0
    %v866 = vadd.f32 %v424, %v865
    %v867 = vpop.f32.mrf.mxu0
    %v868 = vadd.f32 %v428, %v867
    %v869 = vpop.f32.mrf.mxu0
    %v870 = vadd.f32 %v424, %v869
    %v871 = vpop.f32.mrf.mxu0
    %v872 = vadd.f32 %v428, %v871
    %873 = vmatprep.mubr.bf16.mxu0 0
    %874 = vmatmul.mubr.bf16.gmra.mxu0 %v670
    %v875 = vpop.f32.mrf.mxu0
    %v876 = vadd.f32 %v424, %v875
    %v877 = vpop.f32.mrf.mxu0
    %v878 = vadd.f32 %v428, %v877
    %v879 = vpop.f32.mrf.mxu0
    %v880 = vadd.f32 %v424, %v879
    %v881 = vpop.f32.mrf.mxu0
    %v882 = vadd.f32 %v428, %v881
    %883 = vmatprep.mubr.bf16.mxu0 0
    %884 = vmatmul.mubr.bf16.gmra.mxu0 %v673
    %v885 = vpop.f32.mrf.mxu0
    %v886 = vadd.f32 %v424, %v885
    %v887 = vpop.f32.mrf.mxu0
    %v888 = vadd.f32 %v428, %v887
    %v889 = vpop.f32.mrf.mxu0
    %v890 = vadd.f32 %v424, %v889
    %v891 = vpop.f32.mrf.mxu0
    %v892 = vadd.f32 %v428, %v891
    %893 = vmatprep.mubr.bf16.mxu0 0
    %894 = vmatmul.mubr.bf16.gmra.mxu0 %v676
    %v895 = vpop.f32.mrf.mxu0
    %v896 = vadd.f32 %v424, %v895
    %v897 = vpop.f32.mrf.mxu0
    %v898 = vadd.f32 %v428, %v897
    %v899 = vpop.f32.mrf.mxu0
    %v900 = vadd.f32 %v424, %v899
    %v901 = vpop.f32.mrf.mxu0
    %v902 = vadd.f32 %v428, %v901
    %903 = vdwg.mxu0
    %904 = vmatprep.subr.bf16.mxu0 0
    %905 = vmatpush1.bf16.msra.mxu0 0
    %906 = vmatprep.subr.bf16.mxu0 0
    %907 = vmatpush1.bf16.msra.mxu0 0
    %908 = vmatprep.subr.bf16.mxu0 0
    %909 = vmatpush1.bf16.msra.mxu0 0
    %910 = vmatprep.subr.bf16.mxu0 0
    %911 = vmatpush1.bf16.msra.mxu0 0
    %912 = vmatprep.subr.bf16.mxu0 %v618
    %913 = vmatpush1.bf16.msra.mxu0 %v617
    %914 = vmatprep.subr.bf16.mxu0 %v610
    %915 = vmatpush1.bf16.msra.mxu0 %v609
    %916 = vmatprep.subr.bf16.mxu0 %v602
    %917 = vmatpush1.bf16.msra.mxu0 %v601
    %918 = vmatprep.subr.bf16.mxu0 %v594
    %919 = vmatpush1.bf16.msra.mxu0 %v593
    %920 = vmatprep.subr.bf16.mxu0 0
    %921 = vmatpush2.bf16.msra.mxu0 0
    %922 = vmatprep.subr.bf16.mxu0 0
    %923 = vmatpush2.bf16.msra.mxu0 0
    %924 = vmatprep.subr.bf16.mxu0 0
    %925 = vmatpush2.bf16.msra.mxu0 0
    %926 = vmatprep.subr.bf16.mxu0 0
    %927 = vmatpush2.bf16.msra.mxu0 0
    %928 = vmatprep.subr.bf16.mxu0 0
    %929 = vmatpush2.bf16.msra.mxu0 0
    %930 = vmatprep.subr.bf16.mxu0 0
    %931 = vmatpush2.bf16.msra.mxu0 0
    %932 = vmatprep.subr.bf16.mxu0 0
    %933 = vmatpush2.bf16.msra.mxu0 0
    %934 = vmatprep.subr.bf16.mxu0 0
    %935 = vmatpush2.bf16.msra.mxu0 0
    %936 = vmatprep.mubr.bf16.mxu0 0
    %937 = vmatmul.mubr.bf16.gmra.mxu0 %v655
    %v938 = vpop.f32.mrf.mxu0
    %v939 = vadd.f32 %v432, %v938
    %v940 = vpop.f32.mrf.mxu0
    %v941 = vadd.f32 %v436, %v940
    %v942 = vpop.f32.mrf.mxu0
    %v943 = vadd.f32 %v432, %v942
    %v944 = vpop.f32.mrf.mxu0
    %v945 = vadd.f32 %v436, %v944
    %946 = vmatprep.mubr.bf16.mxu0 0
    %947 = vmatmul.mubr.bf16.gmra.mxu0 %v658
    %v948 = vpop.f32.mrf.mxu0
    %v949 = vadd.f32 %v432, %v948
    %v950 = vpop.f32.mrf.mxu0
    %v951 = vadd.f32 %v436, %v950
    %v952 = vpop.f32.mrf.mxu0
    %v953 = vadd.f32 %v432, %v952
    %v954 = vpop.f32.mrf.mxu0
    %v955 = vadd.f32 %v436, %v954
    %956 = vmatprep.mubr.bf16.mxu0 0
    %957 = vmatmul.mubr.bf16.gmra.mxu0 %v661
    %v958 = vpop.f32.mrf.mxu0
    %v959 = vadd.f32 %v432, %v958
    %v960 = vpop.f32.mrf.mxu0
    %v961 = vadd.f32 %v436, %v960
    %v962 = vpop.f32.mrf.mxu0
    %v963 = vadd.f32 %v432, %v962
    %v964 = vpop.f32.mrf.mxu0
    %v965 = vadd.f32 %v436, %v964
    %966 = vmatprep.mubr.bf16.mxu0 0
    %967 = vmatmul.mubr.bf16.gmra.mxu0 %v664
    %v968 = vpop.f32.mrf.mxu0
    %v969 = vadd.f32 %v432, %v968
    %v970 = vpop.f32.mrf.mxu0
    %v971 = vadd.f32 %v436, %v970
    %v972 = vpop.f32.mrf.mxu0
    %v973 = vadd.f32 %v432, %v972
    %v974 = vpop.f32.mrf.mxu0
    %v975 = vadd.f32 %v436, %v974
    %976 = vmatprep.mubr.bf16.mxu0 0
    %977 = vmatmul.mubr.bf16.gmra.mxu0 %v667
    %v978 = vpop.f32.mrf.mxu0
    %v979 = vadd.f32 %v432, %v978
    %v980 = vpop.f32.mrf.mxu0
    %v981 = vadd.f32 %v436, %v980
    %v982 = vpop.f32.mrf.mxu0
    %v983 = vadd.f32 %v432, %v982
    %v984 = vpop.f32.mrf.mxu0
    %v985 = vadd.f32 %v436, %v984
    %986 = vmatprep.mubr.bf16.mxu0 0
    %987 = vmatmul.mubr.bf16.gmra.mxu0 %v670
    %v988 = vpop.f32.mrf.mxu0
    %v989 = vadd.f32 %v432, %v988
    %v990 = vpop.f32.mrf.mxu0
    %v991 = vadd.f32 %v436, %v990
    %v992 = vpop.f32.mrf.mxu0
    %v993 = vadd.f32 %v432, %v992
    %v994 = vpop.f32.mrf.mxu0
    %v995 = vadd.f32 %v436, %v994
    %996 = vmatprep.mubr.bf16.mxu0 0
    %997 = vmatmul.mubr.bf16.gmra.mxu0 %v673
    %v998 = vpop.f32.mrf.mxu0
    %v999 = vadd.f32 %v432, %v998
    %v1000 = vpop.f32.mrf.mxu0
    %v1001 = vadd.f32 %v436, %v1000
    %v1002 = vpop.f32.mrf.mxu0
    %v1003 = vadd.f32 %v432, %v1002
    %v1004 = vpop.f32.mrf.mxu0
    %v1005 = vadd.f32 %v436, %v1004
    %1006 = vmatprep.mubr.bf16.mxu0 0
    %1007 = vmatmul.mubr.bf16.gmra.mxu0 %v676
    %v1008 = vpop.f32.mrf.mxu0
    %v1009 = vadd.f32 %v432, %v1008
    %v1010 = vpop.f32.mrf.mxu0
    %v1011 = vadd.f32 %v436, %v1010
    %v1012 = vpop.f32.mrf.mxu0
    %v1013 = vadd.f32 %v432, %v1012
    %v1014 = vpop.f32.mrf.mxu0
    %v1015 = vadd.f32 %v436, %v1014
    %1016 = vdwg.mxu0
    %1017 = vmatprep.subr.bf16.mxu0 0
    %1018 = vmatpush1.bf16.msra.mxu0 0
    %1019 = vmatprep.subr.bf16.mxu0 0
    %1020 = vmatpush1.bf16.msra.mxu0 0
    %1021 = vmatprep.subr.bf16.mxu0 0
    %1022 = vmatpush1.bf16.msra.mxu0 0
    %1023 = vmatprep.subr.bf16.mxu0 0
    %1024 = vmatpush1.bf16.msra.mxu0 0
    %1025 = vmatprep.subr.bf16.mxu0 %v620
    %1026 = vmatpush1.bf16.msra.mxu0 %v619
    %1027 = vmatprep.subr.bf16.mxu0 %v612
    %1028 = vmatpush1.bf16.msra.mxu0 %v611
    %1029 = vmatprep.subr.bf16.mxu0 %v604
    %1030 = vmatpush1.bf16.msra.mxu0 %v603
    %1031 = vmatprep.subr.bf16.mxu0 %v596
    %1032 = vmatpush1.bf16.msra.mxu0 %v595
    %1033 = vmatprep.subr.bf16.mxu0 0
    %1034 = vmatpush2.bf16.msra.mxu0 0
    %1035 = vmatprep.subr.bf16.mxu0 0
    %1036 = vmatpush2.bf16.msra.mxu0 0
    %1037 = vmatprep.subr.bf16.mxu0 0
    %1038 = vmatpush2.bf16.msra.mxu0 0
    %1039 = vmatprep.subr.bf16.mxu0 0
    %1040 = vmatpush2.bf16.msra.mxu0 0
    %1041 = vmatprep.subr.bf16.mxu0 0
    %1042 = vmatpush2.bf16.msra.mxu0 0
    %1043 = vmatprep.subr.bf16.mxu0 0
    %1044 = vmatpush2.bf16.msra.mxu0 0
    %1045 = vmatprep.subr.bf16.mxu0 0
    %1046 = vmatpush2.bf16.msra.mxu0 0
    %1047 = vmatprep.subr.bf16.mxu0 0
    %1048 = vmatpush2.bf16.msra.mxu0 0
    %1049 = vmatprep.mubr.bf16.mxu0 0
    %1050 = vmatmul.mubr.bf16.gmra.mxu0 %v655
    %v1051 = vpop.f32.mrf.mxu0
    %v1052 = vadd.f32 %v440, %v1051
    %v1053 = vpop.f32.mrf.mxu0
    %v1054 = vadd.f32 %v444, %v1053
    %v1055 = vpop.f32.mrf.mxu0
    %v1056 = vadd.f32 %v440, %v1055
    %v1057 = vpop.f32.mrf.mxu0
    %v1058 = vadd.f32 %v444, %v1057
    %1059 = vmatprep.mubr.bf16.mxu0 0
    %1060 = vmatmul.mubr.bf16.gmra.mxu0 %v658
    %v1061 = vpop.f32.mrf.mxu0
    %v1062 = vadd.f32 %v440, %v1061
    %v1063 = vpop.f32.mrf.mxu0
    %v1064 = vadd.f32 %v444, %v1063
    %v1065 = vpop.f32.mrf.mxu0
    %v1066 = vadd.f32 %v440, %v1065
    %v1067 = vpop.f32.mrf.mxu0
    %v1068 = vadd.f32 %v444, %v1067
    %1069 = vmatprep.mubr.bf16.mxu0 0
    %1070 = vmatmul.mubr.bf16.gmra.mxu0 %v661
    %v1071 = vpop.f32.mrf.mxu0
    %v1072 = vadd.f32 %v440, %v1071
    %v1073 = vpop.f32.mrf.mxu0
    %v1074 = vadd.f32 %v444, %v1073
    %v1075 = vpop.f32.mrf.mxu0
    %v1076 = vadd.f32 %v440, %v1075
    %v1077 = vpop.f32.mrf.mxu0
    %v1078 = vadd.f32 %v444, %v1077
    %1079 = vmatprep.mubr.bf16.mxu0 0
    %1080 = vmatmul.mubr.bf16.gmra.mxu0 %v664
    %v1081 = vpop.f32.mrf.mxu0
    %v1082 = vadd.f32 %v440, %v1081
    %v1083 = vpop.f32.mrf.mxu0
    %v1084 = vadd.f32 %v444, %v1083
    %v1085 = vpop.f32.mrf.mxu0
    %v1086 = vadd.f32 %v440, %v1085
    %v1087 = vpop.f32.mrf.mxu0
    %v1088 = vadd.f32 %v444, %v1087
    %1089 = vmatprep.mubr.bf16.mxu0 0
    %1090 = vmatmul.mubr.bf16.gmra.mxu0 %v667
    %v1091 = vpop.f32.mrf.mxu0
    %v1092 = vadd.f32 %v440, %v1091
    %v1093 = vpop.f32.mrf.mxu0
    %v1094 = vadd.f32 %v444, %v1093
    %v1095 = vpop.f32.mrf.mxu0
    %v1096 = vadd.f32 %v440, %v1095
    %v1097 = vpop.f32.mrf.mxu0
    %v1098 = vadd.f32 %v444, %v1097
    %1099 = vmatprep.mubr.bf16.mxu0 0
    %1100 = vmatmul.mubr.bf16.gmra.mxu0 %v670
    %v1101 = vpop.f32.mrf.mxu0
    %v1102 = vadd.f32 %v440, %v1101
    %v1103 = vpop.f32.mrf.mxu0
    %v1104 = vadd.f32 %v444, %v1103
    %v1105 = vpop.f32.mrf.mxu0
    %v1106 = vadd.f32 %v440, %v1105
    %v1107 = vpop.f32.mrf.mxu0
    %v1108 = vadd.f32 %v444, %v1107
    %1109 = vmatprep.mubr.bf16.mxu0 0
    %1110 = vmatmul.mubr.bf16.gmra.mxu0 %v673
    %v1111 = vpop.f32.mrf.mxu0
    %v1112 = vadd.f32 %v440, %v1111
    %v1113 = vpop.f32.mrf.mxu0
    %v1114 = vadd.f32 %v444, %v1113
    %v1115 = vpop.f32.mrf.mxu0
    %v1116 = vadd.f32 %v440, %v1115
    %v1117 = vpop.f32.mrf.mxu0
    %v1118 = vadd.f32 %v444, %v1117
    %1119 = vmatprep.mubr.bf16.mxu0 0
    %1120 = vmatmul.mubr.bf16.gmra.mxu0 %v676
    %v1121 = vpop.f32.mrf.mxu0
    %v1122 = vadd.f32 %v440, %v1121
    %v1123 = vpop.f32.mrf.mxu0
    %v1124 = vadd.f32 %v444, %v1123
    %v1125 = vpop.f32.mrf.mxu0
    %v1126 = vadd.f32 %v440, %v1125
    %v1127 = vpop.f32.mrf.mxu0
    %v1128 = vadd.f32 %v444, %v1127
    %1129 = vdwg.mxu0
    %v1130 = vmax.f32 %v713, 0.0
    %v1131 = vmax.f32 %v715, 0.0
    %v1132 = vmax.f32 %v826, 0.0
    %v1133 = vmax.f32 %v828, 0.0
    %v1134 = vmax.f32 %v939, 0.0
    %v1135 = vmax.f32 %v941, 0.0
    %v1136 = vmax.f32 %v1052, 0.0
    %v1137 = vmax.f32 %v1054, 0.0
    %v1138 = vmax.f32 %v717, 0.0
    %v1139 = vmax.f32 %v719, 0.0
    %v1140 = vmax.f32 %v830, 0.0
    %v1141 = vmax.f32 %v832, 0.0
    %v1142 = vmax.f32 %v943, 0.0
    %v1143 = vmax.f32 %v945, 0.0
    %v1144 = vmax.f32 %v1056, 0.0
    %v1145 = vmax.f32 %v1058, 0.0
    %v1146 = vmax.f32 %v723, 0.0
    %v1147 = vmax.f32 %v725, 0.0
    %v1148 = vmax.f32 %v836, 0.0
    %v1149 = vmax.f32 %v838, 0.0
    %v1150 = vmax.f32 %v949, 0.0
    %v1151 = vmax.f32 %v951, 0.0
    %v1152 = vmax.f32 %v1062, 0.0
    %v1153 = vmax.f32 %v1064, 0.0
    %v1154 = vmax.f32 %v727, 0.0
    %v1155 = vmax.f32 %v729, 0.0
    %v1156 = vmax.f32 %v840, 0.0
    %v1157 = vmax.f32 %v842, 0.0
    %v1158 = vmax.f32 %v953, 0.0
    %v1159 = vmax.f32 %v955, 0.0
    %v1160 = vmax.f32 %v1066, 0.0
    %v1161 = vmax.f32 %v1068, 0.0
    %v1162 = vmax.f32 %v733, 0.0
    %v1163 = vmax.f32 %v735, 0.0
    %v1164 = vmax.f32 %v846, 0.0
    %v1165 = vmax.f32 %v848, 0.0
    %v1166 = vmax.f32 %v959, 0.0
    %v1167 = vmax.f32 %v961, 0.0
    %v1168 = vmax.f32 %v1072, 0.0
    %v1169 = vmax.f32 %v1074, 0.0
    %v1170 = vmax.f32 %v737, 0.0
    %v1171 = vmax.f32 %v739, 0.0
    %v1172 = vmax.f32 %v850, 0.0
    %v1173 = vmax.f32 %v852, 0.0
    %v1174 = vmax.f32 %v963, 0.0
    %v1175 = vmax.f32 %v965, 0.0
    %v1176 = vmax.f32 %v1076, 0.0
    %v1177 = vmax.f32 %v1078, 0.0
    %v1178 = vmax.f32 %v743, 0.0
    %v1179 = vmax.f32 %v745, 0.0
    %v1180 = vmax.f32 %v856, 0.0
    %v1181 = vmax.f32 %v858, 0.0
    %v1182 = vmax.f32 %v969, 0.0
    %v1183 = vmax.f32 %v971, 0.0
    %v1184 = vmax.f32 %v1082, 0.0
    %v1185 = vmax.f32 %v1084, 0.0
    %v1186 = vmax.f32 %v747, 0.0
    %v1187 = vmax.f32 %v749, 0.0
    %v1188 = vmax.f32 %v860, 0.0
    %v1189 = vmax.f32 %v862, 0.0
    %v1190 = vmax.f32 %v973, 0.0
    %v1191 = vmax.f32 %v975, 0.0
    %v1192 = vmax.f32 %v1086, 0.0
    %v1193 = vmax.f32 %v1088, 0.0
    %v1194 = vmax.f32 %v753, 0.0
    %v1195 = vmax.f32 %v755, 0.0
    %v1196 = vmax.f32 %v866, 0.0
    %v1197 = vmax.f32 %v868, 0.0
    %v1198 = vmax.f32 %v979, 0.0
    %v1199 = vmax.f32 %v981, 0.0
    %v1200 = vmax.f32 %v1092, 0.0
    %v1201 = vmax.f32 %v1094, 0.0
    %v1202 = vmax.f32 %v757, 0.0
    %v1203 = vmax.f32 %v759, 0.0
    %v1204 = vmax.f32 %v870, 0.0
    %v1205 = vmax.f32 %v872, 0.0
    %v1206 = vmax.f32 %v983, 0.0
    %v1207 = vmax.f32 %v985, 0.0
    %v1208 = vmax.f32 %v1096, 0.0
    %v1209 = vmax.f32 %v1098, 0.0
    %v1210 = vmax.f32 %v763, 0.0
    %v1211 = vmax.f32 %v765, 0.0
    %v1212 = vmax.f32 %v876, 0.0
    %v1213 = vmax.f32 %v878, 0.0
    %v1214 = vmax.f32 %v989, 0.0
    %v1215 = vmax.f32 %v991, 0.0
    %v1216 = vmax.f32 %v1102, 0.0
    %v1217 = vmax.f32 %v1104, 0.0
    %v1218 = vmax.f32 %v767, 0.0
    %v1219 = vmax.f32 %v769, 0.0
    %v1220 = vmax.f32 %v880, 0.0
    %v1221 = vmax.f32 %v882, 0.0
    %v1222 = vmax.f32 %v993, 0.0
    %v1223 = vmax.f32 %v995, 0.0
    %v1224 = vmax.f32 %v1106, 0.0
    %v1225 = vmax.f32 %v1108, 0.0
    %v1226 = vmax.f32 %v773, 0.0
    %v1227 = vmax.f32 %v775, 0.0
    %v1228 = vmax.f32 %v886, 0.0
    %v1229 = vmax.f32 %v888, 0.0
    %v1230 = vmax.f32 %v999, 0.0
    %v1231 = vmax.f32 %v1001, 0.0
    %v1232 = vmax.f32 %v1112, 0.0
    %v1233 = vmax.f32 %v1114, 0.0
    %v1234 = vmax.f32 %v777, 0.0
    %v1235 = vmax.f32 %v779, 0.0
    %v1236 = vmax.f32 %v890, 0.0
    %v1237 = vmax.f32 %v892, 0.0
    %v1238 = vmax.f32 %v1003, 0.0
    %v1239 = vmax.f32 %v1005, 0.0
    %v1240 = vmax.f32 %v1116, 0.0
    %v1241 = vmax.f32 %v1118, 0.0
    %v1242 = vmax.f32 %v783, 0.0
    %v1243 = vmax.f32 %v785, 0.0
    %v1244 = vmax.f32 %v896, 0.0
    %v1245 = vmax.f32 %v898, 0.0
    %v1246 = vmax.f32 %v1009, 0.0
    %v1247 = vmax.f32 %v1011, 0.0
    %v1248 = vmax.f32 %v1122, 0.0
    %v1249 = vmax.f32 %v1124, 0.0
    %v1250 = vmax.f32 %v787, 0.0
    %v1251 = vmax.f32 %v789, 0.0
    %v1252 = vmax.f32 %v900, 0.0
    %v1253 = vmax.f32 %v902, 0.0
    %v1254 = vmax.f32 %v1013, 0.0
    %v1255 = vmax.f32 %v1015, 0.0
    %v1256 = vmax.f32 %v1126, 0.0
    %v1257 = vmax.f32 %v1128, 0.0
    %v1258 = vpack.c.bf16 %v1138, %v1130
    %v1259 = vpack.c.bf16 %v1139, %v1131
    %v1260 = vpack.c.bf16 %v1140, %v1132
    %v1261 = vpack.c.bf16 %v1141, %v1133
    %v1262 = vpack.c.bf16 %v1142, %v1134
    %v1263 = vpack.c.bf16 %v1143, %v1135
    %v1264 = vpack.c.bf16 %v1144, %v1136
    %v1265 = vpack.c.bf16 %v1145, %v1137
    %v1266 = vpack.c.bf16 %v1154, %v1146
    %v1267 = vpack.c.bf16 %v1155, %v1147
    %v1268 = vpack.c.bf16 %v1156, %v1148
    %v1269 = vpack.c.bf16 %v1157, %v1149
    %v1270 = vpack.c.bf16 %v1158, %v1150
    %v1271 = vpack.c.bf16 %v1159, %v1151
    %v1272 = vpack.c.bf16 %v1160, %v1152
    %v1273 = vpack.c.bf16 %v1161, %v1153
    %v1274 = vpack.c.bf16 %v1170, %v1162
    %v1275 = vpack.c.bf16 %v1171, %v1163
    %v1276 = vpack.c.bf16 %v1172, %v1164
    %v1277 = vpack.c.bf16 %v1173, %v1165
    %v1278 = vpack.c.bf16 %v1174, %v1166
    %v1279 = vpack.c.bf16 %v1175, %v1167
    %v1280 = vpack.c.bf16 %v1176, %v1168
    %v1281 = vpack.c.bf16 %v1177, %v1169
    %v1282 = vpack.c.bf16 %v1186, %v1178
    %v1283 = vpack.c.bf16 %v1187, %v1179
    %v1284 = vpack.c.bf16 %v1188, %v1180
    %v1285 = vpack.c.bf16 %v1189, %v1181
    %v1286 = vpack.c.bf16 %v1190, %v1182
    %v1287 = vpack.c.bf16 %v1191, %v1183
    %v1288 = vpack.c.bf16 %v1192, %v1184
    %v1289 = vpack.c.bf16 %v1193, %v1185
    %v1290 = vpack.c.bf16 %v1202, %v1194
    %v1291 = vpack.c.bf16 %v1203, %v1195
    %v1292 = vpack.c.bf16 %v1204, %v1196
    %v1293 = vpack.c.bf16 %v1205, %v1197
    %v1294 = vpack.c.bf16 %v1206, %v1198
    %v1295 = vpack.c.bf16 %v1207, %v1199
    %v1296 = vpack.c.bf16 %v1208, %v1200
    %v1297 = vpack.c.bf16 %v1209, %v1201
    %v1298 = vpack.c.bf16 %v1218, %v1210
    %v1299 = vpack.c.bf16 %v1219, %v1211
    %v1300 = vpack.c.bf16 %v1220, %v1212
    %v1301 = vpack.c.bf16 %v1221, %v1213
    %v1302 = vpack.c.bf16 %v1222, %v1214
    %v1303 = vpack.c.bf16 %v1223, %v1215
    %v1304 = vpack.c.bf16 %v1224, %v1216
    %v1305 = vpack.c.bf16 %v1225, %v1217
    %v1306 = vpack.c.bf16 %v1234, %v1226
    %v1307 = vpack.c.bf16 %v1235, %v1227
    %v1308 = vpack.c.bf16 %v1236, %v1228
    %v1309 = vpack.c.bf16 %v1237, %v1229
    %v1310 = vpack.c.bf16 %v1238, %v1230
    %v1311 = vpack.c.bf16 %v1239, %v1231
    %v1312 = vpack.c.bf16 %v1240, %v1232
    %v1313 = vpack.c.bf16 %v1241, %v1233
    %v1314 = vpack.c.bf16 %v1250, %v1242
    %v1315 = vpack.c.bf16 %v1251, %v1243
    %v1316 = vpack.c.bf16 %v1252, %v1244
    %v1317 = vpack.c.bf16 %v1253, %v1245
    %v1318 = vpack.c.bf16 %v1254, %v1246
    %v1319 = vpack.c.bf16 %v1255, %v1247
    %v1320 = vpack.c.bf16 %v1256, %v1248
    %v1321 = vpack.c.bf16 %v1257, %v1249
    %v1322 = vld [vmem:[#allocation9] sm:$0xff]
    %v1323 = vld [vmem:[#allocation9 + $0x8] sm:$0xff]
    %v1324 = vld [vmem:[#allocation9 + $0x10] sm:$0xff]
    %v1325 = vld [vmem:[#allocation9 + $0x18] sm:$0xff]
    %v1326 = vld [vmem:[#allocation9 + $0x20] sm:$0xff]
    %v1327 = vld [vmem:[#allocation9 + $0x28] sm:$0xff]
    %v1328 = vld [vmem:[#allocation9 + $0x30] sm:$0xff]
    %v1329 = vld [vmem:[#allocation9 + $0x38] sm:$0xff]
    %v1330 = vld [vmem:[#allocation9 + $0x40] sm:$0xff]
    %v1331 = vld [vmem:[#allocation9 + $0x48] sm:$0xff]
    %v1332 = vld [vmem:[#allocation9 + $0x50] sm:$0xff]
    %v1333 = vld [vmem:[#allocation9 + $0x58] sm:$0xff]
    %v1334 = vld [vmem:[#allocation9 + $0x60] sm:$0xff]
    %v1335 = vld [vmem:[#allocation9 + $0x68] sm:$0xff]
    %v1336 = vld [vmem:[#allocation9 + $0x70] sm:$0xff]
    %v1337 = vld [vmem:[#allocation9 + $0x78] sm:$0xff]
    %v1338 = vld [vmem:[#allocation9 + $0x80] sm:$0xff]
    %v1339 = vld [vmem:[#allocation9 + $0x88] sm:$0xff]
    %v1340 = vld [vmem:[#allocation9 + $0x90] sm:$0xff]
    %v1341 = vld [vmem:[#allocation9 + $0x98] sm:$0xff]
    %v1342 = vld [vmem:[#allocation9 + $0xa0] sm:$0xff]
    %v1343 = vld [vmem:[#allocation9 + $0xa8] sm:$0xff]
    %v1344 = vld [vmem:[#allocation9 + $0xb0] sm:$0xff]
    %v1345 = vld [vmem:[#allocation9 + $0xb8] sm:$0xff]
    %v1346 = vld [vmem:[#allocation9 + $0xc0] sm:$0xff]
    %v1347 = vld [vmem:[#allocation9 + $0xc8] sm:$0xff]
    %v1348 = vld [vmem:[#allocation9 + $0xd0] sm:$0xff]
    %v1349 = vld [vmem:[#allocation9 + $0xd8] sm:$0xff]
    %v1350 = vld [vmem:[#allocation9 + $0xe0] sm:$0xff]
    %v1351 = vld [vmem:[#allocation9 + $0xe8] sm:$0xff]
    %v1352 = vld [vmem:[#allocation9 + $0xf0] sm:$0xff]
    %v1353 = vld [vmem:[#allocation9 + $0xf8] sm:$0xff]
    %v1354 = vld [vmem:[#allocation9 + $0x100] sm:$0xff]
    %v1355 = vld [vmem:[#allocation9 + $0x108] sm:$0xff]
    %v1356 = vld [vmem:[#allocation9 + $0x110] sm:$0xff]
    %v1357 = vld [vmem:[#allocation9 + $0x118] sm:$0xff]
    %v1358 = vld [vmem:[#allocation9 + $0x120] sm:$0xff]
    %v1359 = vld [vmem:[#allocation9 + $0x128] sm:$0xff]
    %v1360 = vld [vmem:[#allocation9 + $0x130] sm:$0xff]
    %v1361 = vld [vmem:[#allocation9 + $0x138] sm:$0xff]
    %v1362 = vld [vmem:[#allocation9 + $0x140] sm:$0xff]
    %v1363 = vld [vmem:[#allocation9 + $0x148] sm:$0xff]
    %v1364 = vld [vmem:[#allocation9 + $0x150] sm:$0xff]
    %v1365 = vld [vmem:[#allocation9 + $0x158] sm:$0xff]
    %v1366 = vld [vmem:[#allocation9 + $0x160] sm:$0xff]
    %v1367 = vld [vmem:[#allocation9 + $0x168] sm:$0xff]
    %v1368 = vld [vmem:[#allocation9 + $0x170] sm:$0xff]
    %v1369 = vld [vmem:[#allocation9 + $0x178] sm:$0xff]
    %v1370 = vld [vmem:[#allocation9 + $0x180] sm:$0xff]
    %v1371 = vld [vmem:[#allocation9 + $0x188] sm:$0xff]
    %v1372 = vld [vmem:[#allocation9 + $0x190] sm:$0xff]
    %v1373 = vld [vmem:[#allocation9 + $0x198] sm:$0xff]
    %v1374 = vld [vmem:[#allocation9 + $0x1a0] sm:$0xff]
    %v1375 = vld [vmem:[#allocation9 + $0x1a8] sm:$0xff]
    %v1376 = vld [vmem:[#allocation9 + $0x1b0] sm:$0xff]
    %v1377 = vld [vmem:[#allocation9 + $0x1b8] sm:$0xff]
    %v1378 = vld [vmem:[#allocation9 + $0x1c0] sm:$0xff]
    %v1379 = vld [vmem:[#allocation9 + $0x1c8] sm:$0xff]
    %v1380 = vld [vmem:[#allocation9 + $0x1d0] sm:$0xff]
    %v1381 = vld [vmem:[#allocation9 + $0x1d8] sm:$0xff]
    %v1382 = vld [vmem:[#allocation9 + $0x1e0] sm:$0xff]
    %v1383 = vld [vmem:[#allocation9 + $0x1e8] sm:$0xff]
    %v1384 = vld [vmem:[#allocation9 + $0x1f0] sm:$0xff]
    %v1385 = vld [vmem:[#allocation9 + $0x1f8] sm:$0xff]
    %v1386 = vld [vmem:[#allocation9 + $0x200] sm:$0xff]
    %v1387 = vld [vmem:[#allocation9 + $0x208] sm:$0xff]
    %v1388 = vld [vmem:[#allocation9 + $0x210] sm:$0xff]
    %v1389 = vld [vmem:[#allocation9 + $0x218] sm:$0xff]
    %v1390 = vld [vmem:[#allocation9 + $0x220] sm:$0xff]
    %v1391 = vld [vmem:[#allocation9 + $0x228] sm:$0xff]
    %v1392 = vld [vmem:[#allocation9 + $0x230] sm:$0xff]
    %v1393 = vld [vmem:[#allocation9 + $0x238] sm:$0xff]
    %v1394 = vld [vmem:[#allocation9 + $0x240] sm:$0xff]
    %v1395 = vld [vmem:[#allocation9 + $0x248] sm:$0xff]
    %v1396 = vld [vmem:[#allocation9 + $0x250] sm:$0xff]
    %v1397 = vld [vmem:[#allocation9 + $0x258] sm:$0xff]
    %v1398 = vld [vmem:[#allocation9 + $0x260] sm:$0xff]
    %v1399 = vld [vmem:[#allocation9 + $0x268] sm:$0xff]
    %v1400 = vld [vmem:[#allocation9 + $0x270] sm:$0xff]
    %v1401 = vld [vmem:[#allocation9 + $0x278] sm:$0xff]
    %v1402 = vld [vmem:[#allocation9 + $0x280] sm:$0xff]
    %v1403 = vld [vmem:[#allocation9 + $0x288] sm:$0xff]
    %v1404 = vld [vmem:[#allocation9 + $0x290] sm:$0xff]
    %v1405 = vld [vmem:[#allocation9 + $0x298] sm:$0xff]
    %v1406 = vld [vmem:[#allocation9 + $0x2a0] sm:$0xff]
    %v1407 = vld [vmem:[#allocation9 + $0x2a8] sm:$0xff]
    %v1408 = vld [vmem:[#allocation9 + $0x2b0] sm:$0xff]
    %v1409 = vld [vmem:[#allocation9 + $0x2b8] sm:$0xff]
    %v1410 = vld [vmem:[#allocation9 + $0x2c0] sm:$0xff]
    %v1411 = vld [vmem:[#allocation9 + $0x2c8] sm:$0xff]
    %v1412 = vld [vmem:[#allocation9 + $0x2d0] sm:$0xff]
    %v1413 = vld [vmem:[#allocation9 + $0x2d8] sm:$0xff]
    %v1414 = vld [vmem:[#allocation9 + $0x2e0] sm:$0xff]
    %v1415 = vld [vmem:[#allocation9 + $0x2e8] sm:$0xff]
    %v1416 = vld [vmem:[#allocation9 + $0x2f0] sm:$0xff]
    %v1417 = vld [vmem:[#allocation9 + $0x2f8] sm:$0xff]
    %v1418 = vld [vmem:[#allocation9 + $0x300] sm:$0xff]
    %v1419 = vld [vmem:[#allocation9 + $0x308] sm:$0xff]
    %v1420 = vld [vmem:[#allocation9 + $0x310] sm:$0xff]
    %v1421 = vld [vmem:[#allocation9 + $0x318] sm:$0xff]
    %v1422 = vld [vmem:[#allocation9 + $0x320] sm:$0xff]
    %v1423 = vld [vmem:[#allocation9 + $0x328] sm:$0xff]
    %v1424 = vld [vmem:[#allocation9 + $0x330] sm:$0xff]
    %v1425 = vld [vmem:[#allocation9 + $0x338] sm:$0xff]
    %v1426 = vld [vmem:[#allocation9 + $0x340] sm:$0xff]
    %v1427 = vld [vmem:[#allocation9 + $0x348] sm:$0xff]
    %v1428 = vld [vmem:[#allocation9 + $0x350] sm:$0xff]
    %v1429 = vld [vmem:[#allocation9 + $0x358] sm:$0xff]
    %v1430 = vld [vmem:[#allocation9 + $0x360] sm:$0xff]
    %v1431 = vld [vmem:[#allocation9 + $0x368] sm:$0xff]
    %v1432 = vld [vmem:[#allocation9 + $0x370] sm:$0xff]
    %v1433 = vld [vmem:[#allocation9 + $0x378] sm:$0xff]
    %v1434 = vld [vmem:[#allocation9 + $0x380] sm:$0xff]
    %v1435 = vld [vmem:[#allocation9 + $0x388] sm:$0xff]
    %v1436 = vld [vmem:[#allocation9 + $0x390] sm:$0xff]
    %v1437 = vld [vmem:[#allocation9 + $0x398] sm:$0xff]
    %v1438 = vld [vmem:[#allocation9 + $0x3a0] sm:$0xff]
    %v1439 = vld [vmem:[#allocation9 + $0x3a8] sm:$0xff]
    %v1440 = vld [vmem:[#allocation9 + $0x3b0] sm:$0xff]
    %v1441 = vld [vmem:[#allocation9 + $0x3b8] sm:$0xff]
    %v1442 = vld [vmem:[#allocation9 + $0x3c0] sm:$0xff]
    %v1443 = vld [vmem:[#allocation9 + $0x3c8] sm:$0xff]
    %v1444 = vld [vmem:[#allocation9 + $0x3d0] sm:$0xff]
    %v1445 = vld [vmem:[#allocation9 + $0x3d8] sm:$0xff]
    %v1446 = vld [vmem:[#allocation9 + $0x3e0] sm:$0xff]
    %v1447 = vld [vmem:[#allocation9 + $0x3e8] sm:$0xff]
    %v1448 = vld [vmem:[#allocation9 + $0x3f0] sm:$0xff]
    %v1449 = vld [vmem:[#allocation9 + $0x3f8] sm:$0xff]
    %v1450 = vld [vmem:[#allocation11] sm:$0x3]
    %v1452 = vlaneseq
    %v1453 = vshrl.u32 %v1452, 7
    %v1454 = vsub.s32 0, %v1453
    %v1455 = vrot.slane %v1450, %v1454
    %v1456 = vlaneseq
    %v1457 = vshrl.u32 %v1456, 7
    %v1458 = vsub.s32 1, %v1457
    %v1459 = vrot.slane %v1450, %v1458
    %v1590 = vunpack.c.l.b16 %v1322
    %v1591 = vunpack.c.h.b16 %v1322
    %v1592 = vunpack.c.l.b16 %v1323
    %v1593 = vunpack.c.h.b16 %v1323
    %v1594 = vunpack.c.l.b16 %v1324
    %v1595 = vunpack.c.h.b16 %v1324
    %v1596 = vunpack.c.l.b16 %v1325
    %v1597 = vunpack.c.h.b16 %v1325
    %v1598 = vunpack.c.l.b16 %v1326
    %v1599 = vunpack.c.h.b16 %v1326
    %v1600 = vunpack.c.l.b16 %v1327
    %v1601 = vunpack.c.h.b16 %v1327
    %v1602 = vunpack.c.l.b16 %v1328
    %v1603 = vunpack.c.h.b16 %v1328
    %v1604 = vunpack.c.l.b16 %v1329
    %v1605 = vunpack.c.h.b16 %v1329
    %v1606 = vunpack.c.l.b16 %v1330
    %v1607 = vunpack.c.h.b16 %v1330
    %v1608 = vunpack.c.l.b16 %v1331
    %v1609 = vunpack.c.h.b16 %v1331
    %v1610 = vunpack.c.l.b16 %v1332
    %v1611 = vunpack.c.h.b16 %v1332
    %v1612 = vunpack.c.l.b16 %v1333
    %v1613 = vunpack.c.h.b16 %v1333
    %v1614 = vunpack.c.l.b16 %v1334
    %v1615 = vunpack.c.h.b16 %v1334
    %v1616 = vunpack.c.l.b16 %v1335
    %v1617 = vunpack.c.h.b16 %v1335
    %v1618 = vunpack.c.l.b16 %v1336
    %v1619 = vunpack.c.h.b16 %v1336
    %v1620 = vunpack.c.l.b16 %v1337
    %v1621 = vunpack.c.h.b16 %v1337
    %v1622 = vunpack.c.l.b16 %v1338
    %v1623 = vunpack.c.h.b16 %v1338
    %v1624 = vunpack.c.l.b16 %v1339
    %v1625 = vunpack.c.h.b16 %v1339
    %v1626 = vunpack.c.l.b16 %v1340
    %v1627 = vunpack.c.h.b16 %v1340
    %v1628 = vunpack.c.l.b16 %v1341
    %v1629 = vunpack.c.h.b16 %v1341
    %v1630 = vunpack.c.l.b16 %v1342
    %v1631 = vunpack.c.h.b16 %v1342
    %v1632 = vunpack.c.l.b16 %v1343
    %v1633 = vunpack.c.h.b16 %v1343
    %v1634 = vunpack.c.l.b16 %v1344
    %v1635 = vunpack.c.h.b16 %v1344
    %v1636 = vunpack.c.l.b16 %v1345
    %v1637 = vunpack.c.h.b16 %v1345
    %v1638 = vunpack.c.l.b16 %v1346
    %v1639 = vunpack.c.h.b16 %v1346
    %v1640 = vunpack.c.l.b16 %v1347
    %v1641 = vunpack.c.h.b16 %v1347
    %v1642 = vunpack.c.l.b16 %v1348
    %v1643 = vunpack.c.h.b16 %v1348
    %v1644 = vunpack.c.l.b16 %v1349
    %v1645 = vunpack.c.h.b16 %v1349
    %v1646 = vunpack.c.l.b16 %v1350
    %v1647 = vunpack.c.h.b16 %v1350
    %v1648 = vunpack.c.l.b16 %v1351
    %v1649 = vunpack.c.h.b16 %v1351
    %v1650 = vunpack.c.l.b16 %v1352
    %v1651 = vunpack.c.h.b16 %v1352
    %v1652 = vunpack.c.l.b16 %v1353
    %v1653 = vunpack.c.h.b16 %v1353
    %v1654 = vunpack.c.l.b16 %v1354
    %v1655 = vunpack.c.h.b16 %v1354
    %v1656 = vunpack.c.l.b16 %v1355
    %v1657 = vunpack.c.h.b16 %v1355
    %v1658 = vunpack.c.l.b16 %v1356
    %v1659 = vunpack.c.h.b16 %v1356
    %v1660 = vunpack.c.l.b16 %v1357
    %v1661 = vunpack.c.h.b16 %v1357
    %v1662 = vunpack.c.l.b16 %v1358
    %v1663 = vunpack.c.h.b16 %v1358
    %v1664 = vunpack.c.l.b16 %v1359
    %v1665 = vunpack.c.h.b16 %v1359
    %v1666 = vunpack.c.l.b16 %v1360
    %v1667 = vunpack.c.h.b16 %v1360
    %v1668 = vunpack.c.l.b16 %v1361
    %v1669 = vunpack.c.h.b16 %v1361
    %v1670 = vunpack.c.l.b16 %v1362
    %v1671 = vunpack.c.h.b16 %v1362
    %v1672 = vunpack.c.l.b16 %v1363
    %v1673 = vunpack.c.h.b16 %v1363
    %v1674 = vunpack.c.l.b16 %v1364
    %v1675 = vunpack.c.h.b16 %v1364
    %v1676 = vunpack.c.l.b16 %v1365
    %v1677 = vunpack.c.h.b16 %v1365
    %v1678 = vunpack.c.l.b16 %v1366
    %v1679 = vunpack.c.h.b16 %v1366
    %v1680 = vunpack.c.l.b16 %v1367
    %v1681 = vunpack.c.h.b16 %v1367
    %v1682 = vunpack.c.l.b16 %v1368
    %v1683 = vunpack.c.h.b16 %v1368
    %v1684 = vunpack.c.l.b16 %v1369
    %v1685 = vunpack.c.h.b16 %v1369
    %v1686 = vunpack.c.l.b16 %v1370
    %v1687 = vunpack.c.h.b16 %v1370
    %v1688 = vunpack.c.l.b16 %v1371
    %v1689 = vunpack.c.h.b16 %v1371
    %v1690 = vunpack.c.l.b16 %v1372
    %v1691 = vunpack.c.h.b16 %v1372
    %v1692 = vunpack.c.l.b16 %v1373
    %v1693 = vunpack.c.h.b16 %v1373
    %v1694 = vunpack.c.l.b16 %v1374
    %v1695 = vunpack.c.h.b16 %v1374
    %v1696 = vunpack.c.l.b16 %v1375
    %v1697 = vunpack.c.h.b16 %v1375
    %v1698 = vunpack.c.l.b16 %v1376
    %v1699 = vunpack.c.h.b16 %v1376
    %v1700 = vunpack.c.l.b16 %v1377
    %v1701 = vunpack.c.h.b16 %v1377
    %v1702 = vunpack.c.l.b16 %v1378
    %v1703 = vunpack.c.h.b16 %v1378
    %v1704 = vunpack.c.l.b16 %v1379
    %v1705 = vunpack.c.h.b16 %v1379
    %v1706 = vunpack.c.l.b16 %v1380
    %v1707 = vunpack.c.h.b16 %v1380
    %v1708 = vunpack.c.l.b16 %v1381
    %v1709 = vunpack.c.h.b16 %v1381
    %v1710 = vunpack.c.l.b16 %v1382
    %v1711 = vunpack.c.h.b16 %v1382
    %v1712 = vunpack.c.l.b16 %v1383
    %v1713 = vunpack.c.h.b16 %v1383
    %v1714 = vunpack.c.l.b16 %v1384
    %v1715 = vunpack.c.h.b16 %v1384
    %v1716 = vunpack.c.l.b16 %v1385
    %v1717 = vunpack.c.h.b16 %v1385
    %v1718 = vunpack.c.l.b16 %v1386
    %v1719 = vunpack.c.h.b16 %v1386
    %v1720 = vunpack.c.l.b16 %v1387
    %v1721 = vunpack.c.h.b16 %v1387
    %v1722 = vunpack.c.l.b16 %v1388
    %v1723 = vunpack.c.h.b16 %v1388
    %v1724 = vunpack.c.l.b16 %v1389
    %v1725 = vunpack.c.h.b16 %v1389
    %v1726 = vunpack.c.l.b16 %v1390
    %v1727 = vunpack.c.h.b16 %v1390
    %v1728 = vunpack.c.l.b16 %v1391
    %v1729 = vunpack.c.h.b16 %v1391
    %v1730 = vunpack.c.l.b16 %v1392
    %v1731 = vunpack.c.h.b16 %v1392
    %v1732 = vunpack.c.l.b16 %v1393
    %v1733 = vunpack.c.h.b16 %v1393
    %v1734 = vunpack.c.l.b16 %v1394
    %v1735 = vunpack.c.h.b16 %v1394
    %v1736 = vunpack.c.l.b16 %v1395
    %v1737 = vunpack.c.h.b16 %v1395
    %v1738 = vunpack.c.l.b16 %v1396
    %v1739 = vunpack.c.h.b16 %v1396
    %v1740 = vunpack.c.l.b16 %v1397
    %v1741 = vunpack.c.h.b16 %v1397
    %v1742 = vunpack.c.l.b16 %v1398
    %v1743 = vunpack.c.h.b16 %v1398
    %v1744 = vunpack.c.l.b16 %v1399
    %v1745 = vunpack.c.h.b16 %v1399
    %v1746 = vunpack.c.l.b16 %v1400
    %v1747 = vunpack.c.h.b16 %v1400
    %v1748 = vunpack.c.l.b16 %v1401
    %v1749 = vunpack.c.h.b16 %v1401
    %v1750 = vunpack.c.l.b16 %v1402
    %v1751 = vunpack.c.h.b16 %v1402
    %v1752 = vunpack.c.l.b16 %v1403
    %v1753 = vunpack.c.h.b16 %v1403
    %v1754 = vunpack.c.l.b16 %v1404
    %v1755 = vunpack.c.h.b16 %v1404
    %v1756 = vunpack.c.l.b16 %v1405
    %v1757 = vunpack.c.h.b16 %v1405
    %v1758 = vunpack.c.l.b16 %v1406
    %v1759 = vunpack.c.h.b16 %v1406
    %v1760 = vunpack.c.l.b16 %v1407
    %v1761 = vunpack.c.h.b16 %v1407
    %v1762 = vunpack.c.l.b16 %v1408
    %v1763 = vunpack.c.h.b16 %v1408
    %v1764 = vunpack.c.l.b16 %v1409
    %v1765 = vunpack.c.h.b16 %v1409
    %v1766 = vunpack.c.l.b16 %v1410
    %v1767 = vunpack.c.h.b16 %v1410
    %v1768 = vunpack.c.l.b16 %v1411
    %v1769 = vunpack.c.h.b16 %v1411
    %v1770 = vunpack.c.l.b16 %v1412
    %v1771 = vunpack.c.h.b16 %v1412
    %v1772 = vunpack.c.l.b16 %v1413
    %v1773 = vunpack.c.h.b16 %v1413
    %v1774 = vunpack.c.l.b16 %v1414
    %v1775 = vunpack.c.h.b16 %v1414
    %v1776 = vunpack.c.l.b16 %v1415
    %v1777 = vunpack.c.h.b16 %v1415
    %v1778 = vunpack.c.l.b16 %v1416
    %v1779 = vunpack.c.h.b16 %v1416
    %v1780 = vunpack.c.l.b16 %v1417
    %v1781 = vunpack.c.h.b16 %v1417
    %v1782 = vunpack.c.l.b16 %v1418
    %v1783 = vunpack.c.h.b16 %v1418
    %v1784 = vunpack.c.l.b16 %v1419
    %v1785 = vunpack.c.h.b16 %v1419
    %v1786 = vunpack.c.l.b16 %v1420
    %v1787 = vunpack.c.h.b16 %v1420
    %v1788 = vunpack.c.l.b16 %v1421
    %v1789 = vunpack.c.h.b16 %v1421
    %v1790 = vunpack.c.l.b16 %v1422
    %v1791 = vunpack.c.h.b16 %v1422
    %v1792 = vunpack.c.l.b16 %v1423
    %v1793 = vunpack.c.h.b16 %v1423
    %v1794 = vunpack.c.l.b16 %v1424
    %v1795 = vunpack.c.h.b16 %v1424
    %v1796 = vunpack.c.l.b16 %v1425
    %v1797 = vunpack.c.h.b16 %v1425
    %v1798 = vunpack.c.l.b16 %v1426
    %v1799 = vunpack.c.h.b16 %v1426
    %v1800 = vunpack.c.l.b16 %v1427
    %v1801 = vunpack.c.h.b16 %v1427
    %v1802 = vunpack.c.l.b16 %v1428
    %v1803 = vunpack.c.h.b16 %v1428
    %v1804 = vunpack.c.l.b16 %v1429
    %v1805 = vunpack.c.h.b16 %v1429
    %v1806 = vunpack.c.l.b16 %v1430
    %v1807 = vunpack.c.h.b16 %v1430
    %v1808 = vunpack.c.l.b16 %v1431
    %v1809 = vunpack.c.h.b16 %v1431
    %v1810 = vunpack.c.l.b16 %v1432
    %v1811 = vunpack.c.h.b16 %v1432
    %v1812 = vunpack.c.l.b16 %v1433
    %v1813 = vunpack.c.h.b16 %v1433
    %v1814 = vunpack.c.l.b16 %v1434
    %v1815 = vunpack.c.h.b16 %v1434
    %v1816 = vunpack.c.l.b16 %v1435
    %v1817 = vunpack.c.h.b16 %v1435
    %v1818 = vunpack.c.l.b16 %v1436
    %v1819 = vunpack.c.h.b16 %v1436
    %v1820 = vunpack.c.l.b16 %v1437
    %v1821 = vunpack.c.h.b16 %v1437
    %v1822 = vunpack.c.l.b16 %v1438
    %v1823 = vunpack.c.h.b16 %v1438
    %v1824 = vunpack.c.l.b16 %v1439
    %v1825 = vunpack.c.h.b16 %v1439
    %v1826 = vunpack.c.l.b16 %v1440
    %v1827 = vunpack.c.h.b16 %v1440
    %v1828 = vunpack.c.l.b16 %v1441
    %v1829 = vunpack.c.h.b16 %v1441
    %v1830 = vunpack.c.l.b16 %v1442
    %v1831 = vunpack.c.h.b16 %v1442
    %v1832 = vunpack.c.l.b16 %v1443
    %v1833 = vunpack.c.h.b16 %v1443
    %v1834 = vunpack.c.l.b16 %v1444
    %v1835 = vunpack.c.h.b16 %v1444
    %v1836 = vunpack.c.l.b16 %v1445
    %v1837 = vunpack.c.h.b16 %v1445
    %v1838 = vunpack.c.l.b16 %v1446
    %v1839 = vunpack.c.h.b16 %v1446
    %v1840 = vunpack.c.l.b16 %v1447
    %v1841 = vunpack.c.h.b16 %v1447
    %v1842 = vunpack.c.l.b16 %v1448
    %v1843 = vunpack.c.h.b16 %v1448
    %v1844 = vunpack.c.l.b16 %v1449
    %v1845 = vunpack.c.h.b16 %v1449
    %v1846 = vpack.c.b16 %v1592, %v1590
    %v1847 = vpack.c.b16 %v1593, %v1591
    %v1848 = vpack.c.b16 %v1596, %v1594
    %v1849 = vpack.c.b16 %v1597, %v1595
    %v1850 = vpack.c.b16 %v1600, %v1598
    %v1851 = vpack.c.b16 %v1601, %v1599
    %v1852 = vpack.c.b16 %v1604, %v1602
    %v1853 = vpack.c.b16 %v1605, %v1603
    %v1854 = vpack.c.b16 %v1608, %v1606
    %v1855 = vpack.c.b16 %v1609, %v1607
    %v1856 = vpack.c.b16 %v1612, %v1610
    %v1857 = vpack.c.b16 %v1613, %v1611
    %v1858 = vpack.c.b16 %v1616, %v1614
    %v1859 = vpack.c.b16 %v1617, %v1615
    %v1860 = vpack.c.b16 %v1620, %v1618
    %v1861 = vpack.c.b16 %v1621, %v1619
    %v1862 = vpack.c.b16 %v1624, %v1622
    %v1863 = vpack.c.b16 %v1625, %v1623
    %v1864 = vpack.c.b16 %v1628, %v1626
    %v1865 = vpack.c.b16 %v1629, %v1627
    %v1866 = vpack.c.b16 %v1632, %v1630
    %v1867 = vpack.c.b16 %v1633, %v1631
    %v1868 = vpack.c.b16 %v1636, %v1634
    %v1869 = vpack.c.b16 %v1637, %v1635
    %v1870 = vpack.c.b16 %v1640, %v1638
    %v1871 = vpack.c.b16 %v1641, %v1639
    %v1872 = vpack.c.b16 %v1644, %v1642
    %v1873 = vpack.c.b16 %v1645, %v1643
    %v1874 = vpack.c.b16 %v1648, %v1646
    %v1875 = vpack.c.b16 %v1649, %v1647
    %v1876 = vpack.c.b16 %v1652, %v1650
    %v1877 = vpack.c.b16 %v1653, %v1651
    %v1878 = vpack.c.b16 %v1656, %v1654
    %v1879 = vpack.c.b16 %v1657, %v1655
    %v1880 = vpack.c.b16 %v1660, %v1658
    %v1881 = vpack.c.b16 %v1661, %v1659
    %v1882 = vpack.c.b16 %v1664, %v1662
    %v1883 = vpack.c.b16 %v1665, %v1663
    %v1884 = vpack.c.b16 %v1668, %v1666
    %v1885 = vpack.c.b16 %v1669, %v1667
    %v1886 = vpack.c.b16 %v1672, %v1670
    %v1887 = vpack.c.b16 %v1673, %v1671
    %v1888 = vpack.c.b16 %v1676, %v1674
    %v1889 = vpack.c.b16 %v1677, %v1675
    %v1890 = vpack.c.b16 %v1680, %v1678
    %v1891 = vpack.c.b16 %v1681, %v1679
    %v1892 = vpack.c.b16 %v1684, %v1682
    %v1893 = vpack.c.b16 %v1685, %v1683
    %v1894 = vpack.c.b16 %v1688, %v1686
    %v1895 = vpack.c.b16 %v1689, %v1687
    %v1896 = vpack.c.b16 %v1692, %v1690
    %v1897 = vpack.c.b16 %v1693, %v1691
    %v1898 = vpack.c.b16 %v1696, %v1694
    %v1899 = vpack.c.b16 %v1697, %v1695
    %v1900 = vpack.c.b16 %v1700, %v1698
    %v1901 = vpack.c.b16 %v1701, %v1699
    %v1902 = vpack.c.b16 %v1704, %v1702
    %v1903 = vpack.c.b16 %v1705, %v1703
    %v1904 = vpack.c.b16 %v1708, %v1706
    %v1905 = vpack.c.b16 %v1709, %v1707
    %v1906 = vpack.c.b16 %v1712, %v1710
    %v1907 = vpack.c.b16 %v1713, %v1711
    %v1908 = vpack.c.b16 %v1716, %v1714
    %v1909 = vpack.c.b16 %v1717, %v1715
    %v1910 = vpack.c.b16 %v1720, %v1718
    %v1911 = vpack.c.b16 %v1721, %v1719
    %v1912 = vpack.c.b16 %v1724, %v1722
    %v1913 = vpack.c.b16 %v1725, %v1723
    %v1914 = vpack.c.b16 %v1728, %v1726
    %v1915 = vpack.c.b16 %v1729, %v1727
    %v1916 = vpack.c.b16 %v1732, %v1730
    %v1917 = vpack.c.b16 %v1733, %v1731
    %v1918 = vpack.c.b16 %v1736, %v1734
    %v1919 = vpack.c.b16 %v1737, %v1735
    %v1920 = vpack.c.b16 %v1740, %v1738
    %v1921 = vpack.c.b16 %v1741, %v1739
    %v1922 = vpack.c.b16 %v1744, %v1742
    %v1923 = vpack.c.b16 %v1745, %v1743
    %v1924 = vpack.c.b16 %v1748, %v1746
    %v1925 = vpack.c.b16 %v1749, %v1747
    %v1926 = vpack.c.b16 %v1752, %v1750
    %v1927 = vpack.c.b16 %v1753, %v1751
    %v1928 = vpack.c.b16 %v1756, %v1754
    %v1929 = vpack.c.b16 %v1757, %v1755
    %v1930 = vpack.c.b16 %v1760, %v1758
    %v1931 = vpack.c.b16 %v1761, %v1759
    %v1932 = vpack.c.b16 %v1764, %v1762
    %v1933 = vpack.c.b16 %v1765, %v1763
    %v1934 = vpack.c.b16 %v1768, %v1766
    %v1935 = vpack.c.b16 %v1769, %v1767
    %v1936 = vpack.c.b16 %v1772, %v1770
    %v1937 = vpack.c.b16 %v1773, %v1771
    %v1938 = vpack.c.b16 %v1776, %v1774
    %v1939 = vpack.c.b16 %v1777, %v1775
    %v1940 = vpack.c.b16 %v1780, %v1778
    %v1941 = vpack.c.b16 %v1781, %v1779
    %v1942 = vpack.c.b16 %v1784, %v1782
    %v1943 = vpack.c.b16 %v1785, %v1783
    %v1944 = vpack.c.b16 %v1788, %v1786
    %v1945 = vpack.c.b16 %v1789, %v1787
    %v1946 = vpack.c.b16 %v1792, %v1790
    %v1947 = vpack.c.b16 %v1793, %v1791
    %v1948 = vpack.c.b16 %v1796, %v1794
    %v1949 = vpack.c.b16 %v1797, %v1795
    %v1950 = vpack.c.b16 %v1800, %v1798
    %v1951 = vpack.c.b16 %v1801, %v1799
    %v1952 = vpack.c.b16 %v1804, %v1802
    %v1953 = vpack.c.b16 %v1805, %v1803
    %v1954 = vpack.c.b16 %v1808, %v1806
    %v1955 = vpack.c.b16 %v1809, %v1807
    %v1956 = vpack.c.b16 %v1812, %v1810
    %v1957 = vpack.c.b16 %v1813, %v1811
    %v1958 = vpack.c.b16 %v1816, %v1814
    %v1959 = vpack.c.b16 %v1817, %v1815
    %v1960 = vpack.c.b16 %v1820, %v1818
    %v1961 = vpack.c.b16 %v1821, %v1819
    %v1962 = vpack.c.b16 %v1824, %v1822
    %v1963 = vpack.c.b16 %v1825, %v1823
    %v1964 = vpack.c.b16 %v1828, %v1826
    %v1965 = vpack.c.b16 %v1829, %v1827
    %v1966 = vpack.c.b16 %v1832, %v1830
    %v1967 = vpack.c.b16 %v1833, %v1831
    %v1968 = vpack.c.b16 %v1836, %v1834
    %v1969 = vpack.c.b16 %v1837, %v1835
    %v1970 = vpack.c.b16 %v1840, %v1838
    %v1971 = vpack.c.b16 %v1841, %v1839
    %v1972 = vpack.c.b16 %v1844, %v1842
    %v1973 = vpack.c.b16 %v1845, %v1843
    %2102 = vmatprep.subr.bf16.mxu0 %v1861
    %2103 = vmatpush1.bf16.msra.mxu0 %v1860
    %2104 = vmatprep.subr.bf16.mxu0 %v1859
    %2105 = vmatpush1.bf16.msra.mxu0 %v1858
    %2106 = vmatprep.subr.bf16.mxu0 %v1857
    %2107 = vmatpush1.bf16.msra.mxu0 %v1856
    %2108 = vmatprep.subr.bf16.mxu0 %v1855
    %2109 = vmatpush1.bf16.msra.mxu0 %v1854
    %2110 = vmatprep.subr.bf16.mxu0 %v1853
    %2111 = vmatpush1.bf16.msra.mxu0 %v1852
    %2112 = vmatprep.subr.bf16.mxu0 %v1851
    %2113 = vmatpush1.bf16.msra.mxu0 %v1850
    %2114 = vmatprep.subr.bf16.mxu0 %v1849
    %2115 = vmatpush1.bf16.msra.mxu0 %v1848
    %2116 = vmatprep.subr.bf16.mxu0 %v1847
    %2117 = vmatpush1.bf16.msra.mxu0 %v1846
    %2118 = vmatprep.subr.bf16.mxu0 %v1877
    %2119 = vmatpush2.bf16.msra.mxu0 %v1876
    %2120 = vmatprep.subr.bf16.mxu0 %v1875
    %2121 = vmatpush2.bf16.msra.mxu0 %v1874
    %2122 = vmatprep.subr.bf16.mxu0 %v1873
    %2123 = vmatpush2.bf16.msra.mxu0 %v1872
    %2124 = vmatprep.subr.bf16.mxu0 %v1871
    %2125 = vmatpush2.bf16.msra.mxu0 %v1870
    %2126 = vmatprep.subr.bf16.mxu0 %v1869
    %2127 = vmatpush2.bf16.msra.mxu0 %v1868
    %2128 = vmatprep.subr.bf16.mxu0 %v1867
    %2129 = vmatpush2.bf16.msra.mxu0 %v1866
    %2130 = vmatprep.subr.bf16.mxu0 %v1865
    %2131 = vmatpush2.bf16.msra.mxu0 %v1864
    %2132 = vmatprep.subr.bf16.mxu0 %v1863
    %2133 = vmatpush2.bf16.msra.mxu0 %v1862
    %2134 = vmatprep.mubr.bf16.mxu0 %v1259
    %2135 = vmatmul.mubr.bf16.gmra.mxu0 %v1258
    %v2136 = vpop.f32.mrf.mxu0
    %v2137 = vadd.f32 %v1455, %v2136
    %v2138 = vpop.f32.mrf.mxu0
    %v2139 = vadd.f32 %v1459, %v2138
    %v2140 = vpop.f32.mrf.mxu0
    %v2141 = vadd.f32 %v1455, %v2140
    %v2142 = vpop.f32.mrf.mxu0
    %v2143 = vadd.f32 %v1459, %v2142
    %2144 = vmatprep.mubr.bf16.mxu0 %v1267
    %2145 = vmatmul.mubr.bf16.gmra.mxu0 %v1266
    %v2146 = vpop.f32.mrf.mxu0
    %v2147 = vadd.f32 %v1455, %v2146
    %v2148 = vpop.f32.mrf.mxu0
    %v2149 = vadd.f32 %v1459, %v2148
    %v2150 = vpop.f32.mrf.mxu0
    %v2151 = vadd.f32 %v1455, %v2150
    %v2152 = vpop.f32.mrf.mxu0
    %v2153 = vadd.f32 %v1459, %v2152
    %2154 = vmatprep.mubr.bf16.mxu0 %v1275
    %2155 = vmatmul.mubr.bf16.gmra.mxu0 %v1274
    %v2156 = vpop.f32.mrf.mxu0
    %v2157 = vadd.f32 %v1455, %v2156
    %v2158 = vpop.f32.mrf.mxu0
    %v2159 = vadd.f32 %v1459, %v2158
    %v2160 = vpop.f32.mrf.mxu0
    %v2161 = vadd.f32 %v1455, %v2160
    %v2162 = vpop.f32.mrf.mxu0
    %v2163 = vadd.f32 %v1459, %v2162
    %2164 = vmatprep.mubr.bf16.mxu0 %v1283
    %2165 = vmatmul.mubr.bf16.gmra.mxu0 %v1282
    %v2166 = vpop.f32.mrf.mxu0
    %v2167 = vadd.f32 %v1455, %v2166
    %v2168 = vpop.f32.mrf.mxu0
    %v2169 = vadd.f32 %v1459, %v2168
    %v2170 = vpop.f32.mrf.mxu0
    %v2171 = vadd.f32 %v1455, %v2170
    %v2172 = vpop.f32.mrf.mxu0
    %v2173 = vadd.f32 %v1459, %v2172
    %2174 = vmatprep.mubr.bf16.mxu0 %v1291
    %2175 = vmatmul.mubr.bf16.gmra.mxu0 %v1290
    %v2176 = vpop.f32.mrf.mxu0
    %v2177 = vadd.f32 %v1455, %v2176
    %v2178 = vpop.f32.mrf.mxu0
    %v2179 = vadd.f32 %v1459, %v2178
    %v2180 = vpop.f32.mrf.mxu0
    %v2181 = vadd.f32 %v1455, %v2180
    %v2182 = vpop.f32.mrf.mxu0
    %v2183 = vadd.f32 %v1459, %v2182
    %2184 = vmatprep.mubr.bf16.mxu0 %v1299
    %2185 = vmatmul.mubr.bf16.gmra.mxu0 %v1298
    %v2186 = vpop.f32.mrf.mxu0
    %v2187 = vadd.f32 %v1455, %v2186
    %v2188 = vpop.f32.mrf.mxu0
    %v2189 = vadd.f32 %v1459, %v2188
    %v2190 = vpop.f32.mrf.mxu0
    %v2191 = vadd.f32 %v1455, %v2190
    %v2192 = vpop.f32.mrf.mxu0
    %v2193 = vadd.f32 %v1459, %v2192
    %2194 = vmatprep.mubr.bf16.mxu0 %v1307
    %2195 = vmatmul.mubr.bf16.gmra.mxu0 %v1306
    %v2196 = vpop.f32.mrf.mxu0
    %v2197 = vadd.f32 %v1455, %v2196
    %v2198 = vpop.f32.mrf.mxu0
    %v2199 = vadd.f32 %v1459, %v2198
    %v2200 = vpop.f32.mrf.mxu0
    %v2201 = vadd.f32 %v1455, %v2200
    %v2202 = vpop.f32.mrf.mxu0
    %v2203 = vadd.f32 %v1459, %v2202
    %2204 = vmatprep.mubr.bf16.mxu0 %v1315
    %2205 = vmatmul.mubr.bf16.gmra.mxu0 %v1314
    %v2206 = vpop.f32.mrf.mxu0
    %v2207 = vadd.f32 %v1455, %v2206
    %v2208 = vpop.f32.mrf.mxu0
    %v2209 = vadd.f32 %v1459, %v2208
    %v2210 = vpop.f32.mrf.mxu0
    %v2211 = vadd.f32 %v1455, %v2210
    %v2212 = vpop.f32.mrf.mxu0
    %v2213 = vadd.f32 %v1459, %v2212
    %2214 = vdwg.mxu0
    %2215 = vmatprep.subr.bf16.mxu0 %v1893
    %2216 = vmatpush1.bf16.msra.mxu0 %v1892
    %2217 = vmatprep.subr.bf16.mxu0 %v1891
    %2218 = vmatpush1.bf16.msra.mxu0 %v1890
    %2219 = vmatprep.subr.bf16.mxu0 %v1889
    %2220 = vmatpush1.bf16.msra.mxu0 %v1888
    %2221 = vmatprep.subr.bf16.mxu0 %v1887
    %2222 = vmatpush1.bf16.msra.mxu0 %v1886
    %2223 = vmatprep.subr.bf16.mxu0 %v1885
    %2224 = vmatpush1.bf16.msra.mxu0 %v1884
    %2225 = vmatprep.subr.bf16.mxu0 %v1883
    %2226 = vmatpush1.bf16.msra.mxu0 %v1882
    %2227 = vmatprep.subr.bf16.mxu0 %v1881
    %2228 = vmatpush1.bf16.msra.mxu0 %v1880
    %2229 = vmatprep.subr.bf16.mxu0 %v1879
    %2230 = vmatpush1.bf16.msra.mxu0 %v1878
    %2231 = vmatprep.subr.bf16.mxu0 %v1909
    %2232 = vmatpush2.bf16.msra.mxu0 %v1908
    %2233 = vmatprep.subr.bf16.mxu0 %v1907
    %2234 = vmatpush2.bf16.msra.mxu0 %v1906
    %2235 = vmatprep.subr.bf16.mxu0 %v1905
    %2236 = vmatpush2.bf16.msra.mxu0 %v1904
    %2237 = vmatprep.subr.bf16.mxu0 %v1903
    %2238 = vmatpush2.bf16.msra.mxu0 %v1902
    %2239 = vmatprep.subr.bf16.mxu0 %v1901
    %2240 = vmatpush2.bf16.msra.mxu0 %v1900
    %2241 = vmatprep.subr.bf16.mxu0 %v1899
    %2242 = vmatpush2.bf16.msra.mxu0 %v1898
    %2243 = vmatprep.subr.bf16.mxu0 %v1897
    %2244 = vmatpush2.bf16.msra.mxu0 %v1896
    %2245 = vmatprep.subr.bf16.mxu0 %v1895
    %2246 = vmatpush2.bf16.msra.mxu0 %v1894
    %2247 = vmatprep.mubr.bf16.mxu0 %v1261
    %2248 = vmatmul.mubr.bf16.gmra.mxu0 %v1260
    %v2249 = vpop.f32.mrf.mxu0
    %v2250 = vadd.f32 %v2137, %v2249
    %v2251 = vpop.f32.mrf.mxu0
    %v2252 = vadd.f32 %v2139, %v2251
    %v2253 = vpop.f32.mrf.mxu0
    %v2254 = vadd.f32 %v2141, %v2253
    %v2255 = vpop.f32.mrf.mxu0
    %v2256 = vadd.f32 %v2143, %v2255
    %2257 = vmatprep.mubr.bf16.mxu0 %v1269
    %2258 = vmatmul.mubr.bf16.gmra.mxu0 %v1268
    %v2259 = vpop.f32.mrf.mxu0
    %v2260 = vadd.f32 %v2147, %v2259
    %v2261 = vpop.f32.mrf.mxu0
    %v2262 = vadd.f32 %v2149, %v2261
    %v2263 = vpop.f32.mrf.mxu0
    %v2264 = vadd.f32 %v2151, %v2263
    %v2265 = vpop.f32.mrf.mxu0
    %v2266 = vadd.f32 %v2153, %v2265
    %2267 = vmatprep.mubr.bf16.mxu0 %v1277
    %2268 = vmatmul.mubr.bf16.gmra.mxu0 %v1276
    %v2269 = vpop.f32.mrf.mxu0
    %v2270 = vadd.f32 %v2157, %v2269
    %v2271 = vpop.f32.mrf.mxu0
    %v2272 = vadd.f32 %v2159, %v2271
    %v2273 = vpop.f32.mrf.mxu0
    %v2274 = vadd.f32 %v2161, %v2273
    %v2275 = vpop.f32.mrf.mxu0
    %v2276 = vadd.f32 %v2163, %v2275
    %2277 = vmatprep.mubr.bf16.mxu0 %v1285
    %2278 = vmatmul.mubr.bf16.gmra.mxu0 %v1284
    %v2279 = vpop.f32.mrf.mxu0
    %v2280 = vadd.f32 %v2167, %v2279
    %v2281 = vpop.f32.mrf.mxu0
    %v2282 = vadd.f32 %v2169, %v2281
    %v2283 = vpop.f32.mrf.mxu0
    %v2284 = vadd.f32 %v2171, %v2283
    %v2285 = vpop.f32.mrf.mxu0
    %v2286 = vadd.f32 %v2173, %v2285
    %2287 = vmatprep.mubr.bf16.mxu0 %v1293
    %2288 = vmatmul.mubr.bf16.gmra.mxu0 %v1292
    %v2289 = vpop.f32.mrf.mxu0
    %v2290 = vadd.f32 %v2177, %v2289
    %v2291 = vpop.f32.mrf.mxu0
    %v2292 = vadd.f32 %v2179, %v2291
    %v2293 = vpop.f32.mrf.mxu0
    %v2294 = vadd.f32 %v2181, %v2293
    %v2295 = vpop.f32.mrf.mxu0
    %v2296 = vadd.f32 %v2183, %v2295
    %2297 = vmatprep.mubr.bf16.mxu0 %v1301
    %2298 = vmatmul.mubr.bf16.gmra.mxu0 %v1300
    %v2299 = vpop.f32.mrf.mxu0
    %v2300 = vadd.f32 %v2187, %v2299
    %v2301 = vpop.f32.mrf.mxu0
    %v2302 = vadd.f32 %v2189, %v2301
    %v2303 = vpop.f32.mrf.mxu0
    %v2304 = vadd.f32 %v2191, %v2303
    %v2305 = vpop.f32.mrf.mxu0
    %v2306 = vadd.f32 %v2193, %v2305
    %2307 = vmatprep.mubr.bf16.mxu0 %v1309
    %2308 = vmatmul.mubr.bf16.gmra.mxu0 %v1308
    %v2309 = vpop.f32.mrf.mxu0
    %v2310 = vadd.f32 %v2197, %v2309
    %v2311 = vpop.f32.mrf.mxu0
    %v2312 = vadd.f32 %v2199, %v2311
    %v2313 = vpop.f32.mrf.mxu0
    %v2314 = vadd.f32 %v2201, %v2313
    %v2315 = vpop.f32.mrf.mxu0
    %v2316 = vadd.f32 %v2203, %v2315
    %2317 = vmatprep.mubr.bf16.mxu0 %v1317
    %2318 = vmatmul.mubr.bf16.gmra.mxu0 %v1316
    %v2319 = vpop.f32.mrf.mxu0
    %v2320 = vadd.f32 %v2207, %v2319
    %v2321 = vpop.f32.mrf.mxu0
    %v2322 = vadd.f32 %v2209, %v2321
    %v2323 = vpop.f32.mrf.mxu0
    %v2324 = vadd.f32 %v2211, %v2323
    %v2325 = vpop.f32.mrf.mxu0
    %v2326 = vadd.f32 %v2213, %v2325
    %2327 = vdwg.mxu0
    %2328 = vmatprep.subr.bf16.mxu0 %v1925
    %2329 = vmatpush1.bf16.msra.mxu0 %v1924
    %2330 = vmatprep.subr.bf16.mxu0 %v1923
    %2331 = vmatpush1.bf16.msra.mxu0 %v1922
    %2332 = vmatprep.subr.bf16.mxu0 %v1921
    %2333 = vmatpush1.bf16.msra.mxu0 %v1920
    %2334 = vmatprep.subr.bf16.mxu0 %v1919
    %2335 = vmatpush1.bf16.msra.mxu0 %v1918
    %2336 = vmatprep.subr.bf16.mxu0 %v1917
    %2337 = vmatpush1.bf16.msra.mxu0 %v1916
    %2338 = vmatprep.subr.bf16.mxu0 %v1915
    %2339 = vmatpush1.bf16.msra.mxu0 %v1914
    %2340 = vmatprep.subr.bf16.mxu0 %v1913
    %2341 = vmatpush1.bf16.msra.mxu0 %v1912
    %2342 = vmatprep.subr.bf16.mxu0 %v1911
    %2343 = vmatpush1.bf16.msra.mxu0 %v1910
    %2344 = vmatprep.subr.bf16.mxu0 %v1941
    %2345 = vmatpush2.bf16.msra.mxu0 %v1940
    %2346 = vmatprep.subr.bf16.mxu0 %v1939
    %2347 = vmatpush2.bf16.msra.mxu0 %v1938
    %2348 = vmatprep.subr.bf16.mxu0 %v1937
    %2349 = vmatpush2.bf16.msra.mxu0 %v1936
    %2350 = vmatprep.subr.bf16.mxu0 %v1935
    %2351 = vmatpush2.bf16.msra.mxu0 %v1934
    %2352 = vmatprep.subr.bf16.mxu0 %v1933
    %2353 = vmatpush2.bf16.msra.mxu0 %v1932
    %2354 = vmatprep.subr.bf16.mxu0 %v1931
    %2355 = vmatpush2.bf16.msra.mxu0 %v1930
    %2356 = vmatprep.subr.bf16.mxu0 %v1929
    %2357 = vmatpush2.bf16.msra.mxu0 %v1928
    %2358 = vmatprep.subr.bf16.mxu0 %v1927
    %2359 = vmatpush2.bf16.msra.mxu0 %v1926
    %2360 = vmatprep.mubr.bf16.mxu0 %v1263
    %2361 = vmatmul.mubr.bf16.gmra.mxu0 %v1262
    %v2362 = vpop.f32.mrf.mxu0
    %v2363 = vadd.f32 %v2250, %v2362
    %v2364 = vpop.f32.mrf.mxu0
    %v2365 = vadd.f32 %v2252, %v2364
    %v2366 = vpop.f32.mrf.mxu0
    %v2367 = vadd.f32 %v2254, %v2366
    %v2368 = vpop.f32.mrf.mxu0
    %v2369 = vadd.f32 %v2256, %v2368
    %2370 = vmatprep.mubr.bf16.mxu0 %v1271
    %2371 = vmatmul.mubr.bf16.gmra.mxu0 %v1270
    %v2372 = vpop.f32.mrf.mxu0
    %v2373 = vadd.f32 %v2260, %v2372
    %v2374 = vpop.f32.mrf.mxu0
    %v2375 = vadd.f32 %v2262, %v2374
    %v2376 = vpop.f32.mrf.mxu0
    %v2377 = vadd.f32 %v2264, %v2376
    %v2378 = vpop.f32.mrf.mxu0
    %v2379 = vadd.f32 %v2266, %v2378
    %2380 = vmatprep.mubr.bf16.mxu0 %v1279
    %2381 = vmatmul.mubr.bf16.gmra.mxu0 %v1278
    %v2382 = vpop.f32.mrf.mxu0
    %v2383 = vadd.f32 %v2270, %v2382
    %v2384 = vpop.f32.mrf.mxu0
    %v2385 = vadd.f32 %v2272, %v2384
    %v2386 = vpop.f32.mrf.mxu0
    %v2387 = vadd.f32 %v2274, %v2386
    %v2388 = vpop.f32.mrf.mxu0
    %v2389 = vadd.f32 %v2276, %v2388
    %2390 = vmatprep.mubr.bf16.mxu0 %v1287
    %2391 = vmatmul.mubr.bf16.gmra.mxu0 %v1286
    %v2392 = vpop.f32.mrf.mxu0
    %v2393 = vadd.f32 %v2280, %v2392
    %v2394 = vpop.f32.mrf.mxu0
    %v2395 = vadd.f32 %v2282, %v2394
    %v2396 = vpop.f32.mrf.mxu0
    %v2397 = vadd.f32 %v2284, %v2396
    %v2398 = vpop.f32.mrf.mxu0
    %v2399 = vadd.f32 %v2286, %v2398
    %2400 = vmatprep.mubr.bf16.mxu0 %v1295
    %2401 = vmatmul.mubr.bf16.gmra.mxu0 %v1294
    %v2402 = vpop.f32.mrf.mxu0
    %v2403 = vadd.f32 %v2290, %v2402
    %v2404 = vpop.f32.mrf.mxu0
    %v2405 = vadd.f32 %v2292, %v2404
    %v2406 = vpop.f32.mrf.mxu0
    %v2407 = vadd.f32 %v2294, %v2406
    %v2408 = vpop.f32.mrf.mxu0
    %v2409 = vadd.f32 %v2296, %v2408
    %2410 = vmatprep.mubr.bf16.mxu0 %v1303
    %2411 = vmatmul.mubr.bf16.gmra.mxu0 %v1302
    %v2412 = vpop.f32.mrf.mxu0
    %v2413 = vadd.f32 %v2300, %v2412
    %v2414 = vpop.f32.mrf.mxu0
    %v2415 = vadd.f32 %v2302, %v2414
    %v2416 = vpop.f32.mrf.mxu0
    %v2417 = vadd.f32 %v2304, %v2416
    %v2418 = vpop.f32.mrf.mxu0
    %v2419 = vadd.f32 %v2306, %v2418
    %2420 = vmatprep.mubr.bf16.mxu0 %v1311
    %2421 = vmatmul.mubr.bf16.gmra.mxu0 %v1310
    %v2422 = vpop.f32.mrf.mxu0
    %v2423 = vadd.f32 %v2310, %v2422
    %v2424 = vpop.f32.mrf.mxu0
    %v2425 = vadd.f32 %v2312, %v2424
    %v2426 = vpop.f32.mrf.mxu0
    %v2427 = vadd.f32 %v2314, %v2426
    %v2428 = vpop.f32.mrf.mxu0
    %v2429 = vadd.f32 %v2316, %v2428
    %2430 = vmatprep.mubr.bf16.mxu0 %v1319
    %2431 = vmatmul.mubr.bf16.gmra.mxu0 %v1318
    %v2432 = vpop.f32.mrf.mxu0
    %v2433 = vadd.f32 %v2320, %v2432
    %v2434 = vpop.f32.mrf.mxu0
    %v2435 = vadd.f32 %v2322, %v2434
    %v2436 = vpop.f32.mrf.mxu0
    %v2437 = vadd.f32 %v2324, %v2436
    %v2438 = vpop.f32.mrf.mxu0
    %v2439 = vadd.f32 %v2326, %v2438
    %2440 = vdwg.mxu0
    %2441 = vmatprep.subr.bf16.mxu0 %v1957
    %2442 = vmatpush1.bf16.msra.mxu0 %v1956
    %2443 = vmatprep.subr.bf16.mxu0 %v1955
    %2444 = vmatpush1.bf16.msra.mxu0 %v1954
    %2445 = vmatprep.subr.bf16.mxu0 %v1953
    %2446 = vmatpush1.bf16.msra.mxu0 %v1952
    %2447 = vmatprep.subr.bf16.mxu0 %v1951
    %2448 = vmatpush1.bf16.msra.mxu0 %v1950
    %2449 = vmatprep.subr.bf16.mxu0 %v1949
    %2450 = vmatpush1.bf16.msra.mxu0 %v1948
    %2451 = vmatprep.subr.bf16.mxu0 %v1947
    %2452 = vmatpush1.bf16.msra.mxu0 %v1946
    %2453 = vmatprep.subr.bf16.mxu0 %v1945
    %2454 = vmatpush1.bf16.msra.mxu0 %v1944
    %2455 = vmatprep.subr.bf16.mxu0 %v1943
    %2456 = vmatpush1.bf16.msra.mxu0 %v1942
    %2457 = vmatprep.subr.bf16.mxu0 %v1973
    %2458 = vmatpush2.bf16.msra.mxu0 %v1972
    %2459 = vmatprep.subr.bf16.mxu0 %v1971
    %2460 = vmatpush2.bf16.msra.mxu0 %v1970
    %2461 = vmatprep.subr.bf16.mxu0 %v1969
    %2462 = vmatpush2.bf16.msra.mxu0 %v1968
    %2463 = vmatprep.subr.bf16.mxu0 %v1967
    %2464 = vmatpush2.bf16.msra.mxu0 %v1966
    %2465 = vmatprep.subr.bf16.mxu0 %v1965
    %2466 = vmatpush2.bf16.msra.mxu0 %v1964
    %2467 = vmatprep.subr.bf16.mxu0 %v1963
    %2468 = vmatpush2.bf16.msra.mxu0 %v1962
    %2469 = vmatprep.subr.bf16.mxu0 %v1961
    %2470 = vmatpush2.bf16.msra.mxu0 %v1960
    %2471 = vmatprep.subr.bf16.mxu0 %v1959
    %2472 = vmatpush2.bf16.msra.mxu0 %v1958
    %2473 = vmatprep.mubr.bf16.mxu0 %v1265
    %2474 = vmatmul.mubr.bf16.gmra.mxu0 %v1264
    %v2475 = vpop.f32.mrf.mxu0
    %v2476 = vadd.f32 %v2363, %v2475
    %v2477 = vpop.f32.mrf.mxu0
    %v2478 = vadd.f32 %v2365, %v2477
    %v2479 = vpop.f32.mrf.mxu0
    %v2480 = vadd.f32 %v2367, %v2479
    %v2481 = vpop.f32.mrf.mxu0
    %v2482 = vadd.f32 %v2369, %v2481
    %2483 = vmatprep.mubr.bf16.mxu0 %v1273
    %2484 = vmatmul.mubr.bf16.gmra.mxu0 %v1272
    %v2485 = vpop.f32.mrf.mxu0
    %v2486 = vadd.f32 %v2373, %v2485
    %v2487 = vpop.f32.mrf.mxu0
    %v2488 = vadd.f32 %v2375, %v2487
    %v2489 = vpop.f32.mrf.mxu0
    %v2490 = vadd.f32 %v2377, %v2489
    %v2491 = vpop.f32.mrf.mxu0
    %v2492 = vadd.f32 %v2379, %v2491
    %2493 = vmatprep.mubr.bf16.mxu0 %v1281
    %2494 = vmatmul.mubr.bf16.gmra.mxu0 %v1280
    %v2495 = vpop.f32.mrf.mxu0
    %v2496 = vadd.f32 %v2383, %v2495
    %v2497 = vpop.f32.mrf.mxu0
    %v2498 = vadd.f32 %v2385, %v2497
    %v2499 = vpop.f32.mrf.mxu0
    %v2500 = vadd.f32 %v2387, %v2499
    %v2501 = vpop.f32.mrf.mxu0
    %v2502 = vadd.f32 %v2389, %v2501
    %2503 = vmatprep.mubr.bf16.mxu0 %v1289
    %2504 = vmatmul.mubr.bf16.gmra.mxu0 %v1288
    %v2505 = vpop.f32.mrf.mxu0
    %v2506 = vadd.f32 %v2393, %v2505
    %v2507 = vpop.f32.mrf.mxu0
    %v2508 = vadd.f32 %v2395, %v2507
    %v2509 = vpop.f32.mrf.mxu0
    %v2510 = vadd.f32 %v2397, %v2509
    %v2511 = vpop.f32.mrf.mxu0
    %v2512 = vadd.f32 %v2399, %v2511
    %2513 = vmatprep.mubr.bf16.mxu0 %v1297
    %2514 = vmatmul.mubr.bf16.gmra.mxu0 %v1296
    %v2515 = vpop.f32.mrf.mxu0
    %v2516 = vadd.f32 %v2403, %v2515
    %v2517 = vpop.f32.mrf.mxu0
    %v2518 = vadd.f32 %v2405, %v2517
    %v2519 = vpop.f32.mrf.mxu0
    %v2520 = vadd.f32 %v2407, %v2519
    %v2521 = vpop.f32.mrf.mxu0
    %v2522 = vadd.f32 %v2409, %v2521
    %2523 = vmatprep.mubr.bf16.mxu0 %v1305
    %2524 = vmatmul.mubr.bf16.gmra.mxu0 %v1304
    %v2525 = vpop.f32.mrf.mxu0
    %v2526 = vadd.f32 %v2413, %v2525
    %v2527 = vpop.f32.mrf.mxu0
    %v2528 = vadd.f32 %v2415, %v2527
    %v2529 = vpop.f32.mrf.mxu0
    %v2530 = vadd.f32 %v2417, %v2529
    %v2531 = vpop.f32.mrf.mxu0
    %v2532 = vadd.f32 %v2419, %v2531
    %2533 = vmatprep.mubr.bf16.mxu0 %v1313
    %2534 = vmatmul.mubr.bf16.gmra.mxu0 %v1312
    %v2535 = vpop.f32.mrf.mxu0
    %v2536 = vadd.f32 %v2423, %v2535
    %v2537 = vpop.f32.mrf.mxu0
    %v2538 = vadd.f32 %v2425, %v2537
    %v2539 = vpop.f32.mrf.mxu0
    %v2540 = vadd.f32 %v2427, %v2539
    %v2541 = vpop.f32.mrf.mxu0
    %v2542 = vadd.f32 %v2429, %v2541
    %2543 = vmatprep.mubr.bf16.mxu0 %v1321
    %2544 = vmatmul.mubr.bf16.gmra.mxu0 %v1320
    %v2545 = vpop.f32.mrf.mxu0
    %v2546 = vadd.f32 %v2433, %v2545
    %v2547 = vpop.f32.mrf.mxu0
    %v2548 = vadd.f32 %v2435, %v2547
    %v2549 = vpop.f32.mrf.mxu0
    %v2550 = vadd.f32 %v2437, %v2549
    %v2551 = vpop.f32.mrf.mxu0
    %v2552 = vadd.f32 %v2439, %v2551
    %2553 = vdwg.mxu0
    %v2554 = vmax.f32 %v2476, 0.0
    %v2555 = vmax.f32 %v2478, 0.0
    %v2556 = vmax.f32 %v2480, 0.0
    %v2557 = vmax.f32 %v2482, 0.0
    %v2558 = vmax.f32 %v2486, 0.0
    %v2559 = vmax.f32 %v2488, 0.0
    %v2560 = vmax.f32 %v2490, 0.0
    %v2561 = vmax.f32 %v2492, 0.0
    %v2562 = vmax.f32 %v2496, 0.0
    %v2563 = vmax.f32 %v2498, 0.0
    %v2564 = vmax.f32 %v2500, 0.0
    %v2565 = vmax.f32 %v2502, 0.0
    %v2566 = vmax.f32 %v2506, 0.0
    %v2567 = vmax.f32 %v2508, 0.0
    %v2568 = vmax.f32 %v2510, 0.0
    %v2569 = vmax.f32 %v2512, 0.0
    %v2570 = vmax.f32 %v2516, 0.0
    %v2571 = vmax.f32 %v2518, 0.0
    %v2572 = vmax.f32 %v2520, 0.0
    %v2573 = vmax.f32 %v2522, 0.0
    %v2574 = vmax.f32 %v2526, 0.0
    %v2575 = vmax.f32 %v2528, 0.0
    %v2576 = vmax.f32 %v2530, 0.0
    %v2577 = vmax.f32 %v2532, 0.0
    %v2578 = vmax.f32 %v2536, 0.0
    %v2579 = vmax.f32 %v2538, 0.0
    %v2580 = vmax.f32 %v2540, 0.0
    %v2581 = vmax.f32 %v2542, 0.0
    %v2582 = vmax.f32 %v2546, 0.0
    %v2583 = vmax.f32 %v2548, 0.0
    %v2584 = vmax.f32 %v2550, 0.0
    %v2585 = vmax.f32 %v2552, 0.0
    %v2586 = vpack.c.bf16 %v2556, %v2554
    %v2587 = vpack.c.bf16 %v2557, %v2555
    %v2588 = vpack.c.bf16 %v2560, %v2558
    %v2589 = vpack.c.bf16 %v2561, %v2559
    %v2590 = vpack.c.bf16 %v2564, %v2562
    %v2591 = vpack.c.bf16 %v2565, %v2563
    %v2592 = vpack.c.bf16 %v2568, %v2566
    %v2593 = vpack.c.bf16 %v2569, %v2567
    %v2594 = vpack.c.bf16 %v2572, %v2570
    %v2595 = vpack.c.bf16 %v2573, %v2571
    %v2596 = vpack.c.bf16 %v2576, %v2574
    %v2597 = vpack.c.bf16 %v2577, %v2575
    %v2598 = vpack.c.bf16 %v2580, %v2578
    %v2599 = vpack.c.bf16 %v2581, %v2579
    %v2600 = vpack.c.bf16 %v2584, %v2582
    %v2601 = vpack.c.bf16 %v2585, %v2583
    %v2602 = vld [vmem:[%s23] sm:$0xf]
    %v2603 = vld [vmem:[%s23 + $0x4] sm:$0xf]
    %v2604 = vld [vmem:[%s23 + $0x8] sm:$0xf]
    %v2605 = vld [vmem:[%s23 + $0xc] sm:$0xf]
    %v2606 = vld [vmem:[%s23 + $0x10] sm:$0xf]
    %v2607 = vld [vmem:[%s23 + $0x14] sm:$0xf]
    %v2608 = vld [vmem:[%s23 + $0x18] sm:$0xf]
    %v2609 = vld [vmem:[%s23 + $0x1c] sm:$0xf]
    %v2610 = vld [vmem:[%s23 + $0x20] sm:$0xf]
    %v2611 = vld [vmem:[%s23 + $0x24] sm:$0xf]
    %v2612 = vld [vmem:[%s23 + $0x28] sm:$0xf]
    %v2613 = vld [vmem:[%s23 + $0x2c] sm:$0xf]
    %v2614 = vld [vmem:[%s23 + $0x30] sm:$0xf]
    %v2615 = vld [vmem:[%s23 + $0x34] sm:$0xf]
    %v2616 = vld [vmem:[%s23 + $0x38] sm:$0xf]
    %v2617 = vld [vmem:[%s23 + $0x3c] sm:$0xf]
    %v2618 = vld [vmem:[%s23 + $0x40] sm:$0xf]
    %v2619 = vld [vmem:[%s23 + $0x44] sm:$0xf]
    %v2620 = vld [vmem:[%s23 + $0x48] sm:$0xf]
    %v2621 = vld [vmem:[%s23 + $0x4c] sm:$0xf]
    %v2622 = vld [vmem:[%s23 + $0x50] sm:$0xf]
    %v2623 = vld [vmem:[%s23 + $0x54] sm:$0xf]
    %v2624 = vld [vmem:[%s23 + $0x58] sm:$0xf]
    %v2625 = vld [vmem:[%s23 + $0x5c] sm:$0xf]
    %v2626 = vld [vmem:[%s23 + $0x60] sm:$0xf]
    %v2627 = vld [vmem:[%s23 + $0x64] sm:$0xf]
    %v2628 = vld [vmem:[%s23 + $0x68] sm:$0xf]
    %v2629 = vld [vmem:[%s23 + $0x6c] sm:$0xf]
    %v2630 = vld [vmem:[%s23 + $0x70] sm:$0xf]
    %v2631 = vld [vmem:[%s23 + $0x74] sm:$0xf]
    %v2632 = vld [vmem:[%s23 + $0x78] sm:$0xf]
    %v2633 = vld [vmem:[%s23 + $0x7c] sm:$0xf]
    %v2634 = vld [vmem:[#allocation12] sm:$0x1]
    %v2636 = vlaneseq
    %v2637 = vshrl.u32 %v2636, 7
    %v2638 = vsub.s32 0, %v2637
    %v2639 = vrot.slane %v2634, %v2638
    %v2673 = vunpack.c.l.b16 %v2602
    %v2674 = vunpack.c.l.b16 %v2603
    %v2675 = vunpack.c.l.b16 %v2604
    %v2676 = vunpack.c.l.b16 %v2605
    %v2677 = vunpack.c.l.b16 %v2606
    %v2678 = vunpack.c.l.b16 %v2607
    %v2679 = vunpack.c.l.b16 %v2608
    %v2680 = vunpack.c.l.b16 %v2609
    %v2681 = vunpack.c.l.b16 %v2610
    %v2682 = vunpack.c.l.b16 %v2611
    %v2683 = vunpack.c.l.b16 %v2612
    %v2684 = vunpack.c.l.b16 %v2613
    %v2685 = vunpack.c.l.b16 %v2614
    %v2686 = vunpack.c.l.b16 %v2615
    %v2687 = vunpack.c.l.b16 %v2616
    %v2688 = vunpack.c.l.b16 %v2617
    %v2689 = vunpack.c.l.b16 %v2618
    %v2690 = vunpack.c.l.b16 %v2619
    %v2691 = vunpack.c.l.b16 %v2620
    %v2692 = vunpack.c.l.b16 %v2621
    %v2693 = vunpack.c.l.b16 %v2622
    %v2694 = vunpack.c.l.b16 %v2623
    %v2695 = vunpack.c.l.b16 %v2624
    %v2696 = vunpack.c.l.b16 %v2625
    %v2697 = vunpack.c.l.b16 %v2626
    %v2698 = vunpack.c.l.b16 %v2627
    %v2699 = vunpack.c.l.b16 %v2628
    %v2700 = vunpack.c.l.b16 %v2629
    %v2701 = vunpack.c.l.b16 %v2630
    %v2702 = vunpack.c.l.b16 %v2631
    %v2703 = vunpack.c.l.b16 %v2632
    %v2704 = vunpack.c.l.b16 %v2633
    %v2705 = vpack.c.b16 %v2674, %v2673
    %v2706 = vpack.c.b16 %v2676, %v2675
    %v2707 = vpack.c.b16 %v2678, %v2677
    %v2708 = vpack.c.b16 %v2680, %v2679
    %v2709 = vpack.c.b16 %v2682, %v2681
    %v2710 = vpack.c.b16 %v2684, %v2683
    %v2711 = vpack.c.b16 %v2686, %v2685
    %v2712 = vpack.c.b16 %v2688, %v2687
    %v2713 = vpack.c.b16 %v2690, %v2689
    %v2714 = vpack.c.b16 %v2692, %v2691
    %v2715 = vpack.c.b16 %v2694, %v2693
    %v2716 = vpack.c.b16 %v2696, %v2695
    %v2717 = vpack.c.b16 %v2698, %v2697
    %v2718 = vpack.c.b16 %v2700, %v2699
    %v2719 = vpack.c.b16 %v2702, %v2701
    %v2720 = vpack.c.b16 %v2704, %v2703
    %2737 = vmatprep.subr.bf16.mxu0 0
    %2738 = vmatpush1.bf16.msra.mxu0 %v2712
    %2739 = vmatprep.subr.bf16.mxu0 0
    %2740 = vmatpush1.bf16.msra.mxu0 %v2711
    %2741 = vmatprep.subr.bf16.mxu0 0
    %2742 = vmatpush1.bf16.msra.mxu0 %v2710
    %2743 = vmatprep.subr.bf16.mxu0 0
    %2744 = vmatpush1.bf16.msra.mxu0 %v2709
    %2745 = vmatprep.subr.bf16.mxu0 0
    %2746 = vmatpush1.bf16.msra.mxu0 %v2708
    %2747 = vmatprep.subr.bf16.mxu0 0
    %2748 = vmatpush1.bf16.msra.mxu0 %v2707
    %2749 = vmatprep.subr.bf16.mxu0 0
    %2750 = vmatpush1.bf16.msra.mxu0 %v2706
    %2751 = vmatprep.subr.bf16.mxu0 0
    %2752 = vmatpush1.bf16.msra.mxu0 %v2705
    %2753 = vmatprep.subr.bf16.mxu0 0
    %2754 = vmatpush2.bf16.msra.mxu0 %v2720
    %2755 = vmatprep.subr.bf16.mxu0 0
    %2756 = vmatpush2.bf16.msra.mxu0 %v2719
    %2757 = vmatprep.subr.bf16.mxu0 0
    %2758 = vmatpush2.bf16.msra.mxu0 %v2718
    %2759 = vmatprep.subr.bf16.mxu0 0
    %2760 = vmatpush2.bf16.msra.mxu0 %v2717
    %2761 = vmatprep.subr.bf16.mxu0 0
    %2762 = vmatpush2.bf16.msra.mxu0 %v2716
    %2763 = vmatprep.subr.bf16.mxu0 0
    %2764 = vmatpush2.bf16.msra.mxu0 %v2715
    %2765 = vmatprep.subr.bf16.mxu0 0
    %2766 = vmatpush2.bf16.msra.mxu0 %v2714
    %2767 = vmatprep.subr.bf16.mxu0 0
    %2768 = vmatpush2.bf16.msra.mxu0 %v2713
    %2769 = vmatprep.mubr.bf16.mxu0 %v2587
    %2770 = vmatmul.mubr.bf16.gmra.mxu0 %v2586
    %v2771 = vpop.f32.mrf.mxu0
    %v2772 = vadd.f32 %v2639, %v2771
    %v2773 = vpop.f32.mrf.mxu0
    %v2774 = vpop.f32.mrf.mxu0
    %v2775 = vadd.f32 %v2639, %v2774
    %v2776 = vpop.f32.mrf.mxu0
    %2777 = vmatprep.mubr.bf16.mxu0 %v2589
    %2778 = vmatmul.mubr.bf16.gmra.mxu0 %v2588
    %v2779 = vpop.f32.mrf.mxu0
    %v2780 = vadd.f32 %v2639, %v2779
    %v2781 = vpop.f32.mrf.mxu0
    %v2782 = vpop.f32.mrf.mxu0
    %v2783 = vadd.f32 %v2639, %v2782
    %v2784 = vpop.f32.mrf.mxu0
    %2785 = vmatprep.mubr.bf16.mxu0 %v2591
    %2786 = vmatmul.mubr.bf16.gmra.mxu0 %v2590
    %v2787 = vpop.f32.mrf.mxu0
    %v2788 = vadd.f32 %v2639, %v2787
    %v2789 = vpop.f32.mrf.mxu0
    %v2790 = vpop.f32.mrf.mxu0
    %v2791 = vadd.f32 %v2639, %v2790
    %v2792 = vpop.f32.mrf.mxu0
    %2793 = vmatprep.mubr.bf16.mxu0 %v2593
    %2794 = vmatmul.mubr.bf16.gmra.mxu0 %v2592
    %v2795 = vpop.f32.mrf.mxu0
    %v2796 = vadd.f32 %v2639, %v2795
    %v2797 = vpop.f32.mrf.mxu0
    %v2798 = vpop.f32.mrf.mxu0
    %v2799 = vadd.f32 %v2639, %v2798
    %v2800 = vpop.f32.mrf.mxu0
    %2801 = vmatprep.mubr.bf16.mxu0 %v2595
    %2802 = vmatmul.mubr.bf16.gmra.mxu0 %v2594
    %v2803 = vpop.f32.mrf.mxu0
    %v2804 = vadd.f32 %v2639, %v2803
    %v2805 = vpop.f32.mrf.mxu0
    %v2806 = vpop.f32.mrf.mxu0
    %v2807 = vadd.f32 %v2639, %v2806
    %v2808 = vpop.f32.mrf.mxu0
    %2809 = vmatprep.mubr.bf16.mxu0 %v2597
    %2810 = vmatmul.mubr.bf16.gmra.mxu0 %v2596
    %v2811 = vpop.f32.mrf.mxu0
    %v2812 = vadd.f32 %v2639, %v2811
    %v2813 = vpop.f32.mrf.mxu0
    %v2814 = vpop.f32.mrf.mxu0
    %v2815 = vadd.f32 %v2639, %v2814
    %v2816 = vpop.f32.mrf.mxu0
    %2817 = vmatprep.mubr.bf16.mxu0 %v2599
    %2818 = vmatmul.mubr.bf16.gmra.mxu0 %v2598
    %v2819 = vpop.f32.mrf.mxu0
    %v2820 = vadd.f32 %v2639, %v2819
    %v2821 = vpop.f32.mrf.mxu0
    %v2822 = vpop.f32.mrf.mxu0
    %v2823 = vadd.f32 %v2639, %v2822
    %v2824 = vpop.f32.mrf.mxu0
    %2825 = vmatprep.mubr.bf16.mxu0 %v2601
    %2826 = vmatmul.mubr.bf16.gmra.mxu0 %v2600
    %v2827 = vpop.f32.mrf.mxu0
    %v2828 = vadd.f32 %v2639, %v2827
    %v2829 = vpop.f32.mrf.mxu0
    %v2830 = vpop.f32.mrf.mxu0
    %v2831 = vadd.f32 %v2639, %v2830
    %v2832 = vpop.f32.mrf.mxu0
    %2833 = vdwg.mxu0
    %v2834 = vmax.f32 %v2772, 0.0
    %v2835 = vmax.f32 %v2775, 0.0
    %v2836 = vmax.f32 %v2780, 0.0
    %v2837 = vmax.f32 %v2783, 0.0
    %v2838 = vmax.f32 %v2788, 0.0
    %v2839 = vmax.f32 %v2791, 0.0
    %v2840 = vmax.f32 %v2796, 0.0
    %v2841 = vmax.f32 %v2799, 0.0
    %v2842 = vmax.f32 %v2804, 0.0
    %v2843 = vmax.f32 %v2807, 0.0
    %v2844 = vmax.f32 %v2812, 0.0
    %v2845 = vmax.f32 %v2815, 0.0
    %v2846 = vmax.f32 %v2820, 0.0
    %v2847 = vmax.f32 %v2823, 0.0
    %v2848 = vmax.f32 %v2828, 0.0
    %v2849 = vmax.f32 %v2831, 0.0
    %v2850 = vpack.c.bf16 %v2835, %v2834
    %v2851 = vpack.c.bf16 %v2837, %v2836
    %v2852 = vpack.c.bf16 %v2839, %v2838
    %v2853 = vpack.c.bf16 %v2841, %v2840
    %v2854 = vpack.c.bf16 %v2843, %v2842
    %v2855 = vpack.c.bf16 %v2845, %v2844
    %v2856 = vpack.c.bf16 %v2847, %v2846
    %v2857 = vpack.c.bf16 %v2849, %v2848
    %v2858 = vld [vmem:[#allocation14] sm:$0xf]
    %v2859 = vld [vmem:[#allocation15] sm:$0x1]
    %v2861 = vlaneseq
    %v2862 = vshrl.u32 %v2861, 7
    %v2863 = vsub.s32 0, %v2862
    %v2864 = vrot.slane %v2859, %v2863
    %v2882 = vunpack.c.l.b16 %v347
    %v2883 = vunpack.c.l.b16 %v348
    %v2884 = vunpack.c.l.b16 %v349
    %v2885 = vunpack.c.l.b16 %v350
    %v2886 = vunpack.c.l.b16 %v351
    %v2887 = vunpack.c.l.b16 %v352
    %v2888 = vunpack.c.l.b16 %v353
    %v2889 = vunpack.c.l.b16 %v354
    %v2890 = vunpack.c.l.b16 %v355
    %v2891 = vunpack.c.l.b16 %v356
    %v2892 = vunpack.c.l.b16 %v357
    %v2893 = vunpack.c.l.b16 %v358
    %v2894 = vunpack.c.l.b16 %v359
    %v2895 = vunpack.c.l.b16 %v360
    %v2896 = vunpack.c.l.b16 %v361
    %v2897 = vunpack.c.l.b16 %v362
    %v2898 = vpack.c.b16 %v2883, %v2882
    %v2899 = vpack.c.b16 %v2885, %v2884
    %v2900 = vpack.c.b16 %v2887, %v2886
    %v2901 = vpack.c.b16 %v2889, %v2888
    %v2902 = vpack.c.b16 %v2891, %v2890
    %v2903 = vpack.c.b16 %v2893, %v2892
    %v2904 = vpack.c.b16 %v2895, %v2894
    %v2905 = vpack.c.b16 %v2897, %v2896
    %vm2906 = vcmask 64512
    %v2908 = vsel %vm2906, %v2898, 0
    %v2911 = vsel %vm2906, %v2899, 0
    %v2914 = vsel %vm2906, %v2900, 0
    %v2917 = vsel %vm2906, %v2901, 0
    %v2920 = vsel %vm2906, %v2902, 0
    %v2923 = vsel %vm2906, %v2903, 0
    %v2926 = vsel %vm2906, %v2904, 0
    %v2929 = vsel %vm2906, %v2905, 0
    %vm2931 = vcmask 1043456
    %v2933 = vsel %vm2931, %v2858, 0
    %2935 = vmatprep.subr.bf16.mxu0 0
    %2936 = vmatpush1.bf16.msra.mxu0 0
    %2937 = vmatprep.subr.bf16.mxu0 0
    %2938 = vmatpush1.bf16.msra.mxu0 0
    %2939 = vmatprep.subr.bf16.mxu0 0
    %2940 = vmatpush1.bf16.msra.mxu0 0
    %2941 = vmatprep.subr.bf16.mxu0 0
    %2942 = vmatpush1.bf16.msra.mxu0 0
    %2943 = vmatprep.subr.bf16.mxu0 0
    %2944 = vmatpush1.bf16.msra.mxu0 0
    %2945 = vmatprep.subr.bf16.mxu0 0
    %2946 = vmatpush1.bf16.msra.mxu0 0
    %2947 = vmatprep.subr.bf16.mxu0 0
    %2948 = vmatpush1.bf16.msra.mxu0 0
    %2949 = vmatprep.subr.bf16.mxu0 0
    %2950 = vmatpush1.bf16.msra.mxu0 %v2933
    %2951 = vmatprep.subr.bf16.mxu0 0
    %2952 = vmatpush2.bf16.msra.mxu0 0
    %2953 = vmatprep.subr.bf16.mxu0 0
    %2954 = vmatpush2.bf16.msra.mxu0 0
    %2955 = vmatprep.subr.bf16.mxu0 0
    %2956 = vmatpush2.bf16.msra.mxu0 0
    %2957 = vmatprep.subr.bf16.mxu0 0
    %2958 = vmatpush2.bf16.msra.mxu0 0
    %2959 = vmatprep.subr.bf16.mxu0 0
    %2960 = vmatpush2.bf16.msra.mxu0 0
    %2961 = vmatprep.subr.bf16.mxu0 0
    %2962 = vmatpush2.bf16.msra.mxu0 0
    %2963 = vmatprep.subr.bf16.mxu0 0
    %2964 = vmatpush2.bf16.msra.mxu0 0
    %2965 = vmatprep.subr.bf16.mxu0 0
    %2966 = vmatpush2.bf16.msra.mxu0 0
    %2967 = vmatprep.mubr.bf16.mxu0 0
    %2968 = vmatmul.mubr.bf16.gmra.mxu0 %v2908
    %v2969 = vpop.f32.mrf.mxu0
    %v2970 = vadd.f32 %v2864, %v2969
    %v2971 = vpop.f32.mrf.mxu0
    %v2972 = vpop.f32.mrf.mxu0
    %v2973 = vadd.f32 %v2864, %v2972
    %v2974 = vpop.f32.mrf.mxu0
    %2975 = vmatprep.mubr.bf16.mxu0 0
    %2976 = vmatmul.mubr.bf16.gmra.mxu0 %v2911
    %v2977 = vpop.f32.mrf.mxu0
    %v2978 = vadd.f32 %v2864, %v2977
    %v2979 = vpop.f32.mrf.mxu0
    %v2980 = vpop.f32.mrf.mxu0
    %v2981 = vadd.f32 %v2864, %v2980
    %v2982 = vpop.f32.mrf.mxu0
    %2983 = vmatprep.mubr.bf16.mxu0 0
    %2984 = vmatmul.mubr.bf16.gmra.mxu0 %v2914
    %v2985 = vpop.f32.mrf.mxu0
    %v2986 = vadd.f32 %v2864, %v2985
    %v2987 = vpop.f32.mrf.mxu0
    %v2988 = vpop.f32.mrf.mxu0
    %v2989 = vadd.f32 %v2864, %v2988
    %v2990 = vpop.f32.mrf.mxu0
    %2991 = vmatprep.mubr.bf16.mxu0 0
    %2992 = vmatmul.mubr.bf16.gmra.mxu0 %v2917
    %v2993 = vpop.f32.mrf.mxu0
    %v2994 = vadd.f32 %v2864, %v2993
    %v2995 = vpop.f32.mrf.mxu0
    %v2996 = vpop.f32.mrf.mxu0
    %v2997 = vadd.f32 %v2864, %v2996
    %v2998 = vpop.f32.mrf.mxu0
    %2999 = vmatprep.mubr.bf16.mxu0 0
    %3000 = vmatmul.mubr.bf16.gmra.mxu0 %v2920
    %v3001 = vpop.f32.mrf.mxu0
    %v3002 = vadd.f32 %v2864, %v3001
    %v3003 = vpop.f32.mrf.mxu0
    %v3004 = vpop.f32.mrf.mxu0
    %v3005 = vadd.f32 %v2864, %v3004
    %v3006 = vpop.f32.mrf.mxu0
    %3007 = vmatprep.mubr.bf16.mxu0 0
    %3008 = vmatmul.mubr.bf16.gmra.mxu0 %v2923
    %v3009 = vpop.f32.mrf.mxu0
    %v3010 = vadd.f32 %v2864, %v3009
    %v3011 = vpop.f32.mrf.mxu0
    %v3012 = vpop.f32.mrf.mxu0
    %v3013 = vadd.f32 %v2864, %v3012
    %v3014 = vpop.f32.mrf.mxu0
    %3015 = vmatprep.mubr.bf16.mxu0 0
    %3016 = vmatmul.mubr.bf16.gmra.mxu0 %v2926
    %v3017 = vpop.f32.mrf.mxu0
    %v3018 = vadd.f32 %v2864, %v3017
    %v3019 = vpop.f32.mrf.mxu0
    %v3020 = vpop.f32.mrf.mxu0
    %v3021 = vadd.f32 %v2864, %v3020
    %v3022 = vpop.f32.mrf.mxu0
    %3023 = vmatprep.mubr.bf16.mxu0 0
    %3024 = vmatmul.mubr.bf16.gmra.mxu0 %v2929
    %v3025 = vpop.f32.mrf.mxu0
    %v3026 = vadd.f32 %v2864, %v3025
    %v3027 = vpop.f32.mrf.mxu0
    %v3028 = vpop.f32.mrf.mxu0
    %v3029 = vadd.f32 %v2864, %v3028
    %v3030 = vpop.f32.mrf.mxu0
    %3031 = vdwg.mxu0
    %v3032 = vmax.f32 %v2970, 0.0
    %v3033 = vmax.f32 %v2973, 0.0
    %v3034 = vmax.f32 %v2978, 0.0
    %v3035 = vmax.f32 %v2981, 0.0
    %v3036 = vmax.f32 %v2986, 0.0
    %v3037 = vmax.f32 %v2989, 0.0
    %v3038 = vmax.f32 %v2994, 0.0
    %v3039 = vmax.f32 %v2997, 0.0
    %v3040 = vmax.f32 %v3002, 0.0
    %v3041 = vmax.f32 %v3005, 0.0
    %v3042 = vmax.f32 %v3010, 0.0
    %v3043 = vmax.f32 %v3013, 0.0
    %v3044 = vmax.f32 %v3018, 0.0
    %v3045 = vmax.f32 %v3021, 0.0
    %v3046 = vmax.f32 %v3026, 0.0
    %v3047 = vmax.f32 %v3029, 0.0
    %v3048 = vpack.c.bf16 %v3033, %v3032
    %v3049 = vpack.c.bf16 %v3035, %v3034
    %v3050 = vpack.c.bf16 %v3037, %v3036
    %v3051 = vpack.c.bf16 %v3039, %v3038
    %v3052 = vpack.c.bf16 %v3041, %v3040
    %v3053 = vpack.c.bf16 %v3043, %v3042
    %v3054 = vpack.c.bf16 %v3045, %v3044
    %v3055 = vpack.c.bf16 %v3047, %v3046
    %v3056 = vld [vmem:[%s31] sm:$0xf]
    %v3057 = vld [vmem:[%s31 + $0x4] sm:$0xf]
    %v3058 = vld [vmem:[%s31 + $0x8] sm:$0xf]
    %v3059 = vld [vmem:[%s31 + $0xc] sm:$0xf]
    %v3060 = vld [vmem:[%s31 + $0x10] sm:$0xf]
    %v3061 = vld [vmem:[%s31 + $0x14] sm:$0xf]
    %v3062 = vld [vmem:[%s31 + $0x18] sm:$0xf]
    %v3063 = vld [vmem:[%s31 + $0x1c] sm:$0xf]
    %v3064 = vld [vmem:[%s31 + $0x20] sm:$0xf]
    %v3065 = vld [vmem:[%s31 + $0x24] sm:$0xf]
    %v3066 = vld [vmem:[%s31 + $0x28] sm:$0xf]
    %v3067 = vld [vmem:[%s31 + $0x2c] sm:$0xf]
    %v3068 = vld [vmem:[%s31 + $0x30] sm:$0xf]
    %v3069 = vld [vmem:[%s31 + $0x34] sm:$0xf]
    %v3070 = vld [vmem:[%s31 + $0x38] sm:$0xf]
    %v3071 = vld [vmem:[%s31 + $0x3c] sm:$0xf]
    %v3072 = vld [vmem:[#allocation17] sm:$0x1]
    %v3074 = vlaneseq
    %v3075 = vshrl.u32 %v3074, 7
    %v3076 = vsub.s32 0, %v3075
    %v3077 = vrot.slane %v3072, %v3076
    %v3095 = vunpack.c.l.b16 %v3056
    %v3096 = vunpack.c.l.b16 %v3057
    %v3097 = vunpack.c.l.b16 %v3058
    %v3098 = vunpack.c.l.b16 %v3059
    %v3099 = vunpack.c.l.b16 %v3060
    %v3100 = vunpack.c.l.b16 %v3061
    %v3101 = vunpack.c.l.b16 %v3062
    %v3102 = vunpack.c.l.b16 %v3063
    %v3103 = vunpack.c.l.b16 %v3064
    %v3104 = vunpack.c.l.b16 %v3065
    %v3105 = vunpack.c.l.b16 %v3066
    %v3106 = vunpack.c.l.b16 %v3067
    %v3107 = vunpack.c.l.b16 %v3068
    %v3108 = vunpack.c.l.b16 %v3069
    %v3109 = vunpack.c.l.b16 %v3070
    %v3110 = vunpack.c.l.b16 %v3071
    %v3111 = vpack.c.b16 %v3096, %v3095
    %v3112 = vpack.c.b16 %v3098, %v3097
    %v3113 = vpack.c.b16 %v3100, %v3099
    %v3114 = vpack.c.b16 %v3102, %v3101
    %v3115 = vpack.c.b16 %v3104, %v3103
    %v3116 = vpack.c.b16 %v3106, %v3105
    %v3117 = vpack.c.b16 %v3108, %v3107
    %v3118 = vpack.c.b16 %v3110, %v3109
    %3127 = vmatprep.subr.bf16.mxu0 0
    %3128 = vmatpush1.bf16.msra.mxu0 %v3118
    %3129 = vmatprep.subr.bf16.mxu0 0
    %3130 = vmatpush1.bf16.msra.mxu0 %v3117
    %3131 = vmatprep.subr.bf16.mxu0 0
    %3132 = vmatpush1.bf16.msra.mxu0 %v3116
    %3133 = vmatprep.subr.bf16.mxu0 0
    %3134 = vmatpush1.bf16.msra.mxu0 %v3115
    %3135 = vmatprep.subr.bf16.mxu0 0
    %3136 = vmatpush1.bf16.msra.mxu0 %v3114
    %3137 = vmatprep.subr.bf16.mxu0 0
    %3138 = vmatpush1.bf16.msra.mxu0 %v3113
    %3139 = vmatprep.subr.bf16.mxu0 0
    %3140 = vmatpush1.bf16.msra.mxu0 %v3112
    %3141 = vmatprep.subr.bf16.mxu0 0
    %3142 = vmatpush1.bf16.msra.mxu0 %v3111
    %3143 = vmatprep.subr.bf16.mxu0 0
    %3144 = vmatpush2.bf16.msra.mxu0 0
    %3145 = vmatprep.subr.bf16.mxu0 0
    %3146 = vmatpush2.bf16.msra.mxu0 0
    %3147 = vmatprep.subr.bf16.mxu0 0
    %3148 = vmatpush2.bf16.msra.mxu0 0
    %3149 = vmatprep.subr.bf16.mxu0 0
    %3150 = vmatpush2.bf16.msra.mxu0 0
    %3151 = vmatprep.subr.bf16.mxu0 0
    %3152 = vmatpush2.bf16.msra.mxu0 0
    %3153 = vmatprep.subr.bf16.mxu0 0
    %3154 = vmatpush2.bf16.msra.mxu0 0
    %3155 = vmatprep.subr.bf16.mxu0 0
    %3156 = vmatpush2.bf16.msra.mxu0 0
    %3157 = vmatprep.subr.bf16.mxu0 0
    %3158 = vmatpush2.bf16.msra.mxu0 0
    %3159 = vmatprep.mubr.bf16.mxu0 0
    %3160 = vmatmul.mubr.bf16.gmra.mxu0 %v3048
    %v3161 = vpop.f32.mrf.mxu0
    %v3162 = vadd.f32 %v3077, %v3161
    %v3163 = vpop.f32.mrf.mxu0
    %v3164 = vpop.f32.mrf.mxu0
    %v3165 = vadd.f32 %v3077, %v3164
    %v3166 = vpop.f32.mrf.mxu0
    %3167 = vmatprep.mubr.bf16.mxu0 0
    %3168 = vmatmul.mubr.bf16.gmra.mxu0 %v3049
    %v3169 = vpop.f32.mrf.mxu0
    %v3170 = vadd.f32 %v3077, %v3169
    %v3171 = vpop.f32.mrf.mxu0
    %v3172 = vpop.f32.mrf.mxu0
    %v3173 = vadd.f32 %v3077, %v3172
    %v3174 = vpop.f32.mrf.mxu0
    %3175 = vmatprep.mubr.bf16.mxu0 0
    %3176 = vmatmul.mubr.bf16.gmra.mxu0 %v3050
    %v3177 = vpop.f32.mrf.mxu0
    %v3178 = vadd.f32 %v3077, %v3177
    %v3179 = vpop.f32.mrf.mxu0
    %v3180 = vpop.f32.mrf.mxu0
    %v3181 = vadd.f32 %v3077, %v3180
    %v3182 = vpop.f32.mrf.mxu0
    %3183 = vmatprep.mubr.bf16.mxu0 0
    %3184 = vmatmul.mubr.bf16.gmra.mxu0 %v3051
    %v3185 = vpop.f32.mrf.mxu0
    %v3186 = vadd.f32 %v3077, %v3185
    %v3187 = vpop.f32.mrf.mxu0
    %v3188 = vpop.f32.mrf.mxu0
    %v3189 = vadd.f32 %v3077, %v3188
    %v3190 = vpop.f32.mrf.mxu0
    %3191 = vmatprep.mubr.bf16.mxu0 0
    %3192 = vmatmul.mubr.bf16.gmra.mxu0 %v3052
    %v3193 = vpop.f32.mrf.mxu0
    %v3194 = vadd.f32 %v3077, %v3193
    %v3195 = vpop.f32.mrf.mxu0
    %v3196 = vpop.f32.mrf.mxu0
    %v3197 = vadd.f32 %v3077, %v3196
    %v3198 = vpop.f32.mrf.mxu0
    %3199 = vmatprep.mubr.bf16.mxu0 0
    %3200 = vmatmul.mubr.bf16.gmra.mxu0 %v3053
    %v3201 = vpop.f32.mrf.mxu0
    %v3202 = vadd.f32 %v3077, %v3201
    %v3203 = vpop.f32.mrf.mxu0
    %v3204 = vpop.f32.mrf.mxu0
    %v3205 = vadd.f32 %v3077, %v3204
    %v3206 = vpop.f32.mrf.mxu0
    %3207 = vmatprep.mubr.bf16.mxu0 0
    %3208 = vmatmul.mubr.bf16.gmra.mxu0 %v3054
    %v3209 = vpop.f32.mrf.mxu0
    %v3210 = vadd.f32 %v3077, %v3209
    %v3211 = vpop.f32.mrf.mxu0
    %v3212 = vpop.f32.mrf.mxu0
    %v3213 = vadd.f32 %v3077, %v3212
    %v3214 = vpop.f32.mrf.mxu0
    %3215 = vmatprep.mubr.bf16.mxu0 0
    %3216 = vmatmul.mubr.bf16.gmra.mxu0 %v3055
    %v3217 = vpop.f32.mrf.mxu0
    %v3218 = vadd.f32 %v3077, %v3217
    %v3219 = vpop.f32.mrf.mxu0
    %v3220 = vpop.f32.mrf.mxu0
    %v3221 = vadd.f32 %v3077, %v3220
    %v3222 = vpop.f32.mrf.mxu0
    %3223 = vdwg.mxu0
    %v3224 = vmax.f32 %v3162, 0.0
    %v3225 = vmax.f32 %v3165, 0.0
    %v3226 = vmax.f32 %v3170, 0.0
    %v3227 = vmax.f32 %v3173, 0.0
    %v3228 = vmax.f32 %v3178, 0.0
    %v3229 = vmax.f32 %v3181, 0.0
    %v3230 = vmax.f32 %v3186, 0.0
    %v3231 = vmax.f32 %v3189, 0.0
    %v3232 = vmax.f32 %v3194, 0.0
    %v3233 = vmax.f32 %v3197, 0.0
    %v3234 = vmax.f32 %v3202, 0.0
    %v3235 = vmax.f32 %v3205, 0.0
    %v3236 = vmax.f32 %v3210, 0.0
    %v3237 = vmax.f32 %v3213, 0.0
    %v3238 = vmax.f32 %v3218, 0.0
    %v3239 = vmax.f32 %v3221, 0.0
    %v3240 = vpack.c.bf16 %v3225, %v3224
    %v3241 = vpack.c.bf16 %v3227, %v3226
    %v3242 = vpack.c.bf16 %v3229, %v3228
    %v3243 = vpack.c.bf16 %v3231, %v3230
    %v3244 = vpack.c.bf16 %v3233, %v3232
    %v3245 = vpack.c.bf16 %v3235, %v3234
    %v3246 = vpack.c.bf16 %v3237, %v3236
    %v3247 = vpack.c.bf16 %v3239, %v3238
    %v3248 = vld [vmem:[#allocation18] sm:$0xf]
    %v3249 = vld [vmem:[#allocation18 + $0x4] sm:$0xf]
    %v3250 = vld [vmem:[#allocation20] sm:$0x1]
    %v3252 = vlaneseq
    %v3253 = vshrl.u32 %v3252, 7
    %v3254 = vsub.s32 0, %v3253
    %v3255 = vrot.slane %v3250, %v3254
    %v3273 = vunpack.c.l.b16 %v363
    %v3274 = vunpack.c.l.b16 %v364
    %v3275 = vunpack.c.l.b16 %v365
    %v3276 = vunpack.c.l.b16 %v366
    %v3277 = vunpack.c.l.b16 %v367
    %v3278 = vunpack.c.l.b16 %v368
    %v3279 = vunpack.c.l.b16 %v369
    %v3280 = vunpack.c.l.b16 %v370
    %v3281 = vunpack.c.l.b16 %v371
    %v3282 = vunpack.c.l.b16 %v372
    %v3283 = vunpack.c.l.b16 %v373
    %v3284 = vunpack.c.l.b16 %v374
    %v3285 = vunpack.c.l.b16 %v375
    %v3286 = vunpack.c.l.b16 %v376
    %v3287 = vunpack.c.l.b16 %v377
    %v3288 = vunpack.c.l.b16 %v378
    %v3289 = vpack.c.b16 %v3274, %v3273
    %v3290 = vpack.c.b16 %v3276, %v3275
    %v3291 = vpack.c.b16 %v3278, %v3277
    %v3292 = vpack.c.b16 %v3280, %v3279
    %v3293 = vpack.c.b16 %v3282, %v3281
    %v3294 = vpack.c.b16 %v3284, %v3283
    %v3295 = vpack.c.b16 %v3286, %v3285
    %v3296 = vpack.c.b16 %v3288, %v3287
    %v3299 = vunpack.c.l.b16 %v3248
    %v3300 = vunpack.c.l.b16 %v3249
    %v3301 = vpack.c.b16 %v3300, %v3299
    %vm3303 = vcmask 130048
    %v3305 = vsel %vm3303, %v3289, 0
    %v3308 = vsel %vm3303, %v3290, 0
    %v3311 = vsel %vm3303, %v3291, 0
    %v3314 = vsel %vm3303, %v3292, 0
    %v3317 = vsel %vm3303, %v3293, 0
    %v3320 = vsel %vm3303, %v3294, 0
    %v3323 = vsel %vm3303, %v3295, 0
    %v3326 = vsel %vm3303, %v3296, 0
    %3328 = vmatprep.subr.bf16.mxu0 0
    %3329 = vmatpush1.bf16.msra.mxu0 0
    %3330 = vmatprep.subr.bf16.mxu0 0
    %3331 = vmatpush1.bf16.msra.mxu0 0
    %3332 = vmatprep.subr.bf16.mxu0 0
    %3333 = vmatpush1.bf16.msra.mxu0 0
    %3334 = vmatprep.subr.bf16.mxu0 0
    %3335 = vmatpush1.bf16.msra.mxu0 0
    %3336 = vmatprep.subr.bf16.mxu0 0
    %3337 = vmatpush1.bf16.msra.mxu0 0
    %3338 = vmatprep.subr.bf16.mxu0 0
    %3339 = vmatpush1.bf16.msra.mxu0 0
    %3340 = vmatprep.subr.bf16.mxu0 0
    %3341 = vmatpush1.bf16.msra.mxu0 0
    %3342 = vmatprep.subr.bf16.mxu0 0
    %3343 = vmatpush1.bf16.msra.mxu0 %v3301
    %3344 = vmatprep.subr.bf16.mxu0 0
    %3345 = vmatpush2.bf16.msra.mxu0 0
    %3346 = vmatprep.subr.bf16.mxu0 0
    %3347 = vmatpush2.bf16.msra.mxu0 0
    %3348 = vmatprep.subr.bf16.mxu0 0
    %3349 = vmatpush2.bf16.msra.mxu0 0
    %3350 = vmatprep.subr.bf16.mxu0 0
    %3351 = vmatpush2.bf16.msra.mxu0 0
    %3352 = vmatprep.subr.bf16.mxu0 0
    %3353 = vmatpush2.bf16.msra.mxu0 0
    %3354 = vmatprep.subr.bf16.mxu0 0
    %3355 = vmatpush2.bf16.msra.mxu0 0
    %3356 = vmatprep.subr.bf16.mxu0 0
    %3357 = vmatpush2.bf16.msra.mxu0 0
    %3358 = vmatprep.subr.bf16.mxu0 0
    %3359 = vmatpush2.bf16.msra.mxu0 0
    %3360 = vmatprep.mubr.bf16.mxu0 0
    %3361 = vmatmul.mubr.bf16.gmra.mxu0 %v3305
    %v3362 = vpop.f32.mrf.mxu0
    %v3363 = vadd.f32 %v3255, %v3362
    %v3364 = vpop.f32.mrf.mxu0
    %v3365 = vpop.f32.mrf.mxu0
    %v3366 = vadd.f32 %v3255, %v3365
    %v3367 = vpop.f32.mrf.mxu0
    %3368 = vmatprep.mubr.bf16.mxu0 0
    %3369 = vmatmul.mubr.bf16.gmra.mxu0 %v3308
    %v3370 = vpop.f32.mrf.mxu0
    %v3371 = vadd.f32 %v3255, %v3370
    %v3372 = vpop.f32.mrf.mxu0
    %v3373 = vpop.f32.mrf.mxu0
    %v3374 = vadd.f32 %v3255, %v3373
    %v3375 = vpop.f32.mrf.mxu0
    %3376 = vmatprep.mubr.bf16.mxu0 0
    %3377 = vmatmul.mubr.bf16.gmra.mxu0 %v3311
    %v3378 = vpop.f32.mrf.mxu0
    %v3379 = vadd.f32 %v3255, %v3378
    %v3380 = vpop.f32.mrf.mxu0
    %v3381 = vpop.f32.mrf.mxu0
    %v3382 = vadd.f32 %v3255, %v3381
    %v3383 = vpop.f32.mrf.mxu0
    %3384 = vmatprep.mubr.bf16.mxu0 0
    %3385 = vmatmul.mubr.bf16.gmra.mxu0 %v3314
    %v3386 = vpop.f32.mrf.mxu0
    %v3387 = vadd.f32 %v3255, %v3386
    %v3388 = vpop.f32.mrf.mxu0
    %v3389 = vpop.f32.mrf.mxu0
    %v3390 = vadd.f32 %v3255, %v3389
    %v3391 = vpop.f32.mrf.mxu0
    %3392 = vmatprep.mubr.bf16.mxu0 0
    %3393 = vmatmul.mubr.bf16.gmra.mxu0 %v3317
    %v3394 = vpop.f32.mrf.mxu0
    %v3395 = vadd.f32 %v3255, %v3394
    %v3396 = vpop.f32.mrf.mxu0
    %v3397 = vpop.f32.mrf.mxu0
    %v3398 = vadd.f32 %v3255, %v3397
    %v3399 = vpop.f32.mrf.mxu0
    %3400 = vmatprep.mubr.bf16.mxu0 0
    %3401 = vmatmul.mubr.bf16.gmra.mxu0 %v3320
    %v3402 = vpop.f32.mrf.mxu0
    %v3403 = vadd.f32 %v3255, %v3402
    %v3404 = vpop.f32.mrf.mxu0
    %v3405 = vpop.f32.mrf.mxu0
    %v3406 = vadd.f32 %v3255, %v3405
    %v3407 = vpop.f32.mrf.mxu0
    %3408 = vmatprep.mubr.bf16.mxu0 0
    %3409 = vmatmul.mubr.bf16.gmra.mxu0 %v3323
    %v3410 = vpop.f32.mrf.mxu0
    %v3411 = vadd.f32 %v3255, %v3410
    %v3412 = vpop.f32.mrf.mxu0
    %v3413 = vpop.f32.mrf.mxu0
    %v3414 = vadd.f32 %v3255, %v3413
    %v3415 = vpop.f32.mrf.mxu0
    %3416 = vmatprep.mubr.bf16.mxu0 0
    %3417 = vmatmul.mubr.bf16.gmra.mxu0 %v3326
    %v3418 = vpop.f32.mrf.mxu0
    %v3419 = vadd.f32 %v3255, %v3418
    %v3420 = vpop.f32.mrf.mxu0
    %v3421 = vpop.f32.mrf.mxu0
    %v3422 = vadd.f32 %v3255, %v3421
    %v3423 = vpop.f32.mrf.mxu0
    %3424 = vdwg.mxu0
    %v3425 = vmax.f32 %v3363, 0.0
    %v3426 = vmax.f32 %v3366, 0.0
    %v3427 = vmax.f32 %v3371, 0.0
    %v3428 = vmax.f32 %v3374, 0.0
    %v3429 = vmax.f32 %v3379, 0.0
    %v3430 = vmax.f32 %v3382, 0.0
    %v3431 = vmax.f32 %v3387, 0.0
    %v3432 = vmax.f32 %v3390, 0.0
    %v3433 = vmax.f32 %v3395, 0.0
    %v3434 = vmax.f32 %v3398, 0.0
    %v3435 = vmax.f32 %v3403, 0.0
    %v3436 = vmax.f32 %v3406, 0.0
    %v3437 = vmax.f32 %v3411, 0.0
    %v3438 = vmax.f32 %v3414, 0.0
    %v3439 = vmax.f32 %v3419, 0.0
    %v3440 = vmax.f32 %v3422, 0.0
    %v3441 = vpack.c.bf16 %v3426, %v3425
    %v3442 = vpack.c.bf16 %v3428, %v3427
    %v3443 = vpack.c.bf16 %v3430, %v3429
    %v3444 = vpack.c.bf16 %v3432, %v3431
    %v3445 = vpack.c.bf16 %v3434, %v3433
    %v3446 = vpack.c.bf16 %v3436, %v3435
    %v3447 = vpack.c.bf16 %v3438, %v3437
    %v3448 = vpack.c.bf16 %v3440, %v3439
    %v3449 = vld [vmem:[%s39] sm:$0xf]
    %v3450 = vld [vmem:[%s39 + $0x4] sm:$0xf]
    %v3451 = vld [vmem:[%s39 + $0x8] sm:$0xf]
    %v3452 = vld [vmem:[%s39 + $0xc] sm:$0xf]
    %v3453 = vld [vmem:[%s39 + $0x10] sm:$0xf]
    %v3454 = vld [vmem:[%s39 + $0x14] sm:$0xf]
    %v3455 = vld [vmem:[%s39 + $0x18] sm:$0xf]
    %v3456 = vld [vmem:[%s39 + $0x1c] sm:$0xf]
    %v3457 = vld [vmem:[#allocation21] sm:$0x1]
    %v3459 = vlaneseq
    %v3460 = vshrl.u32 %v3459, 7
    %v3461 = vsub.s32 0, %v3460
    %v3462 = vrot.slane %v3457, %v3461
    %v3472 = vunpack.c.l.b16 %v3449
    %v3473 = vunpack.c.l.b16 %v3450
    %v3474 = vunpack.c.l.b16 %v3451
    %v3475 = vunpack.c.l.b16 %v3452
    %v3476 = vunpack.c.l.b16 %v3453
    %v3477 = vunpack.c.l.b16 %v3454
    %v3478 = vunpack.c.l.b16 %v3455
    %v3479 = vunpack.c.l.b16 %v3456
    %v3480 = vpack.c.b16 %v3473, %v3472
    %v3481 = vpack.c.b16 %v3475, %v3474
    %v3482 = vpack.c.b16 %v3477, %v3476
    %v3483 = vpack.c.b16 %v3479, %v3478
    %v3489 = vsel %vm653, %v3441, 0
    %v3492 = vsel %vm653, %v3442, 0
    %v3495 = vsel %vm653, %v3443, 0
    %v3498 = vsel %vm653, %v3444, 0
    %v3501 = vsel %vm653, %v3445, 0
    %v3504 = vsel %vm653, %v3446, 0
    %v3507 = vsel %vm653, %v3447, 0
    %v3510 = vsel %vm653, %v3448, 0
    %3512 = vmatprep.subr.bf16.mxu0 0
    %3513 = vmatpush1.bf16.msra.mxu0 0
    %3514 = vmatprep.subr.bf16.mxu0 0
    %3515 = vmatpush1.bf16.msra.mxu0 0
    %3516 = vmatprep.subr.bf16.mxu0 0
    %3517 = vmatpush1.bf16.msra.mxu0 0
    %3518 = vmatprep.subr.bf16.mxu0 0
    %3519 = vmatpush1.bf16.msra.mxu0 0
    %3520 = vmatprep.subr.bf16.mxu0 0
    %3521 = vmatpush1.bf16.msra.mxu0 %v3483
    %3522 = vmatprep.subr.bf16.mxu0 0
    %3523 = vmatpush1.bf16.msra.mxu0 %v3482
    %3524 = vmatprep.subr.bf16.mxu0 0
    %3525 = vmatpush1.bf16.msra.mxu0 %v3481
    %3526 = vmatprep.subr.bf16.mxu0 0
    %3527 = vmatpush1.bf16.msra.mxu0 %v3480
    %3528 = vmatprep.subr.bf16.mxu0 0
    %3529 = vmatpush2.bf16.msra.mxu0 0
    %3530 = vmatprep.subr.bf16.mxu0 0
    %3531 = vmatpush2.bf16.msra.mxu0 0
    %3532 = vmatprep.subr.bf16.mxu0 0
    %3533 = vmatpush2.bf16.msra.mxu0 0
    %3534 = vmatprep.subr.bf16.mxu0 0
    %3535 = vmatpush2.bf16.msra.mxu0 0
    %3536 = vmatprep.subr.bf16.mxu0 0
    %3537 = vmatpush2.bf16.msra.mxu0 0
    %3538 = vmatprep.subr.bf16.mxu0 0
    %3539 = vmatpush2.bf16.msra.mxu0 0
    %3540 = vmatprep.subr.bf16.mxu0 0
    %3541 = vmatpush2.bf16.msra.mxu0 0
    %3542 = vmatprep.subr.bf16.mxu0 0
    %3543 = vmatpush2.bf16.msra.mxu0 0
    %3544 = vmatprep.mubr.bf16.mxu0 0
    %3545 = vmatmul.mubr.bf16.gmra.mxu0 %v3489
    %v3546 = vpop.f32.mrf.mxu0
    %v3547 = vadd.f32 %v3462, %v3546
    %v3548 = vpop.f32.mrf.mxu0
    %v3549 = vpop.f32.mrf.mxu0
    %v3550 = vadd.f32 %v3462, %v3549
    %v3551 = vpop.f32.mrf.mxu0
    %3552 = vmatprep.mubr.bf16.mxu0 0
    %3553 = vmatmul.mubr.bf16.gmra.mxu0 %v3492
    %v3554 = vpop.f32.mrf.mxu0
    %v3555 = vadd.f32 %v3462, %v3554
    %v3556 = vpop.f32.mrf.mxu0
    %v3557 = vpop.f32.mrf.mxu0
    %v3558 = vadd.f32 %v3462, %v3557
    %v3559 = vpop.f32.mrf.mxu0
    %3560 = vmatprep.mubr.bf16.mxu0 0
    %3561 = vmatmul.mubr.bf16.gmra.mxu0 %v3495
    %v3562 = vpop.f32.mrf.mxu0
    %v3563 = vadd.f32 %v3462, %v3562
    %v3564 = vpop.f32.mrf.mxu0
    %v3565 = vpop.f32.mrf.mxu0
    %v3566 = vadd.f32 %v3462, %v3565
    %v3567 = vpop.f32.mrf.mxu0
    %3568 = vmatprep.mubr.bf16.mxu0 0
    %3569 = vmatmul.mubr.bf16.gmra.mxu0 %v3498
    %v3570 = vpop.f32.mrf.mxu0
    %v3571 = vadd.f32 %v3462, %v3570
    %v3572 = vpop.f32.mrf.mxu0
    %v3573 = vpop.f32.mrf.mxu0
    %v3574 = vadd.f32 %v3462, %v3573
    %v3575 = vpop.f32.mrf.mxu0
    %3576 = vmatprep.mubr.bf16.mxu0 0
    %3577 = vmatmul.mubr.bf16.gmra.mxu0 %v3501
    %v3578 = vpop.f32.mrf.mxu0
    %v3579 = vadd.f32 %v3462, %v3578
    %v3580 = vpop.f32.mrf.mxu0
    %v3581 = vpop.f32.mrf.mxu0
    %v3582 = vadd.f32 %v3462, %v3581
    %v3583 = vpop.f32.mrf.mxu0
    %3584 = vmatprep.mubr.bf16.mxu0 0
    %3585 = vmatmul.mubr.bf16.gmra.mxu0 %v3504
    %v3586 = vpop.f32.mrf.mxu0
    %v3587 = vadd.f32 %v3462, %v3586
    %v3588 = vpop.f32.mrf.mxu0
    %v3589 = vpop.f32.mrf.mxu0
    %v3590 = vadd.f32 %v3462, %v3589
    %v3591 = vpop.f32.mrf.mxu0
    %3592 = vmatprep.mubr.bf16.mxu0 0
    %3593 = vmatmul.mubr.bf16.gmra.mxu0 %v3507
    %v3594 = vpop.f32.mrf.mxu0
    %v3595 = vadd.f32 %v3462, %v3594
    %v3596 = vpop.f32.mrf.mxu0
    %v3597 = vpop.f32.mrf.mxu0
    %v3598 = vadd.f32 %v3462, %v3597
    %v3599 = vpop.f32.mrf.mxu0
    %3600 = vmatprep.mubr.bf16.mxu0 0
    %3601 = vmatmul.mubr.bf16.gmra.mxu0 %v3510
    %v3602 = vpop.f32.mrf.mxu0
    %v3603 = vadd.f32 %v3462, %v3602
    %v3604 = vpop.f32.mrf.mxu0
    %v3605 = vpop.f32.mrf.mxu0
    %v3606 = vadd.f32 %v3462, %v3605
    %v3607 = vpop.f32.mrf.mxu0
    %3608 = vdwg.mxu0
    %v3609 = vmax.f32 %v3547, 0.0
    %v3610 = vmax.f32 %v3550, 0.0
    %v3611 = vmax.f32 %v3555, 0.0
    %v3612 = vmax.f32 %v3558, 0.0
    %v3613 = vmax.f32 %v3563, 0.0
    %v3614 = vmax.f32 %v3566, 0.0
    %v3615 = vmax.f32 %v3571, 0.0
    %v3616 = vmax.f32 %v3574, 0.0
    %v3617 = vmax.f32 %v3579, 0.0
    %v3618 = vmax.f32 %v3582, 0.0
    %v3619 = vmax.f32 %v3587, 0.0
    %v3620 = vmax.f32 %v3590, 0.0
    %v3621 = vmax.f32 %v3595, 0.0
    %v3622 = vmax.f32 %v3598, 0.0
    %v3623 = vmax.f32 %v3603, 0.0
    %v3624 = vmax.f32 %v3606, 0.0
    %v3625 = vpack.c.bf16 %v3610, %v3609
    %v3626 = vpack.c.bf16 %v3612, %v3611
    %v3627 = vpack.c.bf16 %v3614, %v3613
    %v3628 = vpack.c.bf16 %v3616, %v3615
    %v3629 = vpack.c.bf16 %v3618, %v3617
    %v3630 = vpack.c.bf16 %v3620, %v3619
    %v3631 = vpack.c.bf16 %v3622, %v3621
    %v3632 = vpack.c.bf16 %v3624, %v3623
    %v3633 = vld [vmem:[#allocation23] sm:$0xf]
    %v3634 = vld [vmem:[#allocation23 + $0x4] sm:$0xf]
    %v3635 = vld [vmem:[#allocation24] sm:$0xf]
    %v3637 = vsel %vm2906, %v3240, 0
    %v3640 = vsel %vm2906, %v3241, 0
    %v3643 = vsel %vm2906, %v3242, 0
    %v3646 = vsel %vm2906, %v3243, 0
    %v3649 = vsel %vm2906, %v3244, 0
    %v3652 = vsel %vm2906, %v3245, 0
    %v3655 = vsel %vm2906, %v3246, 0
    %v3658 = vsel %vm2906, %v3247, 0
    %v3661 = vsel %vm2931, %v3635, 0
    %3663 = vmatprep.subr.bf16.mxu0 0
    %3664 = vmatpush1.bf16.msra.mxu0 0
    %3665 = vmatprep.subr.bf16.mxu0 0
    %3666 = vmatpush1.bf16.msra.mxu0 0
    %3667 = vmatprep.subr.bf16.mxu0 0
    %3668 = vmatpush1.bf16.msra.mxu0 0
    %3669 = vmatprep.subr.bf16.mxu0 0
    %3670 = vmatpush1.bf16.msra.mxu0 0
    %3671 = vmatprep.subr.bf16.mxu0 0
    %3672 = vmatpush1.bf16.msra.mxu0 0
    %3673 = vmatprep.subr.bf16.mxu0 0
    %3674 = vmatpush1.bf16.msra.mxu0 0
    %3675 = vmatprep.subr.bf16.mxu0 0
    %3676 = vmatpush1.bf16.msra.mxu0 0
    %3677 = vmatprep.subr.bf16.mxu0 0
    %3678 = vmatpush1.bf16.msra.mxu0 %v3661
    %3679 = vmatprep.subr.bf16.mxu0 0
    %3680 = vmatpush2.bf16.msra.mxu0 0
    %3681 = vmatprep.subr.bf16.mxu0 0
    %3682 = vmatpush2.bf16.msra.mxu0 0
    %3683 = vmatprep.subr.bf16.mxu0 0
    %3684 = vmatpush2.bf16.msra.mxu0 0
    %3685 = vmatprep.subr.bf16.mxu0 0
    %3686 = vmatpush2.bf16.msra.mxu0 0
    %3687 = vmatprep.subr.bf16.mxu0 0
    %3688 = vmatpush2.bf16.msra.mxu0 0
    %3689 = vmatprep.subr.bf16.mxu0 0
    %3690 = vmatpush2.bf16.msra.mxu0 0
    %3691 = vmatprep.subr.bf16.mxu0 0
    %3692 = vmatpush2.bf16.msra.mxu0 0
    %3693 = vmatprep.subr.bf16.mxu0 0
    %3694 = vmatpush2.bf16.msra.mxu0 0
    %3695 = vmatprep.mubr.bf16.mxu0 0
    %3696 = vmatmul.mubr.bf16.gmra.mxu0 %v3637
    %v3697 = vpop.f32.mrf.mxu0
    %v3698 = vadd.f32 0.0, %v3697
    %v3699 = vpop.f32.mrf.mxu0
    %v3700 = vpop.f32.mrf.mxu0
    %v3701 = vadd.f32 0.0, %v3700
    %v3702 = vpop.f32.mrf.mxu0
    %3703 = vmatprep.mubr.bf16.mxu0 0
    %3704 = vmatmul.mubr.bf16.gmra.mxu0 %v3640
    %v3705 = vpop.f32.mrf.mxu0
    %v3706 = vadd.f32 0.0, %v3705
    %v3707 = vpop.f32.mrf.mxu0
    %v3708 = vpop.f32.mrf.mxu0
    %v3709 = vadd.f32 0.0, %v3708
    %v3710 = vpop.f32.mrf.mxu0
    %3711 = vmatprep.mubr.bf16.mxu0 0
    %3712 = vmatmul.mubr.bf16.gmra.mxu0 %v3643
    %v3713 = vpop.f32.mrf.mxu0
    %v3714 = vadd.f32 0.0, %v3713
    %v3715 = vpop.f32.mrf.mxu0
    %v3716 = vpop.f32.mrf.mxu0
    %v3717 = vadd.f32 0.0, %v3716
    %v3718 = vpop.f32.mrf.mxu0
    %3719 = vmatprep.mubr.bf16.mxu0 0
    %3720 = vmatmul.mubr.bf16.gmra.mxu0 %v3646
    %v3721 = vpop.f32.mrf.mxu0
    %v3722 = vadd.f32 0.0, %v3721
    %v3723 = vpop.f32.mrf.mxu0
    %v3724 = vpop.f32.mrf.mxu0
    %v3725 = vadd.f32 0.0, %v3724
    %v3726 = vpop.f32.mrf.mxu0
    %3727 = vmatprep.mubr.bf16.mxu0 0
    %3728 = vmatmul.mubr.bf16.gmra.mxu0 %v3649
    %v3729 = vpop.f32.mrf.mxu0
    %v3730 = vadd.f32 0.0, %v3729
    %v3731 = vpop.f32.mrf.mxu0
    %v3732 = vpop.f32.mrf.mxu0
    %v3733 = vadd.f32 0.0, %v3732
    %v3734 = vpop.f32.mrf.mxu0
    %3735 = vmatprep.mubr.bf16.mxu0 0
    %3736 = vmatmul.mubr.bf16.gmra.mxu0 %v3652
    %v3737 = vpop.f32.mrf.mxu0
    %v3738 = vadd.f32 0.0, %v3737
    %v3739 = vpop.f32.mrf.mxu0
    %v3740 = vpop.f32.mrf.mxu0
    %v3741 = vadd.f32 0.0, %v3740
    %v3742 = vpop.f32.mrf.mxu0
    %3743 = vmatprep.mubr.bf16.mxu0 0
    %3744 = vmatmul.mubr.bf16.gmra.mxu0 %v3655
    %v3745 = vpop.f32.mrf.mxu0
    %v3746 = vadd.f32 0.0, %v3745
    %v3747 = vpop.f32.mrf.mxu0
    %v3748 = vpop.f32.mrf.mxu0
    %v3749 = vadd.f32 0.0, %v3748
    %v3750 = vpop.f32.mrf.mxu0
    %3751 = vmatprep.mubr.bf16.mxu0 0
    %3752 = vmatmul.mubr.bf16.gmra.mxu0 %v3658
    %v3753 = vpop.f32.mrf.mxu0
    %v3754 = vadd.f32 0.0, %v3753
    %v3755 = vpop.f32.mrf.mxu0
    %v3756 = vpop.f32.mrf.mxu0
    %v3757 = vadd.f32 0.0, %v3756
    %v3758 = vpop.f32.mrf.mxu0
    %3759 = vdwg.mxu0
    %v3762 = vunpack.c.l.b16 %v3633
    %v3763 = vunpack.c.l.b16 %v3634
    %v3764 = vpack.c.b16 %v3763, %v3762
    %v3767 = vsel %vm3303, %v2850, 0
    %v3770 = vsel %vm3303, %v2851, 0
    %v3773 = vsel %vm3303, %v2852, 0
    %v3776 = vsel %vm3303, %v2853, 0
    %v3779 = vsel %vm3303, %v2854, 0
    %v3782 = vsel %vm3303, %v2855, 0
    %v3785 = vsel %vm3303, %v2856, 0
    %v3788 = vsel %vm3303, %v2857, 0
    %3790 = vmatprep.subr.bf16.mxu0 0
    %3791 = vmatpush1.bf16.msra.mxu0 0
    %3792 = vmatprep.subr.bf16.mxu0 0
    %3793 = vmatpush1.bf16.msra.mxu0 0
    %3794 = vmatprep.subr.bf16.mxu0 0
    %3795 = vmatpush1.bf16.msra.mxu0 0
    %3796 = vmatprep.subr.bf16.mxu0 0
    %3797 = vmatpush1.bf16.msra.mxu0 0
    %3798 = vmatprep.subr.bf16.mxu0 0
    %3799 = vmatpush1.bf16.msra.mxu0 0
    %3800 = vmatprep.subr.bf16.mxu0 0
    %3801 = vmatpush1.bf16.msra.mxu0 0
    %3802 = vmatprep.subr.bf16.mxu0 0
    %3803 = vmatpush1.bf16.msra.mxu0 0
    %3804 = vmatprep.subr.bf16.mxu0 0
    %3805 = vmatpush1.bf16.msra.mxu0 %v3764
    %3806 = vmatprep.subr.bf16.mxu0 0
    %3807 = vmatpush2.bf16.msra.mxu0 0
    %3808 = vmatprep.subr.bf16.mxu0 0
    %3809 = vmatpush2.bf16.msra.mxu0 0
    %3810 = vmatprep.subr.bf16.mxu0 0
    %3811 = vmatpush2.bf16.msra.mxu0 0
    %3812 = vmatprep.subr.bf16.mxu0 0
    %3813 = vmatpush2.bf16.msra.mxu0 0
    %3814 = vmatprep.subr.bf16.mxu0 0
    %3815 = vmatpush2.bf16.msra.mxu0 0
    %3816 = vmatprep.subr.bf16.mxu0 0
    %3817 = vmatpush2.bf16.msra.mxu0 0
    %3818 = vmatprep.subr.bf16.mxu0 0
    %3819 = vmatpush2.bf16.msra.mxu0 0
    %3820 = vmatprep.subr.bf16.mxu0 0
    %3821 = vmatpush2.bf16.msra.mxu0 0
    %3822 = vmatprep.mubr.bf16.mxu0 0
    %3823 = vmatmul.mubr.bf16.gmra.mxu0 %v3767
    %v3824 = vpop.f32.mrf.mxu0
    %v3825 = vadd.f32 %v3698, %v3824
    %v3826 = vpop.f32.mrf.mxu0
    %v3827 = vpop.f32.mrf.mxu0
    %v3828 = vadd.f32 %v3701, %v3827
    %v3829 = vpop.f32.mrf.mxu0
    %3830 = vmatprep.mubr.bf16.mxu0 0
    %3831 = vmatmul.mubr.bf16.gmra.mxu0 %v3770
    %v3832 = vpop.f32.mrf.mxu0
    %v3833 = vadd.f32 %v3706, %v3832
    %v3834 = vpop.f32.mrf.mxu0
    %v3835 = vpop.f32.mrf.mxu0
    %v3836 = vadd.f32 %v3709, %v3835
    %v3837 = vpop.f32.mrf.mxu0
    %3838 = vmatprep.mubr.bf16.mxu0 0
    %3839 = vmatmul.mubr.bf16.gmra.mxu0 %v3773
    %v3840 = vpop.f32.mrf.mxu0
    %v3841 = vadd.f32 %v3714, %v3840
    %v3842 = vpop.f32.mrf.mxu0
    %v3843 = vpop.f32.mrf.mxu0
    %v3844 = vadd.f32 %v3717, %v3843
    %v3845 = vpop.f32.mrf.mxu0
    %3846 = vmatprep.mubr.bf16.mxu0 0
    %3847 = vmatmul.mubr.bf16.gmra.mxu0 %v3776
    %v3848 = vpop.f32.mrf.mxu0
    %v3849 = vadd.f32 %v3722, %v3848
    %v3850 = vpop.f32.mrf.mxu0
    %v3851 = vpop.f32.mrf.mxu0
    %v3852 = vadd.f32 %v3725, %v3851
    %v3853 = vpop.f32.mrf.mxu0
    %3854 = vmatprep.mubr.bf16.mxu0 0
    %3855 = vmatmul.mubr.bf16.gmra.mxu0 %v3779
    %v3856 = vpop.f32.mrf.mxu0
    %v3857 = vadd.f32 %v3730, %v3856
    %v3858 = vpop.f32.mrf.mxu0
    %v3859 = vpop.f32.mrf.mxu0
    %v3860 = vadd.f32 %v3733, %v3859
    %v3861 = vpop.f32.mrf.mxu0
    %3862 = vmatprep.mubr.bf16.mxu0 0
    %3863 = vmatmul.mubr.bf16.gmra.mxu0 %v3782
    %v3864 = vpop.f32.mrf.mxu0
    %v3865 = vadd.f32 %v3738, %v3864
    %v3866 = vpop.f32.mrf.mxu0
    %v3867 = vpop.f32.mrf.mxu0
    %v3868 = vadd.f32 %v3741, %v3867
    %v3869 = vpop.f32.mrf.mxu0
    %3870 = vmatprep.mubr.bf16.mxu0 0
    %3871 = vmatmul.mubr.bf16.gmra.mxu0 %v3785
    %v3872 = vpop.f32.mrf.mxu0
    %v3873 = vadd.f32 %v3746, %v3872
    %v3874 = vpop.f32.mrf.mxu0
    %v3875 = vpop.f32.mrf.mxu0
    %v3876 = vadd.f32 %v3749, %v3875
    %v3877 = vpop.f32.mrf.mxu0
    %3878 = vmatprep.mubr.bf16.mxu0 0
    %3879 = vmatmul.mubr.bf16.gmra.mxu0 %v3788
    %v3880 = vpop.f32.mrf.mxu0
    %v3881 = vadd.f32 %v3754, %v3880
    %v3882 = vpop.f32.mrf.mxu0
    %v3883 = vpop.f32.mrf.mxu0
    %v3884 = vadd.f32 %v3757, %v3883
    %v3885 = vpop.f32.mrf.mxu0
    %3886 = vdwg.mxu0
    %v3887 = vld [vmem:[#allocation26] sm:$0xf]
    %v3889 = vsel %vm2906, %v3625, 0
    %v3892 = vsel %vm2906, %v3626, 0
    %v3895 = vsel %vm2906, %v3627, 0
    %v3898 = vsel %vm2906, %v3628, 0
    %v3901 = vsel %vm2906, %v3629, 0
    %v3904 = vsel %vm2906, %v3630, 0
    %v3907 = vsel %vm2906, %v3631, 0
    %v3910 = vsel %vm2906, %v3632, 0
    %v3913 = vsel %vm2931, %v3887, 0
    %3915 = vmatprep.subr.bf16.mxu0 0
    %3916 = vmatpush1.bf16.msra.mxu0 0
    %3917 = vmatprep.subr.bf16.mxu0 0
    %3918 = vmatpush1.bf16.msra.mxu0 0
    %3919 = vmatprep.subr.bf16.mxu0 0
    %3920 = vmatpush1.bf16.msra.mxu0 0
    %3921 = vmatprep.subr.bf16.mxu0 0
    %3922 = vmatpush1.bf16.msra.mxu0 0
    %3923 = vmatprep.subr.bf16.mxu0 0
    %3924 = vmatpush1.bf16.msra.mxu0 0
    %3925 = vmatprep.subr.bf16.mxu0 0
    %3926 = vmatpush1.bf16.msra.mxu0 0
    %3927 = vmatprep.subr.bf16.mxu0 0
    %3928 = vmatpush1.bf16.msra.mxu0 0
    %3929 = vmatprep.subr.bf16.mxu0 0
    %3930 = vmatpush1.bf16.msra.mxu0 %v3913
    %3931 = vmatprep.subr.bf16.mxu0 0
    %3932 = vmatpush2.bf16.msra.mxu0 0
    %3933 = vmatprep.subr.bf16.mxu0 0
    %3934 = vmatpush2.bf16.msra.mxu0 0
    %3935 = vmatprep.subr.bf16.mxu0 0
    %3936 = vmatpush2.bf16.msra.mxu0 0
    %3937 = vmatprep.subr.bf16.mxu0 0
    %3938 = vmatpush2.bf16.msra.mxu0 0
    %3939 = vmatprep.subr.bf16.mxu0 0
    %3940 = vmatpush2.bf16.msra.mxu0 0
    %3941 = vmatprep.subr.bf16.mxu0 0
    %3942 = vmatpush2.bf16.msra.mxu0 0
    %3943 = vmatprep.subr.bf16.mxu0 0
    %3944 = vmatpush2.bf16.msra.mxu0 0
    %3945 = vmatprep.subr.bf16.mxu0 0
    %3946 = vmatpush2.bf16.msra.mxu0 0
    %3947 = vmatprep.mubr.bf16.mxu0 0
    %3948 = vmatmul.mubr.bf16.gmra.mxu0 %v3889
    %v3949 = vpop.f32.mrf.mxu0
    %v3950 = vadd.f32 0.0, %v3949
    %v3951 = vpop.f32.mrf.mxu0
    %v3952 = vpop.f32.mrf.mxu0
    %v3953 = vadd.f32 0.0, %v3952
    %v3954 = vpop.f32.mrf.mxu0
    %3955 = vmatprep.mubr.bf16.mxu0 0
    %3956 = vmatmul.mubr.bf16.gmra.mxu0 %v3892
    %v3957 = vpop.f32.mrf.mxu0
    %v3958 = vadd.f32 0.0, %v3957
    %v3959 = vpop.f32.mrf.mxu0
    %v3960 = vpop.f32.mrf.mxu0
    %v3961 = vadd.f32 0.0, %v3960
    %v3962 = vpop.f32.mrf.mxu0
    %3963 = vmatprep.mubr.bf16.mxu0 0
    %3964 = vmatmul.mubr.bf16.gmra.mxu0 %v3895
    %v3965 = vpop.f32.mrf.mxu0
    %v3966 = vadd.f32 0.0, %v3965
    %v3967 = vpop.f32.mrf.mxu0
    %v3968 = vpop.f32.mrf.mxu0
    %v3969 = vadd.f32 0.0, %v3968
    %v3970 = vpop.f32.mrf.mxu0
    %3971 = vmatprep.mubr.bf16.mxu0 0
    %3972 = vmatmul.mubr.bf16.gmra.mxu0 %v3898
    %v3973 = vpop.f32.mrf.mxu0
    %v3974 = vadd.f32 0.0, %v3973
    %v3975 = vpop.f32.mrf.mxu0
    %v3976 = vpop.f32.mrf.mxu0
    %v3977 = vadd.f32 0.0, %v3976
    %v3978 = vpop.f32.mrf.mxu0
    %3979 = vmatprep.mubr.bf16.mxu0 0
    %3980 = vmatmul.mubr.bf16.gmra.mxu0 %v3901
    %v3981 = vpop.f32.mrf.mxu0
    %v3982 = vadd.f32 0.0, %v3981
    %v3983 = vpop.f32.mrf.mxu0
    %v3984 = vpop.f32.mrf.mxu0
    %v3985 = vadd.f32 0.0, %v3984
    %v3986 = vpop.f32.mrf.mxu0
    %3987 = vmatprep.mubr.bf16.mxu0 0
    %3988 = vmatmul.mubr.bf16.gmra.mxu0 %v3904
    %v3989 = vpop.f32.mrf.mxu0
    %v3990 = vadd.f32 0.0, %v3989
    %v3991 = vpop.f32.mrf.mxu0
    %v3992 = vpop.f32.mrf.mxu0
    %v3993 = vadd.f32 0.0, %v3992
    %v3994 = vpop.f32.mrf.mxu0
    %3995 = vmatprep.mubr.bf16.mxu0 0
    %3996 = vmatmul.mubr.bf16.gmra.mxu0 %v3907
    %v3997 = vpop.f32.mrf.mxu0
    %v3998 = vadd.f32 0.0, %v3997
    %v3999 = vpop.f32.mrf.mxu0
    %v4000 = vpop.f32.mrf.mxu0
    %v4001 = vadd.f32 0.0, %v4000
    %v4002 = vpop.f32.mrf.mxu0
    %4003 = vmatprep.mubr.bf16.mxu0 0
    %4004 = vmatmul.mubr.bf16.gmra.mxu0 %v3910
    %v4005 = vpop.f32.mrf.mxu0
    %v4006 = vadd.f32 0.0, %v4005
    %v4007 = vpop.f32.mrf.mxu0
    %v4008 = vpop.f32.mrf.mxu0
    %v4009 = vadd.f32 0.0, %v4008
    %v4010 = vpop.f32.mrf.mxu0
    %4011 = vdwg.mxu0
    %v4012 = vadd.f32 %v3825, %v3950
    %v4013 = vadd.f32 %v3828, %v3953
    %v4014 = vadd.f32 %v3833, %v3958
    %v4015 = vadd.f32 %v3836, %v3961
    %v4016 = vadd.f32 %v3841, %v3966
    %v4017 = vadd.f32 %v3844, %v3969
    %v4018 = vadd.f32 %v3849, %v3974
    %v4019 = vadd.f32 %v3852, %v3977
    %v4020 = vadd.f32 %v3857, %v3982
    %v4021 = vadd.f32 %v3860, %v3985
    %v4022 = vadd.f32 %v3865, %v3990
    %v4023 = vadd.f32 %v3868, %v3993
    %v4024 = vadd.f32 %v3873, %v3998
    %v4025 = vadd.f32 %v3876, %v4001
    %v4026 = vadd.f32 %v3881, %v4006
    %v4027 = vadd.f32 %v3884, %v4009
    %v4028 = vld [vmem:[%s49] sm:$0x1]
    %v4030 = vlaneseq
    %v4031 = vshrl.u32 %v4030, 7
    %v4032 = vsub.s32 0, %v4031
    %v4033 = vrot.slane %v4028, %v4032
    %v4035 = vadd.f32 %v4012, %v4033
    %v4036 = vadd.f32 %v4013, %v4033
    %v4037 = vadd.f32 %v4014, %v4033
    %v4038 = vadd.f32 %v4015, %v4033
    %v4039 = vadd.f32 %v4016, %v4033
    %v4040 = vadd.f32 %v4017, %v4033
    %v4041 = vadd.f32 %v4018, %v4033
    %v4042 = vadd.f32 %v4019, %v4033
    %v4043 = vadd.f32 %v4020, %v4033
    %v4044 = vadd.f32 %v4021, %v4033
    %v4045 = vadd.f32 %v4022, %v4033
    %v4046 = vadd.f32 %v4023, %v4033
    %v4047 = vadd.f32 %v4024, %v4033
    %v4048 = vadd.f32 %v4025, %v4033
    %v4049 = vadd.f32 %v4026, %v4033
    %v4050 = vadd.f32 %v4027, %v4033
    %4051 = vst [vmem:[#allocation2] sm:$0xff] %v4035
    %4052 = vst [vmem:[#allocation2 + $0x8] sm:$0xff] %v4036
    %4053 = vst [vmem:[#allocation2 + $0x10] sm:$0xff] %v4037
    %4054 = vst [vmem:[#allocation2 + $0x18] sm:$0xff] %v4038
    %4055 = vst [vmem:[#allocation2 + $0x20] sm:$0xff] %v4039
    %4056 = vst [vmem:[#allocation2 + $0x28] sm:$0xff] %v4040
    %4057 = vst [vmem:[#allocation2 + $0x30] sm:$0xff] %v4041
    %4058 = vst [vmem:[#allocation2 + $0x38] sm:$0xff] %v4042
    %4059 = vst [vmem:[#allocation2 + $0x40] sm:$0xff] %v4043
    %4060 = vst [vmem:[#allocation2 + $0x48] sm:$0xff] %v4044
    %4061 = vst [vmem:[#allocation2 + $0x50] sm:$0xff] %v4045
    %4062 = vst [vmem:[#allocation2 + $0x58] sm:$0xff] %v4046
    %4063 = vst [vmem:[#allocation2 + $0x60] sm:$0xff] %v4047
    %4064 = vst [vmem:[#allocation2 + $0x68] sm:$0xff] %v4048
    %4065 = vst [vmem:[#allocation2 + $0x70] sm:$0xff] %v4049
    %4066 = vst [vmem:[#allocation2 + $0x78] sm:$0xff] %v4050
    %v4067 = vld [vmem:[%s51] sm:$0xf]
    %v4068 = vld [vmem:[%s51 + $0x4] sm:$0xf]
    %v4069 = vld [vmem:[%s51 + $0x8] sm:$0xf]
    %v4070 = vld [vmem:[%s51 + $0xc] sm:$0xf]
    %v4071 = vld [vmem:[#allocation3] sm:$0xff]
    %v4072 = vld [vmem:[#allocation3 + $0x8] sm:$0xff]
    %v4073 = vld [vmem:[#allocation6] sm:$0xff]
    %v4074 = vld [vmem:[#allocation6 + $0x8] sm:$0xff]
    %v4075 = vld [vmem:[#allocation2] sm:$0xff]
    %v4076 = vld [vmem:[#allocation2 + $0x8] sm:$0xff]
    %v4077 = vpack.c.bf16 %v4072, %v4071
    %v4082 = vunpack.c.l.b16 %v4067
    %v4083 = vunpack.c.l.b16 %v4068
    %v4084 = vunpack.c.l.b16 %v4069
    %v4085 = vunpack.c.l.b16 %v4070
    %v4086 = vpack.c.b16 %v4083, %v4082
    %v4087 = vpack.c.b16 %v4085, %v4084
    %vm4090 = vcmask 261120
    %v4092 = vsel %vm4090, %v4077, 0
    %4094 = vmatprep.subr.bf16.mxu0 0
    %4095 = vmatpush1.bf16.msra.mxu0 0
    %4096 = vmatprep.subr.bf16.mxu0 0
    %4097 = vmatpush1.bf16.msra.mxu0 0
    %4098 = vmatprep.subr.bf16.mxu0 0
    %4099 = vmatpush1.bf16.msra.mxu0 0
    %4100 = vmatprep.subr.bf16.mxu0 0
    %4101 = vmatpush1.bf16.msra.mxu0 0
    %4102 = vmatprep.subr.bf16.mxu0 0
    %4103 = vmatpush1.bf16.msra.mxu0 0
    %4104 = vmatprep.subr.bf16.mxu0 0
    %4105 = vmatpush1.bf16.msra.mxu0 0
    %4106 = vmatprep.subr.bf16.mxu0 0
    %4107 = vmatpush1.bf16.msra.mxu0 %v4087
    %4108 = vmatprep.subr.bf16.mxu0 0
    %4109 = vmatpush1.bf16.msra.mxu0 %v4086
    %4110 = vmatprep.subr.bf16.mxu0 0
    %4111 = vmatpush2.bf16.msra.mxu0 0
    %4112 = vmatprep.subr.bf16.mxu0 0
    %4113 = vmatpush2.bf16.msra.mxu0 0
    %4114 = vmatprep.subr.bf16.mxu0 0
    %4115 = vmatpush2.bf16.msra.mxu0 0
    %4116 = vmatprep.subr.bf16.mxu0 0
    %4117 = vmatpush2.bf16.msra.mxu0 0
    %4118 = vmatprep.subr.bf16.mxu0 0
    %4119 = vmatpush2.bf16.msra.mxu0 0
    %4120 = vmatprep.subr.bf16.mxu0 0
    %4121 = vmatpush2.bf16.msra.mxu0 0
    %4122 = vmatprep.subr.bf16.mxu0 0
    %4123 = vmatpush2.bf16.msra.mxu0 0
    %4124 = vmatprep.subr.bf16.mxu0 0
    %4125 = vmatpush2.bf16.msra.mxu0 0
    %4126 = vmatprep.mubr.bf16.mxu0 0
    %4127 = vmatmul.mubr.bf16.gmra.mxu0 %v4092
    %v4128 = vpop.f32.mrf.mxu0
    %v4129 = vadd.f32 0.0, %v4128
    %v4130 = vpop.f32.mrf.mxu0
    %v4131 = vpop.f32.mrf.mxu0
    %v4132 = vadd.f32 0.0, %v4131
    %v4133 = vpop.f32.mrf.mxu0
    %4134 = vdwg.mxu0
    %v4135 = vadd.f32 %v4075, %v4129
    %v4136 = vadd.f32 %v4076, %v4132
    %v4137 = vxor.u32 %v4135, 2147483648
    %v4138 = vxor.u32 %v4136, 2147483648
    %v4139 = vmul.f32 %v4137, 1.442695
    %v4140 = vpow.pop %v4139
    %v4141 = vmul.f32 %v4138, 1.442695
    %v4142 = vpow.pop %v4141
    %v4143 = vadd.f32 %v4140, 1.0
    %v4144 = vadd.f32 %v4142, 1.0
    %v4145 = vrcp.pop %v4143
    %v4146 = vmul.f32 1.0, %v4145
    %v4147 = vrcp.pop %v4144
    %v4148 = vmul.f32 1.0, %v4147
    %v4149 = vtanh.pop %v4135
    %v4150 = vtanh.pop %v4136
    %4153 = vrot.lane.b32.xlu0 %v4073, 32
    %v4154 = vpop.permute.xlu0 %4153
    %4155 = vrot.lane.b32.xlu0 %v4074, 32
    %v4156 = vpop.permute.xlu0 %4155
    %v4159 = vmul.f32 %v4146, %v4154
    %v4160 = vmul.f32 %v4148, %v4156
    %4163 = vrot.lane.b32.xlu0 %v4149, 64
    %v4164 = vpop.permute.xlu0 %4163
    %4165 = vrot.lane.b32.xlu0 %v4150, 64
    %v4166 = vpop.permute.xlu0 %4165
    %v4169 = vmul.f32 %v4146, %v4164
    %v4170 = vmul.f32 %v4148, %v4166
    %4173 = vrot.lane.b32.xlu0 %v4169, 32
    %v4174 = vpop.permute.xlu0 %4173
    %4175 = vrot.lane.b32.xlu0 %v4170, 32
    %v4176 = vpop.permute.xlu0 %4175
    %v4179 = vadd.f32 %v4159, %v4174
    %v4180 = vadd.f32 %v4160, %v4176
    %v4181 = vtanh.pop %v4179
    %v4182 = vtanh.pop %v4180
    %4185 = vrot.lane.b32.xlu0 %v4181, 64
    %v4186 = vpop.permute.xlu0 %4185
    %4187 = vrot.lane.b32.xlu0 %v4182, 64
    %v4188 = vpop.permute.xlu0 %4187
    %v4191 = vmul.f32 %v4146, %v4186
    %v4192 = vmul.f32 %v4148, %v4188
    %v4193 = vadd.f32 %v4191, 0.0
    %v4194 = vadd.f32 %v4192, 0.0
    %s4195 = scalar_lea.vmem [#allocation2], 16
    %v4196 = vld [vmem:[%s4195] sm:$0xff]
    %v4197 = vld [vmem:[%s4195 + $0x8] sm:$0xff]
    %v4198 = vpack.c.bf16 %v4192, %v4191
    %4200 = vrot.lane.b32.xlu0 %v4198, 32
    %v4201 = vpop.permute.xlu0 %4200
    %v4203 = vsel %vm4090, %v4201, 0
    %4205 = vmatprep.subr.bf16.mxu0 0
    %4206 = vmatpush1.bf16.msra.mxu0 0
    %4207 = vmatprep.subr.bf16.mxu0 0
    %4208 = vmatpush1.bf16.msra.mxu0 0
    %4209 = vmatprep.subr.bf16.mxu0 0
    %4210 = vmatpush1.bf16.msra.mxu0 0
    %4211 = vmatprep.subr.bf16.mxu0 0
    %4212 = vmatpush1.bf16.msra.mxu0 0
    %4213 = vmatprep.subr.bf16.mxu0 0
    %4214 = vmatpush1.bf16.msra.mxu0 0
    %4215 = vmatprep.subr.bf16.mxu0 0
    %4216 = vmatpush1.bf16.msra.mxu0 0
    %4217 = vmatprep.subr.bf16.mxu0 0
    %4218 = vmatpush1.bf16.msra.mxu0 %v4087
    %4219 = vmatprep.subr.bf16.mxu0 0
    %4220 = vmatpush1.bf16.msra.mxu0 %v4086
    %4221 = vmatprep.subr.bf16.mxu0 0
    %4222 = vmatpush2.bf16.msra.mxu0 0
    %4223 = vmatprep.subr.bf16.mxu0 0
    %4224 = vmatpush2.bf16.msra.mxu0 0
    %4225 = vmatprep.subr.bf16.mxu0 0
    %4226 = vmatpush2.bf16.msra.mxu0 0
    %4227 = vmatprep.subr.bf16.mxu0 0
    %4228 = vmatpush2.bf16.msra.mxu0 0
    %4229 = vmatprep.subr.bf16.mxu0 0
    %4230 = vmatpush2.bf16.msra.mxu0 0
    %4231 = vmatprep.subr.bf16.mxu0 0
    %4232 = vmatpush2.bf16.msra.mxu0 0
    %4233 = vmatprep.subr.bf16.mxu0 0
    %4234 = vmatpush2.bf16.msra.mxu0 0
    %4235 = vmatprep.subr.bf16.mxu0 0
    %4236 = vmatpush2.bf16.msra.mxu0 0
    %4237 = vmatprep.mubr.bf16.mxu0 0
    %4238 = vmatmul.mubr.bf16.gmra.mxu0 %v4203
    %v4239 = vpop.f32.mrf.mxu0
    %v4240 = vadd.f32 0.0, %v4239
    %v4241 = vpop.f32.mrf.mxu0
    %v4242 = vpop.f32.mrf.mxu0
    %v4243 = vadd.f32 0.0, %v4242
    %v4244 = vpop.f32.mrf.mxu0
    %4245 = vdwg.mxu0
    %v4246 = vadd.f32 %v4196, %v4240
    %v4247 = vadd.f32 %v4197, %v4243
    %v4248 = vxor.u32 %v4246, 2147483648
    %v4249 = vxor.u32 %v4247, 2147483648
    %v4250 = vmul.f32 %v4248, 1.442695
    %v4251 = vpow.pop %v4250
    %v4252 = vmul.f32 %v4249, 1.442695
    %v4253 = vpow.pop %v4252
    %v4254 = vadd.f32 %v4251, 1.0
    %v4255 = vadd.f32 %v4253, 1.0
    %v4256 = vrcp.pop %v4254
    %v4257 = vmul.f32 1.0, %v4256
    %v4258 = vrcp.pop %v4255
    %v4259 = vmul.f32 1.0, %v4258
    %v4260 = vtanh.pop %v4246
    %v4261 = vtanh.pop %v4247
    %v4262 = vmul.f32 %v4257, %v4179
    %v4263 = vmul.f32 %v4259, %v4180
    %4266 = vrot.lane.b32.xlu0 %v4260, 64
    %v4267 = vpop.permute.xlu0 %4266
    %4268 = vrot.lane.b32.xlu0 %v4261, 64
    %v4269 = vpop.permute.xlu0 %4268
    %v4272 = vmul.f32 %v4257, %v4267
    %v4273 = vmul.f32 %v4259, %v4269
    %4276 = vrot.lane.b32.xlu0 %v4272, 32
    %v4277 = vpop.permute.xlu0 %4276
    %4278 = vrot.lane.b32.xlu0 %v4273, 32
    %v4279 = vpop.permute.xlu0 %4278
    %v4282 = vadd.f32 %v4262, %v4277
    %v4283 = vadd.f32 %v4263, %v4279
    %v4284 = vtanh.pop %v4282
    %v4285 = vtanh.pop %v4283
    %4288 = vrot.lane.b32.xlu0 %v4284, 64
    %v4289 = vpop.permute.xlu0 %4288
    %4290 = vrot.lane.b32.xlu0 %v4285, 64
    %v4291 = vpop.permute.xlu0 %4290
    %v4294 = vmul.f32 %v4257, %v4289
    %v4295 = vmul.f32 %v4259, %v4291
    %v4296 = vadd.f32 %v4193, %v4294
    %v4297 = vadd.f32 %v4194, %v4295
    %s4298 = scalar_lea.vmem [#allocation2], 32
    %v4299 = vld [vmem:[%s4298] sm:$0xff]
    %v4300 = vld [vmem:[%s4298 + $0x8] sm:$0xff]
    %v4301 = vpack.c.bf16 %v4295, %v4294
    %4303 = vrot.lane.b32.xlu0 %v4301, 32
    %v4304 = vpop.permute.xlu0 %4303
    %v4306 = vsel %vm4090, %v4304, 0
    %4308 = vmatprep.subr.bf16.mxu0 0
    %4309 = vmatpush1.bf16.msra.mxu0 0
    %4310 = vmatprep.subr.bf16.mxu0 0
    %4311 = vmatpush1.bf16.msra.mxu0 0
    %4312 = vmatprep.subr.bf16.mxu0 0
    %4313 = vmatpush1.bf16.msra.mxu0 0
    %4314 = vmatprep.subr.bf16.mxu0 0
    %4315 = vmatpush1.bf16.msra.mxu0 0
    %4316 = vmatprep.subr.bf16.mxu0 0
    %4317 = vmatpush1.bf16.msra.mxu0 0
    %4318 = vmatprep.subr.bf16.mxu0 0
    %4319 = vmatpush1.bf16.msra.mxu0 0
    %4320 = vmatprep.subr.bf16.mxu0 0
    %4321 = vmatpush1.bf16.msra.mxu0 %v4087
    %4322 = vmatprep.subr.bf16.mxu0 0
    %4323 = vmatpush1.bf16.msra.mxu0 %v4086
    %4324 = vmatprep.subr.bf16.mxu0 0
    %4325 = vmatpush2.bf16.msra.mxu0 0
    %4326 = vmatprep.subr.bf16.mxu0 0
    %4327 = vmatpush2.bf16.msra.mxu0 0
    %4328 = vmatprep.subr.bf16.mxu0 0
    %4329 = vmatpush2.bf16.msra.mxu0 0
    %4330 = vmatprep.subr.bf16.mxu0 0
    %4331 = vmatpush2.bf16.msra.mxu0 0
    %4332 = vmatprep.subr.bf16.mxu0 0
    %4333 = vmatpush2.bf16.msra.mxu0 0
    %4334 = vmatprep.subr.bf16.mxu0 0
    %4335 = vmatpush2.bf16.msra.mxu0 0
    %4336 = vmatprep.subr.bf16.mxu0 0
    %4337 = vmatpush2.bf16.msra.mxu0 0
    %4338 = vmatprep.subr.bf16.mxu0 0
    %4339 = vmatpush2.bf16.msra.mxu0 0
    %4340 = vmatprep.mubr.bf16.mxu0 0
    %4341 = vmatmul.mubr.bf16.gmra.mxu0 %v4306
    %v4342 = vpop.f32.mrf.mxu0
    %v4343 = vadd.f32 0.0, %v4342
    %v4344 = vpop.f32.mrf.mxu0
    %v4345 = vpop.f32.mrf.mxu0
    %v4346 = vadd.f32 0.0, %v4345
    %v4347 = vpop.f32.mrf.mxu0
    %4348 = vdwg.mxu0
    %v4349 = vadd.f32 %v4299, %v4343
    %v4350 = vadd.f32 %v4300, %v4346
    %v4351 = vxor.u32 %v4349, 2147483648
    %v4352 = vxor.u32 %v4350, 2147483648
    %v4353 = vmul.f32 %v4351, 1.442695
    %v4354 = vpow.pop %v4353
    %v4355 = vmul.f32 %v4352, 1.442695
    %v4356 = vpow.pop %v4355
    %v4357 = vadd.f32 %v4354, 1.0
    %v4358 = vadd.f32 %v4356, 1.0
    %v4359 = vrcp.pop %v4357
    %v4360 = vmul.f32 1.0, %v4359
    %v4361 = vrcp.pop %v4358
    %v4362 = vmul.f32 1.0, %v4361
    %v4363 = vtanh.pop %v4349
    %v4364 = vtanh.pop %v4350
    %v4365 = vmul.f32 %v4360, %v4282
    %v4366 = vmul.f32 %v4362, %v4283
    %4369 = vrot.lane.b32.xlu0 %v4363, 64
    %v4370 = vpop.permute.xlu0 %4369
    %4371 = vrot.lane.b32.xlu0 %v4364, 64
    %v4372 = vpop.permute.xlu0 %4371
    %v4375 = vmul.f32 %v4360, %v4370
    %v4376 = vmul.f32 %v4362, %v4372
    %4379 = vrot.lane.b32.xlu0 %v4375, 32
    %v4380 = vpop.permute.xlu0 %4379
    %4381 = vrot.lane.b32.xlu0 %v4376, 32
    %v4382 = vpop.permute.xlu0 %4381
    %v4385 = vadd.f32 %v4365, %v4380
    %v4386 = vadd.f32 %v4366, %v4382
    %v4387 = vtanh.pop %v4385
    %v4388 = vtanh.pop %v4386
    %4391 = vrot.lane.b32.xlu0 %v4387, 64
    %v4392 = vpop.permute.xlu0 %4391
    %4393 = vrot.lane.b32.xlu0 %v4388, 64
    %v4394 = vpop.permute.xlu0 %4393
    %v4397 = vmul.f32 %v4360, %v4392
    %v4398 = vmul.f32 %v4362, %v4394
    %v4399 = vadd.f32 %v4296, %v4397
    %v4400 = vadd.f32 %v4297, %v4398
    %s4401 = scalar_lea.vmem [#allocation2], 48
    %v4402 = vld [vmem:[%s4401] sm:$0xff]
    %v4403 = vld [vmem:[%s4401 + $0x8] sm:$0xff]
    %v4404 = vpack.c.bf16 %v4398, %v4397
    %4406 = vrot.lane.b32.xlu0 %v4404, 32
    %v4407 = vpop.permute.xlu0 %4406
    %v4409 = vsel %vm4090, %v4407, 0
    %4411 = vmatprep.subr.bf16.mxu0 0
    %4412 = vmatpush1.bf16.msra.mxu0 0
    %4413 = vmatprep.subr.bf16.mxu0 0
    %4414 = vmatpush1.bf16.msra.mxu0 0
    %4415 = vmatprep.subr.bf16.mxu0 0
    %4416 = vmatpush1.bf16.msra.mxu0 0
    %4417 = vmatprep.subr.bf16.mxu0 0
    %4418 = vmatpush1.bf16.msra.mxu0 0
    %4419 = vmatprep.subr.bf16.mxu0 0
    %4420 = vmatpush1.bf16.msra.mxu0 0
    %4421 = vmatprep.subr.bf16.mxu0 0
    %4422 = vmatpush1.bf16.msra.mxu0 0
    %4423 = vmatprep.subr.bf16.mxu0 0
    %4424 = vmatpush1.bf16.msra.mxu0 %v4087
    %4425 = vmatprep.subr.bf16.mxu0 0
    %4426 = vmatpush1.bf16.msra.mxu0 %v4086
    %4427 = vmatprep.subr.bf16.mxu0 0
    %4428 = vmatpush2.bf16.msra.mxu0 0
    %4429 = vmatprep.subr.bf16.mxu0 0
    %4430 = vmatpush2.bf16.msra.mxu0 0
    %4431 = vmatprep.subr.bf16.mxu0 0
    %4432 = vmatpush2.bf16.msra.mxu0 0
    %4433 = vmatprep.subr.bf16.mxu0 0
    %4434 = vmatpush2.bf16.msra.mxu0 0
    %4435 = vmatprep.subr.bf16.mxu0 0
    %4436 = vmatpush2.bf16.msra.mxu0 0
    %4437 = vmatprep.subr.bf16.mxu0 0
    %4438 = vmatpush2.bf16.msra.mxu0 0
    %4439 = vmatprep.subr.bf16.mxu0 0
    %4440 = vmatpush2.bf16.msra.mxu0 0
    %4441 = vmatprep.subr.bf16.mxu0 0
    %4442 = vmatpush2.bf16.msra.mxu0 0
    %4443 = vmatprep.mubr.bf16.mxu0 0
    %4444 = vmatmul.mubr.bf16.gmra.mxu0 %v4409
    %v4445 = vpop.f32.mrf.mxu0
    %v4446 = vadd.f32 0.0, %v4445
    %v4447 = vpop.f32.mrf.mxu0
    %v4448 = vpop.f32.mrf.mxu0
    %v4449 = vadd.f32 0.0, %v4448
    %v4450 = vpop.f32.mrf.mxu0
    %4451 = vdwg.mxu0
    %v4452 = vadd.f32 %v4402, %v4446
    %v4453 = vadd.f32 %v4403, %v4449
    %v4454 = vxor.u32 %v4452, 2147483648
    %v4455 = vxor.u32 %v4453, 2147483648
    %v4456 = vmul.f32 %v4454, 1.442695
    %v4457 = vpow.pop %v4456
    %v4458 = vmul.f32 %v4455, 1.442695
    %v4459 = vpow.pop %v4458
    %v4460 = vadd.f32 %v4457, 1.0
    %v4461 = vadd.f32 %v4459, 1.0
    %v4462 = vrcp.pop %v4460
    %v4463 = vmul.f32 1.0, %v4462
    %v4464 = vrcp.pop %v4461
    %v4465 = vmul.f32 1.0, %v4464
    %v4466 = vtanh.pop %v4452
    %v4467 = vtanh.pop %v4453
    %v4468 = vmul.f32 %v4463, %v4385
    %v4469 = vmul.f32 %v4465, %v4386
    %4472 = vrot.lane.b32.xlu0 %v4466, 64
    %v4473 = vpop.permute.xlu0 %4472
    %4474 = vrot.lane.b32.xlu0 %v4467, 64
    %v4475 = vpop.permute.xlu0 %4474
    %v4478 = vmul.f32 %v4463, %v4473
    %v4479 = vmul.f32 %v4465, %v4475
    %4482 = vrot.lane.b32.xlu0 %v4478, 32
    %v4483 = vpop.permute.xlu0 %4482
    %4484 = vrot.lane.b32.xlu0 %v4479, 32
    %v4485 = vpop.permute.xlu0 %4484
    %v4488 = vadd.f32 %v4468, %v4483
    %v4489 = vadd.f32 %v4469, %v4485
    %v4490 = vtanh.pop %v4488
    %v4491 = vtanh.pop %v4489
    %4494 = vrot.lane.b32.xlu0 %v4490, 64
    %v4495 = vpop.permute.xlu0 %4494
    %4496 = vrot.lane.b32.xlu0 %v4491, 64
    %v4497 = vpop.permute.xlu0 %4496
    %v4500 = vmul.f32 %v4463, %v4495
    %v4501 = vmul.f32 %v4465, %v4497
    %v4502 = vadd.f32 %v4399, %v4500
    %v4503 = vadd.f32 %v4400, %v4501
    %s4504 = scalar_lea.vmem [#allocation2], 64
    %v4505 = vld [vmem:[%s4504] sm:$0xff]
    %v4506 = vld [vmem:[%s4504 + $0x8] sm:$0xff]
    %v4507 = vpack.c.bf16 %v4501, %v4500
    %4509 = vrot.lane.b32.xlu0 %v4507, 32
    %v4510 = vpop.permute.xlu0 %4509
    %v4512 = vsel %vm4090, %v4510, 0
    %4514 = vmatprep.subr.bf16.mxu0 0
    %4515 = vmatpush1.bf16.msra.mxu0 0
    %4516 = vmatprep.subr.bf16.mxu0 0
    %4517 = vmatpush1.bf16.msra.mxu0 0
    %4518 = vmatprep.subr.bf16.mxu0 0
    %4519 = vmatpush1.bf16.msra.mxu0 0
    %4520 = vmatprep.subr.bf16.mxu0 0
    %4521 = vmatpush1.bf16.msra.mxu0 0
    %4522 = vmatprep.subr.bf16.mxu0 0
    %4523 = vmatpush1.bf16.msra.mxu0 0
    %4524 = vmatprep.subr.bf16.mxu0 0
    %4525 = vmatpush1.bf16.msra.mxu0 0
    %4526 = vmatprep.subr.bf16.mxu0 0
    %4527 = vmatpush1.bf16.msra.mxu0 %v4087
    %4528 = vmatprep.subr.bf16.mxu0 0
    %4529 = vmatpush1.bf16.msra.mxu0 %v4086
    %4530 = vmatprep.subr.bf16.mxu0 0
    %4531 = vmatpush2.bf16.msra.mxu0 0
    %4532 = vmatprep.subr.bf16.mxu0 0
    %4533 = vmatpush2.bf16.msra.mxu0 0
    %4534 = vmatprep.subr.bf16.mxu0 0
    %4535 = vmatpush2.bf16.msra.mxu0 0
    %4536 = vmatprep.subr.bf16.mxu0 0
    %4537 = vmatpush2.bf16.msra.mxu0 0
    %4538 = vmatprep.subr.bf16.mxu0 0
    %4539 = vmatpush2.bf16.msra.mxu0 0
    %4540 = vmatprep.subr.bf16.mxu0 0
    %4541 = vmatpush2.bf16.msra.mxu0 0
    %4542 = vmatprep.subr.bf16.mxu0 0
    %4543 = vmatpush2.bf16.msra.mxu0 0
    %4544 = vmatprep.subr.bf16.mxu0 0
    %4545 = vmatpush2.bf16.msra.mxu0 0
    %4546 = vmatprep.mubr.bf16.mxu0 0
    %4547 = vmatmul.mubr.bf16.gmra.mxu0 %v4512
    %v4548 = vpop.f32.mrf.mxu0
    %v4549 = vadd.f32 0.0, %v4548
    %v4550 = vpop.f32.mrf.mxu0
    %v4551 = vpop.f32.mrf.mxu0
    %v4552 = vadd.f32 0.0, %v4551
    %v4553 = vpop.f32.mrf.mxu0
    %4554 = vdwg.mxu0
    %v4555 = vadd.f32 %v4505, %v4549
    %v4556 = vadd.f32 %v4506, %v4552
    %v4557 = vxor.u32 %v4555, 2147483648
    %v4558 = vxor.u32 %v4556, 2147483648
    %v4559 = vmul.f32 %v4557, 1.442695
    %v4560 = vpow.pop %v4559
    %v4561 = vmul.f32 %v4558, 1.442695
    %v4562 = vpow.pop %v4561
    %v4563 = vadd.f32 %v4560, 1.0
    %v4564 = vadd.f32 %v4562, 1.0
    %v4565 = vrcp.pop %v4563
    %v4566 = vmul.f32 1.0, %v4565
    %v4567 = vrcp.pop %v4564
    %v4568 = vmul.f32 1.0, %v4567
    %v4569 = vtanh.pop %v4555
    %v4570 = vtanh.pop %v4556
    %v4571 = vmul.f32 %v4566, %v4488
    %v4572 = vmul.f32 %v4568, %v4489
    %4575 = vrot.lane.b32.xlu0 %v4569, 64
    %v4576 = vpop.permute.xlu0 %4575
    %4577 = vrot.lane.b32.xlu0 %v4570, 64
    %v4578 = vpop.permute.xlu0 %4577
    %v4581 = vmul.f32 %v4566, %v4576
    %v4582 = vmul.f32 %v4568, %v4578
    %4585 = vrot.lane.b32.xlu0 %v4581, 32
    %v4586 = vpop.permute.xlu0 %4585
    %4587 = vrot.lane.b32.xlu0 %v4582, 32
    %v4588 = vpop.permute.xlu0 %4587
    %v4591 = vadd.f32 %v4571, %v4586
    %v4592 = vadd.f32 %v4572, %v4588
    %v4593 = vtanh.pop %v4591
    %v4594 = vtanh.pop %v4592
    %4597 = vrot.lane.b32.xlu0 %v4593, 64
    %v4598 = vpop.permute.xlu0 %4597
    %4599 = vrot.lane.b32.xlu0 %v4594, 64
    %v4600 = vpop.permute.xlu0 %4599
    %v4603 = vmul.f32 %v4566, %v4598
    %v4604 = vmul.f32 %v4568, %v4600
    %v4605 = vadd.f32 %v4502, %v4603
    %v4606 = vadd.f32 %v4503, %v4604
    %s4607 = scalar_lea.vmem [#allocation2], 80
    %v4608 = vld [vmem:[%s4607] sm:$0xff]
    %v4609 = vld [vmem:[%s4607 + $0x8] sm:$0xff]
    %v4610 = vpack.c.bf16 %v4604, %v4603
    %4612 = vrot.lane.b32.xlu0 %v4610, 32
    %v4613 = vpop.permute.xlu0 %4612
    %v4615 = vsel %vm4090, %v4613, 0
    %4617 = vmatprep.subr.bf16.mxu0 0
    %4618 = vmatpush1.bf16.msra.mxu0 0
    %4619 = vmatprep.subr.bf16.mxu0 0
    %4620 = vmatpush1.bf16.msra.mxu0 0
    %4621 = vmatprep.subr.bf16.mxu0 0
    %4622 = vmatpush1.bf16.msra.mxu0 0
    %4623 = vmatprep.subr.bf16.mxu0 0
    %4624 = vmatpush1.bf16.msra.mxu0 0
    %4625 = vmatprep.subr.bf16.mxu0 0
    %4626 = vmatpush1.bf16.msra.mxu0 0
    %4627 = vmatprep.subr.bf16.mxu0 0
    %4628 = vmatpush1.bf16.msra.mxu0 0
    %4629 = vmatprep.subr.bf16.mxu0 0
    %4630 = vmatpush1.bf16.msra.mxu0 %v4087
    %4631 = vmatprep.subr.bf16.mxu0 0
    %4632 = vmatpush1.bf16.msra.mxu0 %v4086
    %4633 = vmatprep.subr.bf16.mxu0 0
    %4634 = vmatpush2.bf16.msra.mxu0 0
    %4635 = vmatprep.subr.bf16.mxu0 0
    %4636 = vmatpush2.bf16.msra.mxu0 0
    %4637 = vmatprep.subr.bf16.mxu0 0
    %4638 = vmatpush2.bf16.msra.mxu0 0
    %4639 = vmatprep.subr.bf16.mxu0 0
    %4640 = vmatpush2.bf16.msra.mxu0 0
    %4641 = vmatprep.subr.bf16.mxu0 0
    %4642 = vmatpush2.bf16.msra.mxu0 0
    %4643 = vmatprep.subr.bf16.mxu0 0
    %4644 = vmatpush2.bf16.msra.mxu0 0
    %4645 = vmatprep.subr.bf16.mxu0 0
    %4646 = vmatpush2.bf16.msra.mxu0 0
    %4647 = vmatprep.subr.bf16.mxu0 0
    %4648 = vmatpush2.bf16.msra.mxu0 0
    %4649 = vmatprep.mubr.bf16.mxu0 0
    %4650 = vmatmul.mubr.bf16.gmra.mxu0 %v4615
    %v4651 = vpop.f32.mrf.mxu0
    %v4652 = vadd.f32 0.0, %v4651
    %v4653 = vpop.f32.mrf.mxu0
    %v4654 = vpop.f32.mrf.mxu0
    %v4655 = vadd.f32 0.0, %v4654
    %v4656 = vpop.f32.mrf.mxu0
    %4657 = vdwg.mxu0
    %v4658 = vadd.f32 %v4608, %v4652
    %v4659 = vadd.f32 %v4609, %v4655
    %v4660 = vxor.u32 %v4658, 2147483648
    %v4661 = vxor.u32 %v4659, 2147483648
    %v4662 = vmul.f32 %v4660, 1.442695
    %v4663 = vpow.pop %v4662
    %v4664 = vmul.f32 %v4661, 1.442695
    %v4665 = vpow.pop %v4664
    %v4666 = vadd.f32 %v4663, 1.0
    %v4667 = vadd.f32 %v4665, 1.0
    %v4668 = vrcp.pop %v4666
    %v4669 = vmul.f32 1.0, %v4668
    %v4670 = vrcp.pop %v4667
    %v4671 = vmul.f32 1.0, %v4670
    %v4672 = vtanh.pop %v4658
    %v4673 = vtanh.pop %v4659
    %v4674 = vmul.f32 %v4669, %v4591
    %v4675 = vmul.f32 %v4671, %v4592
    %4678 = vrot.lane.b32.xlu0 %v4672, 64
    %v4679 = vpop.permute.xlu0 %4678
    %4680 = vrot.lane.b32.xlu0 %v4673, 64
    %v4681 = vpop.permute.xlu0 %4680
    %v4684 = vmul.f32 %v4669, %v4679
    %v4685 = vmul.f32 %v4671, %v4681
    %4688 = vrot.lane.b32.xlu0 %v4684, 32
    %v4689 = vpop.permute.xlu0 %4688
    %4690 = vrot.lane.b32.xlu0 %v4685, 32
    %v4691 = vpop.permute.xlu0 %4690
    %v4694 = vadd.f32 %v4674, %v4689
    %v4695 = vadd.f32 %v4675, %v4691
    %v4696 = vtanh.pop %v4694
    %v4697 = vtanh.pop %v4695
    %4700 = vrot.lane.b32.xlu0 %v4696, 64
    %v4701 = vpop.permute.xlu0 %4700
    %4702 = vrot.lane.b32.xlu0 %v4697, 64
    %v4703 = vpop.permute.xlu0 %4702
    %v4706 = vmul.f32 %v4669, %v4701
    %v4707 = vmul.f32 %v4671, %v4703
    %v4708 = vadd.f32 %v4605, %v4706
    %v4709 = vadd.f32 %v4606, %v4707
    %s4710 = scalar_lea.vmem [#allocation2], 96
    %v4711 = vld [vmem:[%s4710] sm:$0xff]
    %v4712 = vld [vmem:[%s4710 + $0x8] sm:$0xff]
    %v4713 = vpack.c.bf16 %v4707, %v4706
    %4715 = vrot.lane.b32.xlu0 %v4713, 32
    %v4716 = vpop.permute.xlu0 %4715
    %v4718 = vsel %vm4090, %v4716, 0
    %4720 = vmatprep.subr.bf16.mxu0 0
    %4721 = vmatpush1.bf16.msra.mxu0 0
    %4722 = vmatprep.subr.bf16.mxu0 0
    %4723 = vmatpush1.bf16.msra.mxu0 0
    %4724 = vmatprep.subr.bf16.mxu0 0
    %4725 = vmatpush1.bf16.msra.mxu0 0
    %4726 = vmatprep.subr.bf16.mxu0 0
    %4727 = vmatpush1.bf16.msra.mxu0 0
    %4728 = vmatprep.subr.bf16.mxu0 0
    %4729 = vmatpush1.bf16.msra.mxu0 0
    %4730 = vmatprep.subr.bf16.mxu0 0
    %4731 = vmatpush1.bf16.msra.mxu0 0
    %4732 = vmatprep.subr.bf16.mxu0 0
    %4733 = vmatpush1.bf16.msra.mxu0 %v4087
    %4734 = vmatprep.subr.bf16.mxu0 0
    %4735 = vmatpush1.bf16.msra.mxu0 %v4086
    %4736 = vmatprep.subr.bf16.mxu0 0
    %4737 = vmatpush2.bf16.msra.mxu0 0
    %4738 = vmatprep.subr.bf16.mxu0 0
    %4739 = vmatpush2.bf16.msra.mxu0 0
    %4740 = vmatprep.subr.bf16.mxu0 0
    %4741 = vmatpush2.bf16.msra.mxu0 0
    %4742 = vmatprep.subr.bf16.mxu0 0
    %4743 = vmatpush2.bf16.msra.mxu0 0
    %4744 = vmatprep.subr.bf16.mxu0 0
    %4745 = vmatpush2.bf16.msra.mxu0 0
    %4746 = vmatprep.subr.bf16.mxu0 0
    %4747 = vmatpush2.bf16.msra.mxu0 0
    %4748 = vmatprep.subr.bf16.mxu0 0
    %4749 = vmatpush2.bf16.msra.mxu0 0
    %4750 = vmatprep.subr.bf16.mxu0 0
    %4751 = vmatpush2.bf16.msra.mxu0 0
    %4752 = vmatprep.mubr.bf16.mxu0 0
    %4753 = vmatmul.mubr.bf16.gmra.mxu0 %v4718
    %v4754 = vpop.f32.mrf.mxu0
    %v4755 = vadd.f32 0.0, %v4754
    %v4756 = vpop.f32.mrf.mxu0
    %v4757 = vpop.f32.mrf.mxu0
    %v4758 = vadd.f32 0.0, %v4757
    %v4759 = vpop.f32.mrf.mxu0
    %4760 = vdwg.mxu0
    %v4761 = vadd.f32 %v4711, %v4755
    %v4762 = vadd.f32 %v4712, %v4758
    %v4763 = vxor.u32 %v4761, 2147483648
    %v4764 = vxor.u32 %v4762, 2147483648
    %v4765 = vmul.f32 %v4763, 1.442695
    %v4766 = vpow.pop %v4765
    %v4767 = vmul.f32 %v4764, 1.442695
    %v4768 = vpow.pop %v4767
    %v4769 = vadd.f32 %v4766, 1.0
    %v4770 = vadd.f32 %v4768, 1.0
    %v4771 = vrcp.pop %v4769
    %v4772 = vmul.f32 1.0, %v4771
    %v4773 = vrcp.pop %v4770
    %v4774 = vmul.f32 1.0, %v4773
    %v4775 = vtanh.pop %v4761
    %v4776 = vtanh.pop %v4762
    %v4777 = vmul.f32 %v4772, %v4694
    %v4778 = vmul.f32 %v4774, %v4695
    %4781 = vrot.lane.b32.xlu0 %v4775, 64
    %v4782 = vpop.permute.xlu0 %4781
    %4783 = vrot.lane.b32.xlu0 %v4776, 64
    %v4784 = vpop.permute.xlu0 %4783
    %v4787 = vmul.f32 %v4772, %v4782
    %v4788 = vmul.f32 %v4774, %v4784
    %4791 = vrot.lane.b32.xlu0 %v4787, 32
    %v4792 = vpop.permute.xlu0 %4791
    %4793 = vrot.lane.b32.xlu0 %v4788, 32
    %v4794 = vpop.permute.xlu0 %4793
    %v4797 = vadd.f32 %v4777, %v4792
    %v4798 = vadd.f32 %v4778, %v4794
    %v4799 = vtanh.pop %v4797
    %v4800 = vtanh.pop %v4798
    %4803 = vrot.lane.b32.xlu0 %v4799, 64
    %v4804 = vpop.permute.xlu0 %4803
    %4805 = vrot.lane.b32.xlu0 %v4800, 64
    %v4806 = vpop.permute.xlu0 %4805
    %v4809 = vmul.f32 %v4772, %v4804
    %v4810 = vmul.f32 %v4774, %v4806
    %v4811 = vadd.f32 %v4708, %v4809
    %v4812 = vadd.f32 %v4709, %v4810
    %s4813 = scalar_lea.vmem [#allocation2], 112
    %v4814 = vld [vmem:[%s4813] sm:$0xff]
    %v4815 = vld [vmem:[%s4813 + $0x8] sm:$0xff]
    %v4816 = vpack.c.bf16 %v4810, %v4809
    %4818 = vrot.lane.b32.xlu0 %v4816, 32
    %v4819 = vpop.permute.xlu0 %4818
    %v4821 = vsel %vm4090, %v4819, 0
    %4823 = vmatprep.subr.bf16.mxu0 0
    %4824 = vmatpush1.bf16.msra.mxu0 0
    %4825 = vmatprep.subr.bf16.mxu0 0
    %4826 = vmatpush1.bf16.msra.mxu0 0
    %4827 = vmatprep.subr.bf16.mxu0 0
    %4828 = vmatpush1.bf16.msra.mxu0 0
    %4829 = vmatprep.subr.bf16.mxu0 0
    %4830 = vmatpush1.bf16.msra.mxu0 0
    %4831 = vmatprep.subr.bf16.mxu0 0
    %4832 = vmatpush1.bf16.msra.mxu0 0
    %4833 = vmatprep.subr.bf16.mxu0 0
    %4834 = vmatpush1.bf16.msra.mxu0 0
    %4835 = vmatprep.subr.bf16.mxu0 0
    %4836 = vmatpush1.bf16.msra.mxu0 %v4087
    %4837 = vmatprep.subr.bf16.mxu0 0
    %4838 = vmatpush1.bf16.msra.mxu0 %v4086
    %4839 = vmatprep.subr.bf16.mxu0 0
    %4840 = vmatpush2.bf16.msra.mxu0 0
    %4841 = vmatprep.subr.bf16.mxu0 0
    %4842 = vmatpush2.bf16.msra.mxu0 0
    %4843 = vmatprep.subr.bf16.mxu0 0
    %4844 = vmatpush2.bf16.msra.mxu0 0
    %4845 = vmatprep.subr.bf16.mxu0 0
    %4846 = vmatpush2.bf16.msra.mxu0 0
    %4847 = vmatprep.subr.bf16.mxu0 0
    %4848 = vmatpush2.bf16.msra.mxu0 0
    %4849 = vmatprep.subr.bf16.mxu0 0
    %4850 = vmatpush2.bf16.msra.mxu0 0
    %4851 = vmatprep.subr.bf16.mxu0 0
    %4852 = vmatpush2.bf16.msra.mxu0 0
    %4853 = vmatprep.subr.bf16.mxu0 0
    %4854 = vmatpush2.bf16.msra.mxu0 0
    %4855 = vmatprep.mubr.bf16.mxu0 0
    %4856 = vmatmul.mubr.bf16.gmra.mxu0 %v4821
    %v4857 = vpop.f32.mrf.mxu0
    %v4858 = vadd.f32 0.0, %v4857
    %v4859 = vpop.f32.mrf.mxu0
    %v4860 = vpop.f32.mrf.mxu0
    %v4861 = vadd.f32 0.0, %v4860
    %v4862 = vpop.f32.mrf.mxu0
    %4863 = vdwg.mxu0
    %v4864 = vadd.f32 %v4814, %v4858
    %v4865 = vadd.f32 %v4815, %v4861
    %v4866 = vxor.u32 %v4864, 2147483648
    %v4867 = vxor.u32 %v4865, 2147483648
    %v4868 = vmul.f32 %v4866, 1.442695
    %v4869 = vpow.pop %v4868
    %v4870 = vmul.f32 %v4867, 1.442695
    %v4871 = vpow.pop %v4870
    %v4872 = vadd.f32 %v4869, 1.0
    %v4873 = vadd.f32 %v4871, 1.0
    %v4874 = vrcp.pop %v4872
    %v4875 = vmul.f32 1.0, %v4874
    %v4876 = vrcp.pop %v4873
    %v4877 = vmul.f32 1.0, %v4876
    %v4878 = vtanh.pop %v4864
    %v4879 = vtanh.pop %v4865
    %v4880 = vmul.f32 %v4875, %v4797
    %v4881 = vmul.f32 %v4877, %v4798
    %4884 = vrot.lane.b32.xlu0 %v4878, 64
    %v4885 = vpop.permute.xlu0 %4884
    %4886 = vrot.lane.b32.xlu0 %v4879, 64
    %v4887 = vpop.permute.xlu0 %4886
    %v4890 = vmul.f32 %v4875, %v4885
    %v4891 = vmul.f32 %v4877, %v4887
    %4894 = vrot.lane.b32.xlu0 %v4890, 32
    %v4895 = vpop.permute.xlu0 %4894
    %4896 = vrot.lane.b32.xlu0 %v4891, 32
    %v4897 = vpop.permute.xlu0 %4896
    %v4900 = vadd.f32 %v4880, %v4895
    %v4901 = vadd.f32 %v4881, %v4897
    %v4902 = vtanh.pop %v4900
    %v4903 = vtanh.pop %v4901
    %4906 = vrot.lane.b32.xlu0 %v4902, 64
    %v4907 = vpop.permute.xlu0 %4906
    %4908 = vrot.lane.b32.xlu0 %v4903, 64
    %v4909 = vpop.permute.xlu0 %4908
    %v4912 = vmul.f32 %v4875, %v4907
    %v4913 = vmul.f32 %v4877, %v4909
    %v4914 = vadd.f32 %v4811, %v4912
    %v4915 = vadd.f32 %v4812, %v4913
    %v4916 = vpack.c.bf16 %v4915, %v4914
    %v4917 = vld [vmem:[%s53] sm:$0xf]
    %v4918 = vld [vmem:[%s53 + $0x4] sm:$0xf]
    %v4919 = vld [vmem:[%s53 + $0x8] sm:$0xf]
    %v4920 = vld [vmem:[%s53 + $0xc] sm:$0xf]
    %v4921 = vld [vmem:[%s7] sm:$0xf]
    %v4922 = vld [vmem:[%s7 + $0x4] sm:$0xf]
    %v4923 = vld [vmem:[%s55] sm:$0x3]
    %v4926 = vunpack.c.l.b16 %v4921
    %v4927 = vunpack.c.l.b16 %v4922
    %v4928 = vpack.c.b16 %v4927, %v4926
    %vm4929 = vcmask 31744
    %v4931 = vsel %vm4929, %v4928, 0
    %vm4933 = vcmask 1041408
    %v4935 = vsel %vm4933, %v4923, 0
    %4937 = vmatprep.subr.bf16.mxu0 0
    %4938 = vmatpush1.bf16.msra.mxu0 0
    %4939 = vmatprep.subr.bf16.mxu0 0
    %4940 = vmatpush1.bf16.msra.mxu0 0
    %4941 = vmatprep.subr.bf16.mxu0 0
    %4942 = vmatpush1.bf16.msra.mxu0 0
    %4943 = vmatprep.subr.bf16.mxu0 0
    %4944 = vmatpush1.bf16.msra.mxu0 0
    %4945 = vmatprep.subr.bf16.mxu0 0
    %4946 = vmatpush1.bf16.msra.mxu0 0
    %4947 = vmatprep.subr.bf16.mxu0 0
    %4948 = vmatpush1.bf16.msra.mxu0 0
    %4949 = vmatprep.subr.bf16.mxu0 0
    %4950 = vmatpush1.bf16.msra.mxu0 0
    %4951 = vmatprep.subr.bf16.mxu0 0
    %4952 = vmatpush1.bf16.msra.mxu0 %v4935
    %4953 = vmatprep.subr.bf16.mxu0 0
    %4954 = vmatpush2.bf16.msra.mxu0 0
    %4955 = vmatprep.subr.bf16.mxu0 0
    %4956 = vmatpush2.bf16.msra.mxu0 0
    %4957 = vmatprep.subr.bf16.mxu0 0
    %4958 = vmatpush2.bf16.msra.mxu0 0
    %4959 = vmatprep.subr.bf16.mxu0 0
    %4960 = vmatpush2.bf16.msra.mxu0 0
    %4961 = vmatprep.subr.bf16.mxu0 0
    %4962 = vmatpush2.bf16.msra.mxu0 0
    %4963 = vmatprep.subr.bf16.mxu0 0
    %4964 = vmatpush2.bf16.msra.mxu0 0
    %4965 = vmatprep.subr.bf16.mxu0 0
    %4966 = vmatpush2.bf16.msra.mxu0 0
    %4967 = vmatprep.subr.bf16.mxu0 0
    %4968 = vmatpush2.bf16.msra.mxu0 0
    %4969 = vmatprep.mubr.bf16.mxu0 0
    %4970 = vmatmul.mubr.bf16.gmra.mxu0 %v4931
    %v4971 = vpop.f32.mrf.mxu0
    %v4972 = vadd.f32 0.0, %v4971
    %v4973 = vpop.f32.mrf.mxu0
    %v4974 = vpop.f32.mrf.mxu0
    %v4975 = vadd.f32 0.0, %v4974
    %v4976 = vpop.f32.mrf.mxu0
    %4977 = vdwg.mxu0
    %4979 = vrot.lane.b32.xlu0 %v4916, 32
    %v4980 = vpop.permute.xlu0 %4979
    %v4985 = vunpack.c.l.b16 %v4917
    %v4986 = vunpack.c.l.b16 %v4918
    %v4987 = vunpack.c.l.b16 %v4919
    %v4988 = vunpack.c.l.b16 %v4920
    %v4989 = vpack.c.b16 %v4986, %v4985
    %v4990 = vpack.c.b16 %v4988, %v4987
    %v4994 = vsel %vm4090, %v4980, 0
    %4996 = vmatprep.subr.bf16.mxu0 0
    %4997 = vmatpush1.bf16.msra.mxu0 0
    %4998 = vmatprep.subr.bf16.mxu0 0
    %4999 = vmatpush1.bf16.msra.mxu0 0
    %5000 = vmatprep.subr.bf16.mxu0 0
    %5001 = vmatpush1.bf16.msra.mxu0 0
    %5002 = vmatprep.subr.bf16.mxu0 0
    %5003 = vmatpush1.bf16.msra.mxu0 0
    %5004 = vmatprep.subr.bf16.mxu0 0
    %5005 = vmatpush1.bf16.msra.mxu0 0
    %5006 = vmatprep.subr.bf16.mxu0 0
    %5007 = vmatpush1.bf16.msra.mxu0 0
    %5008 = vmatprep.subr.bf16.mxu0 0
    %5009 = vmatpush1.bf16.msra.mxu0 %v4990
    %5010 = vmatprep.subr.bf16.mxu0 0
    %5011 = vmatpush1.bf16.msra.mxu0 %v4989
    %5012 = vmatprep.subr.bf16.mxu0 0
    %5013 = vmatpush2.bf16.msra.mxu0 0
    %5014 = vmatprep.subr.bf16.mxu0 0
    %5015 = vmatpush2.bf16.msra.mxu0 0
    %5016 = vmatprep.subr.bf16.mxu0 0
    %5017 = vmatpush2.bf16.msra.mxu0 0
    %5018 = vmatprep.subr.bf16.mxu0 0
    %5019 = vmatpush2.bf16.msra.mxu0 0
    %5020 = vmatprep.subr.bf16.mxu0 0
    %5021 = vmatpush2.bf16.msra.mxu0 0
    %5022 = vmatprep.subr.bf16.mxu0 0
    %5023 = vmatpush2.bf16.msra.mxu0 0
    %5024 = vmatprep.subr.bf16.mxu0 0
    %5025 = vmatpush2.bf16.msra.mxu0 0
    %5026 = vmatprep.subr.bf16.mxu0 0
    %5027 = vmatpush2.bf16.msra.mxu0 0
    %5028 = vmatprep.mubr.bf16.mxu0 0
    %5029 = vmatmul.mubr.bf16.gmra.mxu0 %v4994
    %v5030 = vpop.f32.mrf.mxu0
    %v5031 = vadd.f32 %v4972, %v5030
    %v5032 = vpop.f32.mrf.mxu0
    %v5033 = vpop.f32.mrf.mxu0
    %v5034 = vadd.f32 %v4975, %v5033
    %v5035 = vpop.f32.mrf.mxu0
    %5036 = vdwg.mxu0
    %v5037 = vld [vmem:[%s9] sm:$0xf]
    %v5038 = vld [vmem:[%s9 + $0x4] sm:$0xf]
    %v5039 = vld [vmem:[%s57] sm:$0x3]
    %v5042 = vunpack.c.l.b16 %v5037
    %v5043 = vunpack.c.l.b16 %v5038
    %v5044 = vpack.c.b16 %v5043, %v5042
    %v5046 = vsel %vm4929, %v5044, 0
    %v5049 = vsel %vm4933, %v5039, 0
    %5051 = vmatprep.subr.bf16.mxu0 0
    %5052 = vmatpush1.bf16.msra.mxu0 0
    %5053 = vmatprep.subr.bf16.mxu0 0
    %5054 = vmatpush1.bf16.msra.mxu0 0
    %5055 = vmatprep.subr.bf16.mxu0 0
    %5056 = vmatpush1.bf16.msra.mxu0 0
    %5057 = vmatprep.subr.bf16.mxu0 0
    %5058 = vmatpush1.bf16.msra.mxu0 0
    %5059 = vmatprep.subr.bf16.mxu0 0
    %5060 = vmatpush1.bf16.msra.mxu0 0
    %5061 = vmatprep.subr.bf16.mxu0 0
    %5062 = vmatpush1.bf16.msra.mxu0 0
    %5063 = vmatprep.subr.bf16.mxu0 0
    %5064 = vmatpush1.bf16.msra.mxu0 0
    %5065 = vmatprep.subr.bf16.mxu0 0
    %5066 = vmatpush1.bf16.msra.mxu0 %v5049
    %5067 = vmatprep.subr.bf16.mxu0 0
    %5068 = vmatpush2.bf16.msra.mxu0 0
    %5069 = vmatprep.subr.bf16.mxu0 0
    %5070 = vmatpush2.bf16.msra.mxu0 0
    %5071 = vmatprep.subr.bf16.mxu0 0
    %5072 = vmatpush2.bf16.msra.mxu0 0
    %5073 = vmatprep.subr.bf16.mxu0 0
    %5074 = vmatpush2.bf16.msra.mxu0 0
    %5075 = vmatprep.subr.bf16.mxu0 0
    %5076 = vmatpush2.bf16.msra.mxu0 0
    %5077 = vmatprep.subr.bf16.mxu0 0
    %5078 = vmatpush2.bf16.msra.mxu0 0
    %5079 = vmatprep.subr.bf16.mxu0 0
    %5080 = vmatpush2.bf16.msra.mxu0 0
    %5081 = vmatprep.subr.bf16.mxu0 0
    %5082 = vmatpush2.bf16.msra.mxu0 0
    %5083 = vmatprep.mubr.bf16.mxu0 0
    %5084 = vmatmul.mubr.bf16.gmra.mxu0 %v5046
    %v5085 = vpop.f32.mrf.mxu0
    %v5086 = vadd.f32 0.0, %v5085
    %v5087 = vpop.f32.mrf.mxu0
    %v5088 = vpop.f32.mrf.mxu0
    %v5089 = vadd.f32 0.0, %v5088
    %v5090 = vpop.f32.mrf.mxu0
    %5091 = vdwg.mxu0
    %v5092 = vadd.f32 %v5031, %v5086
    %v5093 = vadd.f32 %v5034, %v5089
    %v5094 = vld [vmem:[#allocation27] sm:$0x1]
    %v5096 = vlaneseq
    %v5097 = vshrl.u32 %v5096, 7
    %v5098 = vsub.s32 0, %v5097
    %v5099 = vrot.slane %v5094, %v5098
    %v5101 = vadd.f32 %v5092, %v5099
    %v5102 = vadd.f32 %v5093, %v5099
    %v5103 = vmax.f32 %v5101, 0.0
    %v5104 = vmax.f32 %v5102, 0.0
    %v5105 = vpack.c.bf16 %v5104, %v5103
    %v5106 = vld [vmem:[%s61] sm:$0xf]
    %v5107 = vld [vmem:[%s61 + $0x4] sm:$0xf]
    %v5108 = vld [vmem:[%s63] sm:$0x1]
    %v5110 = vlaneseq
    %v5111 = vshrl.u32 %v5110, 7
    %v5112 = vsub.s32 0, %v5111
    %v5113 = vrot.slane %v5108, %v5112
    %v5117 = vunpack.c.l.b16 %v5106
    %v5118 = vunpack.c.l.b16 %v5107
    %v5119 = vpack.c.b16 %v5118, %v5117
    %v5122 = vsel %vm3303, %v5105, 0
    %5124 = vmatprep.subr.bf16.mxu0 0
    %5125 = vmatpush1.bf16.msra.mxu0 0
    %5126 = vmatprep.subr.bf16.mxu0 0
    %5127 = vmatpush1.bf16.msra.mxu0 0
    %5128 = vmatprep.subr.bf16.mxu0 0
    %5129 = vmatpush1.bf16.msra.mxu0 0
    %5130 = vmatprep.subr.bf16.mxu0 0
    %5131 = vmatpush1.bf16.msra.mxu0 0
    %5132 = vmatprep.subr.bf16.mxu0 0
    %5133 = vmatpush1.bf16.msra.mxu0 0
    %5134 = vmatprep.subr.bf16.mxu0 0
    %5135 = vmatpush1.bf16.msra.mxu0 0
    %5136 = vmatprep.subr.bf16.mxu0 0
    %5137 = vmatpush1.bf16.msra.mxu0 0
    %5138 = vmatprep.subr.bf16.mxu0 0
    %5139 = vmatpush1.bf16.msra.mxu0 %v5119
    %5140 = vmatprep.subr.bf16.mxu0 0
    %5141 = vmatpush2.bf16.msra.mxu0 0
    %5142 = vmatprep.subr.bf16.mxu0 0
    %5143 = vmatpush2.bf16.msra.mxu0 0
    %5144 = vmatprep.subr.bf16.mxu0 0
    %5145 = vmatpush2.bf16.msra.mxu0 0
    %5146 = vmatprep.subr.bf16.mxu0 0
    %5147 = vmatpush2.bf16.msra.mxu0 0
    %5148 = vmatprep.subr.bf16.mxu0 0
    %5149 = vmatpush2.bf16.msra.mxu0 0
    %5150 = vmatprep.subr.bf16.mxu0 0
    %5151 = vmatpush2.bf16.msra.mxu0 0
    %5152 = vmatprep.subr.bf16.mxu0 0
    %5153 = vmatpush2.bf16.msra.mxu0 0
    %5154 = vmatprep.subr.bf16.mxu0 0
    %5155 = vmatpush2.bf16.msra.mxu0 0
    %5156 = vmatprep.mubr.bf16.mxu0 0
    %5157 = vmatmul.mubr.bf16.gmra.mxu0 %v5122
    %v5158 = vpop.f32.mrf.mxu0
    %v5159 = vadd.f32 %v5113, %v5158
    %v5160 = vpop.f32.mrf.mxu0
    %v5161 = vpop.f32.mrf.mxu0
    %v5162 = vadd.f32 %v5113, %v5161
    %v5163 = vpop.f32.mrf.mxu0
    %5164 = vdwg.mxu0
    %5165 = vst.msk [vmem:[#allocation29] sm:$0xff] %vm3303, %v5159
    %5166 = vst.msk [vmem:[#allocation29 + $0x8] sm:$0xff] %vm3303, %v5162
    // Predicated region
    $region194: #{tpu_custom_call.1} parent=1 // pred_check
      _
    $region195: #{tpu_custom_call.1} parent=1 // pred_check_branch
      %5168 = sbr.rel (0) target = $region197
    $region196: #{tpu_custom_call.1} parent=1 // pred_region
      %s5170 = ssub.s32 256, 256
      %5171 = vsyncadd [#allocation5], %s5170
      %s5172 = sshll.u32 [#allocation29], 4
      %s5173 = int_to_ptr.vmem [resolvable:$true] %s5172
      %5178 = dma.vmem_to_hbm [thread:$0]  %s5173, 256, %s65, [#allocation5], 128, 128, 8
    $region197: #{tpu_custom_call.1} parent=1 // pred_fallthru
      _
    // Predicated region
    $region198: #{tpu_custom_call.1} parent=1 // pred_check
      _
    $region199: #{tpu_custom_call.1} parent=1 // pred_check_branch
      %5180 = sbr.rel (0) target = $region201
    $region200: #{tpu_custom_call.1} parent=1 // pred_region
      %5181 = dma.done [#allocation5], 256
    $region201: #{tpu_custom_call.1} parent=1 // pred_fallthru
      _
    %5182 = vsyncpa [#allocation4], 1
    %5183 = vsyncpa [#allocation7], 1
    %5184 = vsyncpa [#allocation10], 1
    %5185 = vsyncpa [#allocation13], 1
    %5186 = vsyncpa [#allocation16], 1
    %5187 = vsyncpa [#allocation19], 1
    %5188 = vsyncpa [#allocation22], 1
    %5189 = vsyncpa [#allocation25], 1
    %5190 = vsyncpa [#allocation28], 1
    %5191 = vsyncpa [#allocation5], 1

</llo_original>
